<compile_context>
chip_gen: v5e
topology: v5e:2x2
jax: 0.10.0
libtpu: 0.0.40
codegen_flags: <defaults>
</compile_context>

<pallas_src>
import jax
import jax.numpy as jnp
from jax import lax
from jax.experimental import pallas as pl
from jax.experimental.pallas import tpu as pltpu

# ---- model hyper-parameters (from the PyTorch module) -----------------------
EMB_DIM = 128          # embedding_dim
NUM_FILTERS = 20       # conv1d out_channels
KERNEL_SIZE = 5        # conv1d kernel_size
HIDDEN = 128           # lstm hidden_size (== embedding_dim in the module)
NUM_CLASSES = 2        # fc out_features
N_VOCAB = 50           # synthetic vocab size
SEQ_LEN = 12           # input sentence length (token ids)
T_OUT = SEQ_LEN - KERNEL_SIZE + 1   # valid conv output length (= 8)
BATCH = 4              # sentences per pallas_call (demo batch)

OUT_PAD = 128          # lane-pad the 2-class FC output to a full vreg width
IM2COL = KERNEL_SIZE * EMB_DIM      # 640
GATES = 4 * HIDDEN                  # 512


def _discriminator_kernel(x_ref,       # (T_OUT, IM2COL)          im2col, compute dtype
                          wfused_ref,  # (IM2COL, GATES)          fused conv+W_ih, compute dtype
                          wrec_ref,    # (HIDDEN, GATES+OUT_PAD)  [W_hh.T | fc_w.T(pad)], compute dtype
                          bias_ref,    # (1, GATES+OUT_PAD)       [bias_fused | fc_b(pad)], f32
                          out_ref,     # (T_OUT, OUT_PAD)         f32
                          xg_ref,      # scratch (T_OUT, GATES)   f32
                          h_all_ref):  # scratch (T_OUT, HIDDEN)  f32
    H = HIDDEN
    T = T_OUT
    wdt = wrec_ref.dtype

    # ---- Fused Conv1d + LSTM input projection: one MXU op for all timesteps.
    xg_ref[...] = (jnp.dot(x_ref[...], wfused_ref[...],
                           preferred_element_type=jnp.float32)
                   + bias_ref[:, 0:GATES])                      # (T, 4H) f32

    h = jnp.zeros((1, H), jnp.float32)                          # state stays in vregs
    c = jnp.zeros((1, H), jnp.float32)

    # ---- LSTM recurrence, fully unrolled (T_OUT = 8 is static).
    # Gate column order is (i, f, o, g) -> one sigmoid slab + one tanh slab.
    for t in range(T):
        # W_hh loaded from its ref each step (no 128-256 KB vreg-resident hoist).
        gates = (xg_ref[pl.ds(t, 1), :]
                 + jnp.dot(h.astype(wdt), wrec_ref[:, 0:GATES],
                           preferred_element_type=jnp.float32))  # (1, 4H) f32
        # sigmoid(x) = 0.5*tanh(0.5*x) + 0.5  (single EUP op, no exp+divide)
        s = 0.5 * jnp.tanh(0.5 * gates[:, 0:3 * H]) + 0.5
        g = jnp.tanh(gates[:, 3 * H:4 * H])
        i = s[:, 0 * H:1 * H]
        f = s[:, 1 * H:2 * H]
        o = s[:, 2 * H:3 * H]
        c = f * c + i * g
        h = o * jnp.tanh(c)
        # Write-only store (never re-read inside the loop): off the serial chain.
        h_all_ref[pl.ds(t, 1), :] = h

    # ---- Final Linear hoisted out of the recurrence: one (T,H)@(H,OUT_PAD)
    # matmul + one lane-dense store.  Padding columns of fc are zero, so the
    # extra output lanes are exactly zero.
    out_ref[...] = (jnp.dot(h_all_ref[...].astype(wdt), wrec_ref[:, GATES:],
                            preferred_element_type=jnp.float32)
                    + bias_ref[:, GATES:])


def pack_params(params, compute_dtype=jnp.float32):
    """One-time parameter repacking (hoisted out of the per-call path)."""
    H = HIDDEN
    # Reorder PyTorch gate order (i, f, g, o) -> (i, f, o, g).
    perm = jnp.concatenate([jnp.arange(0, H), jnp.arange(H, 2 * H),
                            jnp.arange(3 * H, 4 * H), jnp.arange(2 * H, 3 * H)])
    w_ih = params["w_ih"][perm]                    # (4H, NF)
    w_hh = params["w_hh"][perm]                    # (4H, H)
    b_lstm = (params["b_ih"] + params["b_hh"])[perm]

    # Fuse Conv1d into the LSTM input projection:
    #   Wfused[k*128+c, g] = sum_o conv_w[o, c, k] * w_ih[g, o]
    wfused = jnp.einsum("ock,go->kcg", params["conv_w"], w_ih)
    wfused = wfused.reshape(IM2COL, GATES)         # (640, 512)
    bias_fused = w_ih @ params["conv_b"] + b_lstm  # (4H,)

    # Recurrent + FC weights packed into one lane-dense buffer.
    whh = w_hh.T                                                        # (H, 4H)
    fcw = jnp.pad(params["fc_w"].T, ((0, 0), (0, OUT_PAD - NUM_CLASSES)))  # (H, 128)
    fcb = jnp.pad(params["fc_b"], (0, OUT_PAD - NUM_CLASSES))              # (128,)

    return {
        "embedding": params["embedding"].astype(jnp.float32),
        "wfused": wfused.astype(compute_dtype),
        "wrec": jnp.concatenate([whh, fcw], axis=1).astype(compute_dtype),   # (H, 640)
        "biases": jnp.concatenate([bias_fused, fcb])[None, :].astype(jnp.float32),  # (1, 640)
    }


def discriminator_forward(ids, packed):
    """ids: (B, SEQ_LEN) int32 token ids.  Returns (B, T_OUT, 2) float32."""
    B = ids.shape[0]
    cdt = packed["wfused"].dtype

    # Embedding gather + im2col (glue, outside the kernel).
    emb = packed["embedding"][ids]                                   # (B, L, 128)
    im2col = jnp.concatenate([emb[:, k:k + T_OUT, :] for k in range(KERNEL_SIZE)],
                             axis=-1).astype(cdt)                    # (B, 8, 640)

    out = pl.pallas_call(
        _discriminator_kernel,
        out_shape=jax.ShapeDtypeStruct((B, T_OUT, OUT_PAD), jnp.float32),
        grid=(B,),
        in_specs=[
            pl.BlockSpec((pl.Squeezed(), T_OUT, IM2COL), lambda b: (b, 0, 0)),
            # Constant index_maps -> weights DMA'd once, VMEM-resident across the grid.
            pl.BlockSpec((IM2COL, GATES), lambda b: (0, 0)),
            pl.BlockSpec((HIDDEN, GATES + OUT_PAD), lambda b: (0, 0)),
            pl.BlockSpec((1, GATES + OUT_PAD), lambda b: (0, 0)),
        ],
        out_specs=pl.BlockSpec((pl.Squeezed(), T_OUT, OUT_PAD), lambda b: (b, 0, 0)),
        scratch_shapes=[
            pltpu.VMEM((T_OUT, GATES), jnp.float32),
            pltpu.VMEM((T_OUT, HIDDEN), jnp.float32),
        ],
        compiler_params=pltpu.CompilerParams(
            dimension_semantics=("parallel",)),
    )(im2col, packed["wfused"], packed["wrec"], packed["biases"])
    return out[:, :, :NUM_CLASSES]                                   # (B, T, 2)


forward_jit = jax.jit(discriminator_forward)


# ---------------------------- pure-JAX reference ------------------------------
def reference_forward_single(ids_1d, params):
    emb = params["embedding"][ids_1d].astype(jnp.float32)            # (L, 128)
    x = emb.T[None]                                                  # (1, 128, L)
    conv = lax.conv_general_dilated(
        x, params["conv_w"], (1,), "VALID",
        dimension_numbers=("NCH", "OIH", "NCH"))                     # (1, 20, T)
    conv = conv[0].T + params["conv_b"]                              # (T, 20)

    w_ih, w_hh = params["w_ih"], params["w_hh"]
    b = params["b_ih"] + params["b_hh"]

    def cell(carry, x_t):
        h, c = carry
        gates = x_t @ w_ih.T + h @ w_hh.T + b
        i, f, g, o = jnp.split(gates, 4)
        i, f, o = jax.nn.sigmoid(i), jax.nn.sigmoid(f), jax.nn.sigmoid(o)
        g = jnp.tanh(g)
        c = f * c + i * g
        h = o * jnp.tanh(c)
        return (h, c), h

    (_, hs) = lax.scan(cell, (jnp.zeros(HIDDEN), jnp.zeros(HIDDEN)), conv)
    pred = hs @ params["fc_w"].T + params["fc_b"]
    return pred                                                      # (T, 2)


def init_params(key):
    ks = jax.random.split(key, 9)
    s = 0.05
    return {
        "embedding": jax.random.normal(ks[0], (N_VOCAB, EMB_DIM), jnp.float32) * s,
        "conv_w": jax.random.normal(ks[1], (NUM_FILTERS, EMB_DIM, KERNEL_SIZE), jnp.float32) * s,
        "conv_b": jax.random.normal(ks[2], (NUM_FILTERS,), jnp.float32) * s,
        "w_ih": jax.random.normal(ks[3], (4 * HIDDEN, NUM_FILTERS), jnp.float32) * s,
        "w_hh": jax.random.normal(ks[4], (4 * HIDDEN, HIDDEN), jnp.float32) * s,
        "b_ih": jax.random.normal(ks[5], (4 * HIDDEN,), jnp.float32) * s,
        "b_hh": jax.random.normal(ks[6], (4 * HIDDEN,), jnp.float32) * s,
        "fc_w": jax.random.normal(ks[7], (NUM_CLASSES, HIDDEN), jnp.float32) * s,
        "fc_b": jax.random.normal(ks[8], (NUM_CLASSES,), jnp.float32) * s,
    }


if __name__ == "__main__":
    key = jax.random.PRNGKey(0)
    pkey, ikey = jax.random.split(key)
    params = init_params(pkey)
    ids = jax.random.randint(ikey, (BATCH, SEQ_LEN), 0, N_VOCAB, dtype=jnp.int32)

    ref = jax.block_until_ready(
        jax.vmap(lambda s: reference_forward_single(s, params))(ids))   # (B, T, 2)

    # f32 matmul path (exact-ish): tight tolerance.
    packed_f32 = pack_params(params, jnp.float32)
    pred_f32 = jax.block_until_ready(forward_jit(ids, packed_f32))
    assert pred_f32.shape == (BATCH, T_OUT, NUM_CLASSES), pred_f32.shape
    assert jnp.allclose(pred_f32, ref, atol=1e-4, rtol=1e-4), (
        "f32 mismatch vs reference", float(jnp.max(jnp.abs(pred_f32 - ref))))

    # bf16 matmul-operand path (v6e/v7x MXU-native): looser tolerance.
    packed_bf16 = pack_params(params, jnp.bfloat16)
    pred_bf16 = jax.block_until_ready(forward_jit(ids, packed_bf16))
    assert jnp.allclose(pred_bf16, ref, atol=5e-3, rtol=5e-2), (
        "bf16 mismatch vs reference", float(jnp.max(jnp.abs(pred_bf16 - ref))))

    print("KERNEL_OK")
</pallas_src>

<mosaic_0001>
module attributes {stable_mosaic.version = 11 : i64} {
  func.func @_discriminator_kernel(%arg0: i32, %arg1: memref<1x8x640xf32, #tpu.memory_space<vmem>>, %arg2: memref<640x512xf32, #tpu.memory_space<vmem>>, %arg3: memref<128x640xf32, #tpu.memory_space<vmem>>, %arg4: memref<1x640xf32, #tpu.memory_space<vmem>>, %arg5: memref<1x8x128xf32, #tpu.memory_space<vmem>>, %arg6: memref<8x512xf32, #tpu.memory_space<vmem>>, %arg7: memref<8x128xf32, #tpu.memory_space<vmem>>) attributes {dimension_semantics = [#tpu.dimension_semantics<parallel>], iteration_bounds = array<i64: 4>, scalar_prefetch = 0 : i64, scratch_operands = 2 : i64, tpu.core_type = #tpu.core_type<tc>, window_params = [{transform_indices = @transform_0, window_bounds = array<i64: 1, 8, 640>}, {pipeline_mode = #tpu.pipeline_mode<synchronous>, transform_indices = @transform_1, window_bounds = array<i64: 640, 512>}, {pipeline_mode = #tpu.pipeline_mode<synchronous>, transform_indices = @transform_2, window_bounds = array<i64: 128, 640>}, {pipeline_mode = #tpu.pipeline_mode<synchronous>, transform_indices = @transform_3, window_bounds = array<i64: 1, 640>}, {transform_indices = @transform_4, window_bounds = array<i64: 1, 8, 128>}]} {
    %c0 = arith.constant 0 : index
    %c0_0 = arith.constant 0 : index
    %c0_1 = arith.constant 0 : index
    %0 = vector.load %arg1[%c0, %c0_0, %c0_1] : memref<1x8x640xf32, #tpu.memory_space<vmem>>, vector<1x8x640xf32>
    %1 = vector.shape_cast %0 : vector<1x8x640xf32> to vector<8x640xf32>
    %c0_2 = arith.constant 0 : index
    %c0_3 = arith.constant 0 : index
    %2 = vector.load %arg2[%c0_2, %c0_3] : memref<640x512xf32, #tpu.memory_space<vmem>>, vector<640x512xf32>
    %cst = arith.constant dense<0.000000e+00> : vector<8x512xf32>
    %3 = tpu.matmul %1, %2, %cst {dimension_numbers = #tpu.dot_dimension_numbers<[1], [0], [0], [1], [0, 0, 1, 1], [], []>} : vector<8x640xf32>, vector<640x512xf32>, vector<8x512xf32> -> vector<8x512xf32>
    %c0_4 = arith.constant 0 : index
    %c0_5 = arith.constant 0 : index
    %4 = vector.load %arg4[%c0_4, %c0_5] : memref<1x640xf32, #tpu.memory_space<vmem>>, vector<1x512xf32>
    %5 = vector.broadcast %4 : vector<1x512xf32> to vector<8x512xf32>
    %6 = arith.addf %3, %5 : vector<8x512xf32>
    %c0_6 = arith.constant 0 : index
    %c0_7 = arith.constant 0 : index
    %7 = vector.load %arg6[%c0_6, %c0_7] : memref<8x512xf32, #tpu.memory_space<vmem>>, vector<8x512xf32>
    tpu.vector_store %arg6[%c0_6, %c0_7], %6 {strides = array<i32>} : memref<8x512xf32, #tpu.memory_space<vmem>>, vector<8x512xf32>,
    %cst_8 = arith.constant 0.000000e+00 : f32
    %8 = vector.broadcast %cst_8 : f32 to vector<1x128xf32>
    %cst_9 = arith.constant 0.000000e+00 : f32
    %9 = vector.broadcast %cst_9 : f32 to vector<1x128xf32>
    %c0_10 = arith.constant 0 : index
    %c0_11 = arith.constant 0 : index
    %10 = vector.load %arg6[%c0_10, %c0_11] : memref<8x512xf32, #tpu.memory_space<vmem>>, vector<1x512xf32>
    %c0_12 = arith.constant 0 : index
    %c0_13 = arith.constant 0 : index
    %11 = vector.load %arg3[%c0_12, %c0_13] : memref<128x640xf32, #tpu.memory_space<vmem>>, vector<128x512xf32>
    %cst_14 = arith.constant dense<0.000000e+00> : vector<1x512xf32>
    %12 = tpu.matmul %8, %11, %cst_14 {dimension_numbers = #tpu.dot_dimension_numbers<[1], [0], [0], [1], [0, 0, 1, 1], [], []>} : vector<1x128xf32>, vector<128x512xf32>, vector<1x512xf32> -> vector<1x512xf32>
    %13 = arith.addf %10, %12 : vector<1x512xf32>
    %14 = vector.extract_strided_slice %13 {offsets = [0, 0], sizes = [1, 384], strides = [1, 1]} : vector<1x512xf32> to vector<1x384xf32>
    %cst_15 = arith.constant 5.000000e-01 : f32
    %15 = vector.broadcast %cst_15 : f32 to vector<1x384xf32>
    %16 = arith.mulf %15, %14 : vector<1x384xf32>
    %17 = math.tanh %16 : vector<1x384xf32>
    %cst_16 = arith.constant 5.000000e-01 : f32
    %18 = vector.broadcast %cst_16 : f32 to vector<1x384xf32>
    %19 = arith.mulf %18, %17 : vector<1x384xf32>
    %cst_17 = arith.constant 5.000000e-01 : f32
    %20 = vector.broadcast %cst_17 : f32 to vector<1x384xf32>
    %21 = arith.addf %19, %20 : vector<1x384xf32>
    %22 = vector.extract_strided_slice %13 {offsets = [0, 384], sizes = [1, 128], strides = [1, 1]} : vector<1x512xf32> to vector<1x128xf32>
    %23 = math.tanh %22 : vector<1x128xf32>
    %24 = vector.extract_strided_slice %21 {offsets = [0, 0], sizes = [1, 128], strides = [1, 1]} : vector<1x384xf32> to vector<1x128xf32>
    %25 = vector.extract_strided_slice %21 {offsets = [0, 128], sizes = [1, 128], strides = [1, 1]} : vector<1x384xf32> to vector<1x128xf32>
    %26 = vector.extract_strided_slice %21 {offsets = [0, 256], sizes = [1, 128], strides = [1, 1]} : vector<1x384xf32> to vector<1x128xf32>
    %27 = arith.mulf %25, %9 : vector<1x128xf32>
    %28 = arith.mulf %24, %23 : vector<1x128xf32>
    %29 = arith.addf %27, %28 : vector<1x128xf32>
    %30 = math.tanh %29 : vector<1x128xf32>
    %31 = arith.mulf %26, %30 : vector<1x128xf32>
    %c0_18 = arith.constant 0 : index
    %c0_19 = arith.constant 0 : index
    %32 = vector.load %arg7[%c0_18, %c0_19] : memref<8x128xf32, #tpu.memory_space<vmem>>, vector<1x128xf32>
    tpu.vector_store %arg7[%c0_18, %c0_19], %31 {strides = array<i32>} : memref<8x128xf32, #tpu.memory_space<vmem>>, vector<1x128xf32>,
    %c1 = arith.constant 1 : index
    %c0_20 = arith.constant 0 : index
    %33 = vector.load %arg6[%c1, %c0_20] : memref<8x512xf32, #tpu.memory_space<vmem>>, vector<1x512xf32>
    %c0_21 = arith.constant 0 : index
    %c0_22 = arith.constant 0 : index
    %34 = vector.load %arg3[%c0_21, %c0_22] : memref<128x640xf32, #tpu.memory_space<vmem>>, vector<128x512xf32>
    %cst_23 = arith.constant dense<0.000000e+00> : vector<1x512xf32>
    %35 = tpu.matmul %31, %34, %cst_23 {dimension_numbers = #tpu.dot_dimension_numbers<[1], [0], [0], [1], [0, 0, 1, 1], [], []>} : vector<1x128xf32>, vector<128x512xf32>, vector<1x512xf32> -> vector<1x512xf32>
    %36 = arith.addf %33, %35 : vector<1x512xf32>
    %37 = vector.extract_strided_slice %36 {offsets = [0, 0], sizes = [1, 384], strides = [1, 1]} : vector<1x512xf32> to vector<1x384xf32>
    %cst_24 = arith.constant 5.000000e-01 : f32
    %38 = vector.broadcast %cst_24 : f32 to vector<1x384xf32>
    %39 = arith.mulf %38, %37 : vector<1x384xf32>
    %40 = math.tanh %39 : vector<1x384xf32>
    %cst_25 = arith.constant 5.000000e-01 : f32
    %41 = vector.broadcast %cst_25 : f32 to vector<1x384xf32>
    %42 = arith.mulf %41, %40 : vector<1x384xf32>
    %cst_26 = arith.constant 5.000000e-01 : f32
    %43 = vector.broadcast %cst_26 : f32 to vector<1x384xf32>
    %44 = arith.addf %42, %43 : vector<1x384xf32>
    %45 = vector.extract_strided_slice %36 {offsets = [0, 384], sizes = [1, 128], strides = [1, 1]} : vector<1x512xf32> to vector<1x128xf32>
    %46 = math.tanh %45 : vector<1x128xf32>
    %47 = vector.extract_strided_slice %44 {offsets = [0, 0], sizes = [1, 128], strides = [1, 1]} : vector<1x384xf32> to vector<1x128xf32>
    %48 = vector.extract_strided_slice %44 {offsets = [0, 128], sizes = [1, 128], strides = [1, 1]} : vector<1x384xf32> to vector<1x128xf32>
    %49 = vector.extract_strided_slice %44 {offsets = [0, 256], sizes = [1, 128], strides = [1, 1]} : vector<1x384xf32> to vector<1x128xf32>
    %50 = arith.mulf %48, %29 : vector<1x128xf32>
    %51 = arith.mulf %47, %46 : vector<1x128xf32>
    %52 = arith.addf %50, %51 : vector<1x128xf32>
    %53 = math.tanh %52 : vector<1x128xf32>
    %54 = arith.mulf %49, %53 : vector<1x128xf32>
    %c1_27 = arith.constant 1 : index
    %c0_28 = arith.constant 0 : index
    %55 = vector.load %arg7[%c1_27, %c0_28] : memref<8x128xf32, #tpu.memory_space<vmem>>, vector<1x128xf32>
    tpu.vector_store %arg7[%c1_27, %c0_28], %54 {strides = array<i32>} : memref<8x128xf32, #tpu.memory_space<vmem>>, vector<1x128xf32>,
    %c2 = arith.constant 2 : index
    %c0_29 = arith.constant 0 : index
    %56 = vector.load %arg6[%c2, %c0_29] : memref<8x512xf32, #tpu.memory_space<vmem>>, vector<1x512xf32>
    %c0_30 = arith.constant 0 : index
    %c0_31 = arith.constant 0 : index
    %57 = vector.load %arg3[%c0_30, %c0_31] : memref<128x640xf32, #tpu.memory_space<vmem>>, vector<128x512xf32>
    %cst_32 = arith.constant dense<0.000000e+00> : vector<1x512xf32>
    %58 = tpu.matmul %54, %57, %cst_32 {dimension_numbers = #tpu.dot_dimension_numbers<[1], [0], [0], [1], [0, 0, 1, 1], [], []>} : vector<1x128xf32>, vector<128x512xf32>, vector<1x512xf32> -> vector<1x512xf32>
    %59 = arith.addf %56, %58 : vector<1x512xf32>
    %60 = vector.extract_strided_slice %59 {offsets = [0, 0], sizes = [1, 384], strides = [1, 1]} : vector<1x512xf32> to vector<1x384xf32>
    %cst_33 = arith.constant 5.000000e-01 : f32
    %61 = vector.broadcast %cst_33 : f32 to vector<1x384xf32>
    %62 = arith.mulf %61, %60 : vector<1x384xf32>
    %63 = math.tanh %62 : vector<1x384xf32>
    %cst_34 = arith.constant 5.000000e-01 : f32
    %64 = vector.broadcast %cst_34 : f32 to vector<1x384xf32>
    %65 = arith.mulf %64, %63 : vector<1x384xf32>
    %cst_35 = arith.constant 5.000000e-01 : f32
    %66 = vector.broadcast %cst_35 : f32 to vector<1x384xf32>
    %67 = arith.addf %65, %66 : vector<1x384xf32>
    %68 = vector.extract_strided_slice %59 {offsets = [0, 384], sizes = [1, 128], strides = [1, 1]} : vector<1x512xf32> to vector<1x128xf32>
    %69 = math.tanh %68 : vector<1x128xf32>
    %70 = vector.extract_strided_slice %67 {offsets = [0, 0], sizes = [1, 128], strides = [1, 1]} : vector<1x384xf32> to vector<1x128xf32>
    %71 = vector.extract_strided_slice %67 {offsets = [0, 128], sizes = [1, 128], strides = [1, 1]} : vector<1x384xf32> to vector<1x128xf32>
    %72 = vector.extract_strided_slice %67 {offsets = [0, 256], sizes = [1, 128], strides = [1, 1]} : vector<1x384xf32> to vector<1x128xf32>
    %73 = arith.mulf %71, %52 : vector<1x128xf32>
    %74 = arith.mulf %70, %69 : vector<1x128xf32>
    %75 = arith.addf %73, %74 : vector<1x128xf32>
    %76 = math.tanh %75 : vector<1x128xf32>
    %77 = arith.mulf %72, %76 : vector<1x128xf32>
    %c2_36 = arith.constant 2 : index
    %c0_37 = arith.constant 0 : index
    %78 = vector.load %arg7[%c2_36, %c0_37] : memref<8x128xf32, #tpu.memory_space<vmem>>, vector<1x128xf32>
    tpu.vector_store %arg7[%c2_36, %c0_37], %77 {strides = array<i32>} : memref<8x128xf32, #tpu.memory_space<vmem>>, vector<1x128xf32>,
    %c3 = arith.constant 3 : index
    %c0_38 = arith.constant 0 : index
    %79 = vector.load %arg6[%c3, %c0_38] : memref<8x512xf32, #tpu.memory_space<vmem>>, vector<1x512xf32>
    %c0_39 = arith.constant 0 : index
    %c0_40 = arith.constant 0 : index
    %80 = vector.load %arg3[%c0_39, %c0_40] : memref<128x640xf32, #tpu.memory_space<vmem>>, vector<128x512xf32>
    %cst_41 = arith.constant dense<0.000000e+00> : vector<1x512xf32>
    %81 = tpu.matmul %77, %80, %cst_41 {dimension_numbers = #tpu.dot_dimension_numbers<[1], [0], [0], [1], [0, 0, 1, 1], [], []>} : vector<1x128xf32>, vector<128x512xf32>, vector<1x512xf32> -> vector<1x512xf32>
    %82 = arith.addf %79, %81 : vector<1x512xf32>
    %83 = vector.extract_strided_slice %82 {offsets = [0, 0], sizes = [1, 384], strides = [1, 1]} : vector<1x512xf32> to vector<1x384xf32>
    %cst_42 = arith.constant 5.000000e-01 : f32
    %84 = vector.broadcast %cst_42 : f32 to vector<1x384xf32>
    %85 = arith.mulf %84, %83 : vector<1x384xf32>
    %86 = math.tanh %85 : vector<1x384xf32>
    %cst_43 = arith.constant 5.000000e-01 : f32
    %87 = vector.broadcast %cst_43 : f32 to vector<1x384xf32>
    %88 = arith.mulf %87, %86 : vector<1x384xf32>
    %cst_44 = arith.constant 5.000000e-01 : f32
    %89 = vector.broadcast %cst_44 : f32 to vector<1x384xf32>
    %90 = arith.addf %88, %89 : vector<1x384xf32>
    %91 = vector.extract_strided_slice %82 {offsets = [0, 384], sizes = [1, 128], strides = [1, 1]} : vector<1x512xf32> to vector<1x128xf32>
    %92 = math.tanh %91 : vector<1x128xf32>
    %93 = vector.extract_strided_slice %90 {offsets = [0, 0], sizes = [1, 128], strides = [1, 1]} : vector<1x384xf32> to vector<1x128xf32>
    %94 = vector.extract_strided_slice %90 {offsets = [0, 128], sizes = [1, 128], strides = [1, 1]} : vector<1x384xf32> to vector<1x128xf32>
    %95 = vector.extract_strided_slice %90 {offsets = [0, 256], sizes = [1, 128], strides = [1, 1]} : vector<1x384xf32> to vector<1x128xf32>
    %96 = arith.mulf %94, %75 : vector<1x128xf32>
    %97 = arith.mulf %93, %92 : vector<1x128xf32>
    %98 = arith.addf %96, %97 : vector<1x128xf32>
    %99 = math.tanh %98 : vector<1x128xf32>
    %100 = arith.mulf %95, %99 : vector<1x128xf32>
    %c3_45 = arith.constant 3 : index
    %c0_46 = arith.constant 0 : index
    %101 = vector.load %arg7[%c3_45, %c0_46] : memref<8x128xf32, #tpu.memory_space<vmem>>, vector<1x128xf32>
    tpu.vector_store %arg7[%c3_45, %c0_46], %100 {strides = array<i32>} : memref<8x128xf32, #tpu.memory_space<vmem>>, vector<1x128xf32>,
    %c4 = arith.constant 4 : index
    %c0_47 = arith.constant 0 : index
    %102 = vector.load %arg6[%c4, %c0_47] : memref<8x512xf32, #tpu.memory_space<vmem>>, vector<1x512xf32>
    %c0_48 = arith.constant 0 : index
    %c0_49 = arith.constant 0 : index
    %103 = vector.load %arg3[%c0_48, %c0_49] : memref<128x640xf32, #tpu.memory_space<vmem>>, vector<128x512xf32>
    %cst_50 = arith.constant dense<0.000000e+00> : vector<1x512xf32>
    %104 = tpu.matmul %100, %103, %cst_50 {dimension_numbers = #tpu.dot_dimension_numbers<[1], [0], [0], [1], [0, 0, 1, 1], [], []>} : vector<1x128xf32>, vector<128x512xf32>, vector<1x512xf32> -> vector<1x512xf32>
    %105 = arith.addf %102, %104 : vector<1x512xf32>
    %106 = vector.extract_strided_slice %105 {offsets = [0, 0], sizes = [1, 384], strides = [1, 1]} : vector<1x512xf32> to vector<1x384xf32>
    %cst_51 = arith.constant 5.000000e-01 : f32
    %107 = vector.broadcast %cst_51 : f32 to vector<1x384xf32>
    %108 = arith.mulf %107, %106 : vector<1x384xf32>
    %109 = math.tanh %108 : vector<1x384xf32>
    %cst_52 = arith.constant 5.000000e-01 : f32
    %110 = vector.broadcast %cst_52 : f32 to vector<1x384xf32>
    %111 = arith.mulf %110, %109 : vector<1x384xf32>
    %cst_53 = arith.constant 5.000000e-01 : f32
    %112 = vector.broadcast %cst_53 : f32 to vector<1x384xf32>
    %113 = arith.addf %111, %112 : vector<1x384xf32>
    %114 = vector.extract_strided_slice %105 {offsets = [0, 384], sizes = [1, 128], strides = [1, 1]} : vector<1x512xf32> to vector<1x128xf32>
    %115 = math.tanh %114 : vector<1x128xf32>
    %116 = vector.extract_strided_slice %113 {offsets = [0, 0], sizes = [1, 128], strides = [1, 1]} : vector<1x384xf32> to vector<1x128xf32>
    %117 = vector.extract_strided_slice %113 {offsets = [0, 128], sizes = [1, 128], strides = [1, 1]} : vector<1x384xf32> to vector<1x128xf32>
    %118 = vector.extract_strided_slice %113 {offsets = [0, 256], sizes = [1, 128], strides = [1, 1]} : vector<1x384xf32> to vector<1x128xf32>
    %119 = arith.mulf %117, %98 : vector<1x128xf32>
    %120 = arith.mulf %116, %115 : vector<1x128xf32>
    %121 = arith.addf %119, %120 : vector<1x128xf32>
    %122 = math.tanh %121 : vector<1x128xf32>
    %123 = arith.mulf %118, %122 : vector<1x128xf32>
    %c4_54 = arith.constant 4 : index
    %c0_55 = arith.constant 0 : index
    %124 = vector.load %arg7[%c4_54, %c0_55] : memref<8x128xf32, #tpu.memory_space<vmem>>, vector<1x128xf32>
    tpu.vector_store %arg7[%c4_54, %c0_55], %123 {strides = array<i32>} : memref<8x128xf32, #tpu.memory_space<vmem>>, vector<1x128xf32>,
    %c5 = arith.constant 5 : index
    %c0_56 = arith.constant 0 : index
    %125 = vector.load %arg6[%c5, %c0_56] : memref<8x512xf32, #tpu.memory_space<vmem>>, vector<1x512xf32>
    %c0_57 = arith.constant 0 : index
    %c0_58 = arith.constant 0 : index
    %126 = vector.load %arg3[%c0_57, %c0_58] : memref<128x640xf32, #tpu.memory_space<vmem>>, vector<128x512xf32>
    %cst_59 = arith.constant dense<0.000000e+00> : vector<1x512xf32>
    %127 = tpu.matmul %123, %126, %cst_59 {dimension_numbers = #tpu.dot_dimension_numbers<[1], [0], [0], [1], [0, 0, 1, 1], [], []>} : vector<1x128xf32>, vector<128x512xf32>, vector<1x512xf32> -> vector<1x512xf32>
    %128 = arith.addf %125, %127 : vector<1x512xf32>
    %129 = vector.extract_strided_slice %128 {offsets = [0, 0], sizes = [1, 384], strides = [1, 1]} : vector<1x512xf32> to vector<1x384xf32>
    %cst_60 = arith.constant 5.000000e-01 : f32
    %130 = vector.broadcast %cst_60 : f32 to vector<1x384xf32>
    %131 = arith.mulf %130, %129 : vector<1x384xf32>
    %132 = math.tanh %131 : vector<1x384xf32>
    %cst_61 = arith.constant 5.000000e-01 : f32
    %133 = vector.broadcast %cst_61 : f32 to vector<1x384xf32>
    %134 = arith.mulf %133, %132 : vector<1x384xf32>
    %cst_62 = arith.constant 5.000000e-01 : f32
    %135 = vector.broadcast %cst_62 : f32 to vector<1x384xf32>
    %136 = arith.addf %134, %135 : vector<1x384xf32>
    %137 = vector.extract_strided_slice %128 {offsets = [0, 384], sizes = [1, 128], strides = [1, 1]} : vector<1x512xf32> to vector<1x128xf32>
    %138 = math.tanh %137 : vector<1x128xf32>
    %139 = vector.extract_strided_slice %136 {offsets = [0, 0], sizes = [1, 128], strides = [1, 1]} : vector<1x384xf32> to vector<1x128xf32>
    %140 = vector.extract_strided_slice %136 {offsets = [0, 128], sizes = [1, 128], strides = [1, 1]} : vector<1x384xf32> to vector<1x128xf32>
    %141 = vector.extract_strided_slice %136 {offsets = [0, 256], sizes = [1, 128], strides = [1, 1]} : vector<1x384xf32> to vector<1x128xf32>
    %142 = arith.mulf %140, %121 : vector<1x128xf32>
    %143 = arith.mulf %139, %138 : vector<1x128xf32>
    %144 = arith.addf %142, %143 : vector<1x128xf32>
    %145 = math.tanh %144 : vector<1x128xf32>
    %146 = arith.mulf %141, %145 : vector<1x128xf32>
    %c5_63 = arith.constant 5 : index
    %c0_64 = arith.constant 0 : index
    %147 = vector.load %arg7[%c5_63, %c0_64] : memref<8x128xf32, #tpu.memory_space<vmem>>, vector<1x128xf32>
    tpu.vector_store %arg7[%c5_63, %c0_64], %146 {strides = array<i32>} : memref<8x128xf32, #tpu.memory_space<vmem>>, vector<1x128xf32>,
    %c6 = arith.constant 6 : index
    %c0_65 = arith.constant 0 : index
    %148 = vector.load %arg6[%c6, %c0_65] : memref<8x512xf32, #tpu.memory_space<vmem>>, vector<1x512xf32>
    %c0_66 = arith.constant 0 : index
    %c0_67 = arith.constant 0 : index
    %149 = vector.load %arg3[%c0_66, %c0_67] : memref<128x640xf32, #tpu.memory_space<vmem>>, vector<128x512xf32>
    %cst_68 = arith.constant dense<0.000000e+00> : vector<1x512xf32>
    %150 = tpu.matmul %146, %149, %cst_68 {dimension_numbers = #tpu.dot_dimension_numbers<[1], [0], [0], [1], [0, 0, 1, 1], [], []>} : vector<1x128xf32>, vector<128x512xf32>, vector<1x512xf32> -> vector<1x512xf32>
    %151 = arith.addf %148, %150 : vector<1x512xf32>
    %152 = vector.extract_strided_slice %151 {offsets = [0, 0], sizes = [1, 384], strides = [1, 1]} : vector<1x512xf32> to vector<1x384xf32>
    %cst_69 = arith.constant 5.000000e-01 : f32
    %153 = vector.broadcast %cst_69 : f32 to vector<1x384xf32>
    %154 = arith.mulf %153, %152 : vector<1x384xf32>
    %155 = math.tanh %154 : vector<1x384xf32>
    %cst_70 = arith.constant 5.000000e-01 : f32
    %156 = vector.broadcast %cst_70 : f32 to vector<1x384xf32>
    %157 = arith.mulf %156, %155 : vector<1x384xf32>
    %cst_71 = arith.constant 5.000000e-01 : f32
    %158 = vector.broadcast %cst_71 : f32 to vector<1x384xf32>
    %159 = arith.addf %157, %158 : vector<1x384xf32>
    %160 = vector.extract_strided_slice %151 {offsets = [0, 384], sizes = [1, 128], strides = [1, 1]} : vector<1x512xf32> to vector<1x128xf32>
    %161 = math.tanh %160 : vector<1x128xf32>
    %162 = vector.extract_strided_slice %159 {offsets = [0, 0], sizes = [1, 128], strides = [1, 1]} : vector<1x384xf32> to vector<1x128xf32>
    %163 = vector.extract_strided_slice %159 {offsets = [0, 128], sizes = [1, 128], strides = [1, 1]} : vector<1x384xf32> to vector<1x128xf32>
    %164 = vector.extract_strided_slice %159 {offsets = [0, 256], sizes = [1, 128], strides = [1, 1]} : vector<1x384xf32> to vector<1x128xf32>
    %165 = arith.mulf %163, %144 : vector<1x128xf32>
    %166 = arith.mulf %162, %161 : vector<1x128xf32>
    %167 = arith.addf %165, %166 : vector<1x128xf32>
    %168 = math.tanh %167 : vector<1x128xf32>
    %169 = arith.mulf %164, %168 : vector<1x128xf32>
    %c6_72 = arith.constant 6 : index
    %c0_73 = arith.constant 0 : index
    %170 = vector.load %arg7[%c6_72, %c0_73] : memref<8x128xf32, #tpu.memory_space<vmem>>, vector<1x128xf32>
    tpu.vector_store %arg7[%c6_72, %c0_73], %169 {strides = array<i32>} : memref<8x128xf32, #tpu.memory_space<vmem>>, vector<1x128xf32>,
    %c7 = arith.constant 7 : index
    %c0_74 = arith.constant 0 : index
    %171 = vector.load %arg6[%c7, %c0_74] : memref<8x512xf32, #tpu.memory_space<vmem>>, vector<1x512xf32>
    %c0_75 = arith.constant 0 : index
    %c0_76 = arith.constant 0 : index
    %172 = vector.load %arg3[%c0_75, %c0_76] : memref<128x640xf32, #tpu.memory_space<vmem>>, vector<128x512xf32>
    %cst_77 = arith.constant dense<0.000000e+00> : vector<1x512xf32>
    %173 = tpu.matmul %169, %172, %cst_77 {dimension_numbers = #tpu.dot_dimension_numbers<[1], [0], [0], [1], [0, 0, 1, 1], [], []>} : vector<1x128xf32>, vector<128x512xf32>, vector<1x512xf32> -> vector<1x512xf32>
    %174 = arith.addf %171, %173 : vector<1x512xf32>
    %175 = vector.extract_strided_slice %174 {offsets = [0, 0], sizes = [1, 384], strides = [1, 1]} : vector<1x512xf32> to vector<1x384xf32>
    %cst_78 = arith.constant 5.000000e-01 : f32
    %176 = vector.broadcast %cst_78 : f32 to vector<1x384xf32>
    %177 = arith.mulf %176, %175 : vector<1x384xf32>
    %178 = math.tanh %177 : vector<1x384xf32>
    %cst_79 = arith.constant 5.000000e-01 : f32
    %179 = vector.broadcast %cst_79 : f32 to vector<1x384xf32>
    %180 = arith.mulf %179, %178 : vector<1x384xf32>
    %cst_80 = arith.constant 5.000000e-01 : f32
    %181 = vector.broadcast %cst_80 : f32 to vector<1x384xf32>
    %182 = arith.addf %180, %181 : vector<1x384xf32>
    %183 = vector.extract_strided_slice %174 {offsets = [0, 384], sizes = [1, 128], strides = [1, 1]} : vector<1x512xf32> to vector<1x128xf32>
    %184 = math.tanh %183 : vector<1x128xf32>
    %185 = vector.extract_strided_slice %182 {offsets = [0, 0], sizes = [1, 128], strides = [1, 1]} : vector<1x384xf32> to vector<1x128xf32>
    %186 = vector.extract_strided_slice %182 {offsets = [0, 128], sizes = [1, 128], strides = [1, 1]} : vector<1x384xf32> to vector<1x128xf32>
    %187 = vector.extract_strided_slice %182 {offsets = [0, 256], sizes = [1, 128], strides = [1, 1]} : vector<1x384xf32> to vector<1x128xf32>
    %188 = arith.mulf %186, %167 : vector<1x128xf32>
    %189 = arith.mulf %185, %184 : vector<1x128xf32>
    %190 = arith.addf %188, %189 : vector<1x128xf32>
    %191 = math.tanh %190 : vector<1x128xf32>
    %192 = arith.mulf %187, %191 : vector<1x128xf32>
    %c7_81 = arith.constant 7 : index
    %c0_82 = arith.constant 0 : index
    %193 = vector.load %arg7[%c7_81, %c0_82] : memref<8x128xf32, #tpu.memory_space<vmem>>, vector<1x128xf32>
    tpu.vector_store %arg7[%c7_81, %c0_82], %192 {strides = array<i32>} : memref<8x128xf32, #tpu.memory_space<vmem>>, vector<1x128xf32>,
    %c0_83 = arith.constant 0 : index
    %c0_84 = arith.constant 0 : index
    %194 = vector.load %arg7[%c0_83, %c0_84] : memref<8x128xf32, #tpu.memory_space<vmem>>, vector<8x128xf32>
    %c0_85 = arith.constant 0 : index
    %c512 = arith.constant 512 : index
    %195 = vector.load %arg3[%c0_85, %c512] : memref<128x640xf32, #tpu.memory_space<vmem>>, vector<128x128xf32>
    %cst_86 = arith.constant dense<0.000000e+00> : vector<8x128xf32>
    %196 = tpu.matmul %194, %195, %cst_86 {dimension_numbers = #tpu.dot_dimension_numbers<[1], [0], [0], [1], [0, 0, 1, 1], [], []>} : vector<8x128xf32>, vector<128x128xf32>, vector<8x128xf32> -> vector<8x128xf32>
    %c0_87 = arith.constant 0 : index
    %c512_88 = arith.constant 512 : index
    %197 = vector.load %arg4[%c0_87, %c512_88] : memref<1x640xf32, #tpu.memory_space<vmem>>, vector<1x128xf32>
    %198 = vector.broadcast %197 : vector<1x128xf32> to vector<8x128xf32>
    %199 = arith.addf %196, %198 : vector<8x128xf32>
    %c0_89 = arith.constant 0 : index
    %c0_90 = arith.constant 0 : index
    %c0_91 = arith.constant 0 : index
    %200 = vector.load %arg5[%c0_89, %c0_90, %c0_91] : memref<1x8x128xf32, #tpu.memory_space<vmem>>, vector<1x8x128xf32>
    %201 = vector.shape_cast %200 : vector<1x8x128xf32> to vector<8x128xf32>
    %202 = vector.shape_cast %199 : vector<8x128xf32> to vector<1x8x128xf32>
    tpu.vector_store %arg5[%c0_89, %c0_90, %c0_91], %202 {strides = array<i32>} : memref<1x8x128xf32, #tpu.memory_space<vmem>>, vector<1x8x128xf32>,
    return
  }
  func.func @transform_0(%arg0: i32) -> (i32, i32, i32) {
    %c0_i32 = arith.constant 0 : i32
    %c0_i32_0 = arith.constant 0 : i32
    %c0_i32_1 = arith.constant 0 : i32
    return %arg0, %c0_i32, %c0_i32_0 : i32, i32, i32
  }
  func.func @transform_1(%arg0: i32) -> (i32, i32) {
    %c0_i32 = arith.constant 0 : i32
    %c0_i32_0 = arith.constant 0 : i32
    %c0_i32_1 = arith.constant 0 : i32
    return %c0_i32, %c0_i32_0 : i32, i32
  }
  func.func @transform_2(%arg0: i32) -> (i32, i32) {
    %c0_i32 = arith.constant 0 : i32
    %c0_i32_0 = arith.constant 0 : i32
    %c0_i32_1 = arith.constant 0 : i32
    return %c0_i32, %c0_i32_0 : i32, i32
  }
  func.func @transform_3(%arg0: i32) -> (i32, i32) {
    %c0_i32 = arith.constant 0 : i32
    %c0_i32_0 = arith.constant 0 : i32
    %c0_i32_1 = arith.constant 0 : i32
    return %c0_i32, %c0_i32_0 : i32, i32
  }
  func.func @transform_4(%arg0: i32) -> (i32, i32, i32) {
    %c0_i32 = arith.constant 0 : i32
    %c0_i32_0 = arith.constant 0 : i32
    %c0_i32_1 = arith.constant 0 : i32
    return %arg0, %c0_i32, %c0_i32_0 : i32, i32, i32
  }
}

</mosaic_0001>

<llo_original>
// kernel: discriminator_forward.1
$region0: #{discriminator_forward.1}
  #allocation0 [shape = 'u32[]', space=smem, size = 0x4, offset = 0x4, fixed_abs, tag = 'smem constant byte address 0x4 - core index']
  #allocation1 [shape = 'u32[72,128]{1,0:T(1,128)}', space=vmem, size = 0x9000, scoped, tag = 'internal scratch']
  #allocation2 [shape = 'f32[8,512]{1,0:T(8,128)}', space=vmem, size = 0x4000, scoped, tag = 'scratch operand']
  #allocation3 [shape = 'f32[8,128]{1,0:T(8,128)}', space=vmem, size = 0x1000, scoped, tag = 'scratch operand']
  %s0 = inlined_call_operand.vmem [shape: f32[4,8,640], index: 0, kind: input, shape index: {}]
  %s1 = inlined_call_operand.hbm [shape: f32[640,512], index: 1, kind: input, shape index: {}]
  %s2 = inlined_call_operand.hbm [shape: f32[128,640], index: 2, kind: input, shape index: {}]
  %s3 = inlined_call_operand.hbm [shape: f32[1,640], index: 3, kind: input, shape index: {}]
  %s4 = inlined_call_operand.vmem [shape: f32[4,8,128], index: 4, kind: output, shape index: {}]
  %s5 = sld [smem:[#allocation0]]
  $region61: #{discriminator_forward.1} parent=0
    _
  %s7 = ssub.s32 1, %s5
  %s8 = scalar_select 0, %s7, %s5
  $region1: #{discriminator_forward.1} parent=0
    #allocation4 [shape = 'u8[1310720]{0}', space=vmem, size = 0x140000, scoped, tag = 'input window, operand 1, single buffered']
    #allocation5 [shape = 's32[2]{0}', space=sflag, size = 0x8, scoped, tag = 'scoped memory for discriminator_forward.1']
    #allocation6 [shape = 'u8[327680]{0}', space=vmem, size = 0x50000, scoped, tag = 'input window, operand 2, single buffered']
    #allocation7 [shape = 's32[1]{0}', space=sflag, size = 0x4, scoped, tag = 'scoped memory for discriminator_forward.1']
    #allocation8 [shape = 'u8[2560]{0}', space=vmem, size = 0xc00, scoped, tag = 'input window, operand 3, single buffered']
    %9 = vsyncpa [#allocation5], 0
    %10 = vsyncpa [#allocation7], 0
    loop: start=0, step=1, limit=6
    $region2: #{discriminator_forward.1} parent=1 // loop_pre_header
      _
    $region3: #{discriminator_forward.1} parent=1 // loop_header
      %s12 = sphi 0, %s16
      %p13 = scmp.ge.s32.totalorder %s12, 6
      %s22 = sphi 0, %s24
      %s25 = sphi 0, %s22
      %s26 = sphi 0, %s25
      %s42 = sphi 0, %s26
      %s46 = sphi 0, %s46
      %s48 = sphi 0, %s46
      %s49 = sphi 0, %s48
      %s63 = sphi 0, %s49
      %s67 = sphi 0, %s67
      %s69 = sphi 0, %s67
      %s70 = sphi 0, %s69
      %s84 = sphi 0, %s70
      %s88 = sphi 0, %s88
      %s90 = sphi 0, %s88
      %s91 = sphi 0, %s90
      %s105 = sphi 0, %s91
      %s111 = sphi 0, %s113
      %s114 = sphi 0, %s111
      %s115 = sphi 0, %s114
      %s131 = sphi 0, %s115
    $region4: #{discriminator_forward.1} parent=1 // loop_header_branch
      %15 = sbr.rel (%p13) target = $region8
    $region5: #{discriminator_forward.1} parent=1 // loop_body
      %s17 = ssub.s32 %s12, 1
      %s18 = ssub.s32 %s12, 2
      %s19 = sadd.s32 %s12, 1
      %s20 = ssub.s32 %s12, %s19
      %p21 = scmp.eq.s32.totalorder %s20, 0
      %s23 = sadd.s32 %s22, 1
      %s24 = scalar_select %p21, %s22, %s23
      %p27 = pneg %p21
      %p28 = scmp.eq.s32.totalorder %s12, 3
      %p29 = por %p27, %p28
      %p30 = scmp.ne.s32.totalorder %s22, %s25
      %p31 = scmp.eq.s32.totalorder %s12, 0
      %p32 = por %p30, %p31
      %p33 = scmp.ne.s32.totalorder %s22, %s25
      %p34 = scmp.eq.s32.totalorder %s17, 3
      %p35 = por %p33, %p34
      %p36 = scmp.ne.s32.totalorder %s25, %s26
      %p37 = scmp.eq.s32.totalorder %s17, 0
      %p38 = por %p36, %p37
      %p39 = scmp.ne.s32.totalorder %s25, %s26
      %p40 = scmp.eq.s32.totalorder %s18, 3
      %p41 = por %p39, %p40
      %p43 = scmp.ne.s32.totalorder %s26, %s42
      %p44 = scmp.eq.s32.totalorder %s18, 0
      %p45 = por %p43, %p44
      %s47 = sadd.s32 %s46, 1
      %p50 = scmp.eq.s32.totalorder %s12, 3
      %p51 = scmp.ne.s32.totalorder %s46, %s48
      %p52 = scmp.eq.s32.totalorder %s12, 0
      %p53 = por %p51, %p52
      %p54 = scmp.ne.s32.totalorder %s46, %s48
      %p55 = scmp.eq.s32.totalorder %s17, 3
      %p56 = por %p54, %p55
      %p57 = scmp.ne.s32.totalorder %s48, %s49
      %p58 = scmp.eq.s32.totalorder %s17, 0
      %p59 = por %p57, %p58
      %p60 = scmp.ne.s32.totalorder %s48, %s49
      %p61 = scmp.eq.s32.totalorder %s18, 3
      %p62 = por %p60, %p61
      %p64 = scmp.ne.s32.totalorder %s49, %s63
      %p65 = scmp.eq.s32.totalorder %s18, 0
      %p66 = por %p64, %p65
      %s68 = sadd.s32 %s67, 1
      %p71 = scmp.eq.s32.totalorder %s12, 3
      %p72 = scmp.ne.s32.totalorder %s67, %s69
      %p73 = scmp.eq.s32.totalorder %s12, 0
      %p74 = por %p72, %p73
      %p75 = scmp.ne.s32.totalorder %s67, %s69
      %p76 = scmp.eq.s32.totalorder %s17, 3
      %p77 = por %p75, %p76
      %p78 = scmp.ne.s32.totalorder %s69, %s70
      %p79 = scmp.eq.s32.totalorder %s17, 0
      %p80 = por %p78, %p79
      %p81 = scmp.ne.s32.totalorder %s69, %s70
      %p82 = scmp.eq.s32.totalorder %s18, 3
      %p83 = por %p81, %p82
      %p85 = scmp.ne.s32.totalorder %s70, %s84
      %p86 = scmp.eq.s32.totalorder %s18, 0
      %p87 = por %p85, %p86
      %s89 = sadd.s32 %s88, 1
      %p92 = scmp.eq.s32.totalorder %s12, 3
      %p93 = scmp.ne.s32.totalorder %s88, %s90
      %p94 = scmp.eq.s32.totalorder %s12, 0
      %p95 = por %p93, %p94
      %p96 = scmp.ne.s32.totalorder %s88, %s90
      %p97 = scmp.eq.s32.totalorder %s17, 3
      %p98 = por %p96, %p97
      %p99 = scmp.ne.s32.totalorder %s90, %s91
      %p100 = scmp.eq.s32.totalorder %s17, 0
      %p101 = por %p99, %p100
      %p102 = scmp.ne.s32.totalorder %s90, %s91
      %p103 = scmp.eq.s32.totalorder %s18, 3
      %p104 = por %p102, %p103
      %p106 = scmp.ne.s32.totalorder %s91, %s105
      %p107 = scmp.eq.s32.totalorder %s18, 0
      %p108 = por %p106, %p107
      %s109 = ssub.s32 %s12, %s19
      %p110 = scmp.eq.s32.totalorder %s109, 0
      %s112 = sadd.s32 %s111, 1
      %s113 = scalar_select %p110, %s111, %s112
      %p116 = pneg %p110
      %p117 = scmp.eq.s32.totalorder %s12, 3
      %p118 = por %p116, %p117
      %p119 = scmp.ne.s32.totalorder %s111, %s114
      %p120 = scmp.eq.s32.totalorder %s12, 0
      %p121 = por %p119, %p120
      %p122 = scmp.ne.s32.totalorder %s111, %s114
      %p123 = scmp.eq.s32.totalorder %s17, 3
      %p124 = por %p122, %p123
      %p125 = scmp.ne.s32.totalorder %s114, %s115
      %p126 = scmp.eq.s32.totalorder %s17, 0
      %p127 = por %p125, %p126
      %p128 = scmp.ne.s32.totalorder %s114, %s115
      %p129 = scmp.eq.s32.totalorder %s18, 3
      %p130 = por %p128, %p129
      %p132 = scmp.ne.s32.totalorder %s115, %s131
      %p133 = scmp.eq.s32.totalorder %s18, 0
      %p134 = por %p132, %p133
      %p135 = scmp.le.s32.totalorder 1, %s12
      %p136 = scmp.lt.s32.totalorder %s12, 5
      %p137 = pnand %p135, %p136
      %p138 = pneg %p137
      // Predicated region
      $region9: #{discriminator_forward.1} parent=5 // pred_check
        _
      $region10: #{discriminator_forward.1} parent=5 // pred_check_branch
        %140 = sbr.rel (%p137) target = $region12
      $region11: #{discriminator_forward.1} parent=5 // pred_region
        %s141 = ssub.s32 %s12, 1
        // Predicated region
        $region13: #{discriminator_forward.1} parent=11 // pred_check
          %p142 = pneg %p59
        $region14: #{discriminator_forward.1} parent=11 // pred_check_branch
          %144 = sbr.rel (%p142) target = $region16
        $region15: #{discriminator_forward.1} parent=11 // pred_region
          %146 = vsyncadd [#allocation5], 0
          %s147 = sshll.u32 %s1, 4
          %s148 = int_to_ptr.hbm [resolvable:$true] %s147
          %s149 = sshll.u32 [#allocation4], 4
          %s150 = int_to_ptr.vmem [resolvable:$true] %s149
          %155 = dma.hbm_to_vmem [thread:$0]  %s148, 40960, %s150, [#allocation5], 512, 512, 32
        $region16: #{discriminator_forward.1} parent=11 // pred_fallthru
          _
        // Predicated region
        $region17: #{discriminator_forward.1} parent=11 // pred_check
          %p156 = pneg %p80
        $region18: #{discriminator_forward.1} parent=11 // pred_check_branch
          %158 = sbr.rel (%p156) target = $region20
        $region19: #{discriminator_forward.1} parent=11 // pred_region
          %160 = vsyncadd [#allocation7], 0
          %s161 = sshll.u32 %s2, 4
          %s162 = int_to_ptr.hbm [resolvable:$true] %s161
          %s163 = sshll.u32 [#allocation6], 4
          %s164 = int_to_ptr.vmem [resolvable:$true] %s163
          %169 = dma.hbm_to_vmem [thread:$0]  %s162, 10240, %s164, [#allocation7], 640, 640, 40
        $region20: #{discriminator_forward.1} parent=11 // pred_fallthru
          _
        // Predicated region
        $region21: #{discriminator_forward.1} parent=11 // pred_check
          %p170 = pneg %p101
        $region22: #{discriminator_forward.1} parent=11 // pred_check_branch
          %172 = sbr.rel (%p170) target = $region24
        $region23: #{discriminator_forward.1} parent=11 // pred_region
          %174 = vsyncadd [#allocation7], 0
          %s176 = sshll.u32 %s3, 4
          %s177 = int_to_ptr.hbm [resolvable:$true] %s176
          %s178 = sshll.u32 [#allocation8], 4
          %s179 = int_to_ptr.vmem [resolvable:$true] %s178
          %181 = dma.hbm_to_vmem [thread:$0]  %s177, 80, %s179, [#allocation7]
        $region24: #{discriminator_forward.1} parent=11 // pred_fallthru
          _
      $region12: #{discriminator_forward.1} parent=5 // pred_fallthru
        _
      %p182 = scmp.lt.s32.totalorder %s12, 4
      // Predicated region
      $region25: #{discriminator_forward.1} parent=5 // pred_check
        %p183 = pneg %p182
      $region26: #{discriminator_forward.1} parent=5 // pred_check_branch
        %185 = sbr.rel (%p183) target = $region28
      $region27: #{discriminator_forward.1} parent=5 // pred_region
        // Predicated region
        $region29: #{discriminator_forward.1} parent=27 // pred_check
          %p186 = pneg %p32
        $region30: #{discriminator_forward.1} parent=27 // pred_check_branch
          %188 = sbr.rel (%p186) target = $region32
        $region31: #{discriminator_forward.1} parent=27 // pred_region
          %p189 = scmp.lt.s32.totalorder %s12, 3
          %s190 = scalar_select %p189, %s12, 3
          %s191 = smul.addr %s190, 5
          %s192 = smul.addr %s191, 8
          %s193 = scalar_lea.vmem %s0, %s192
        $region32: #{discriminator_forward.1} parent=27 // pred_fallthru
          _
      $region28: #{discriminator_forward.1} parent=5 // pred_fallthru
        _
      %p194 = scmp.le.s32.totalorder 1, %s12
      %p195 = scmp.lt.s32.totalorder %s12, 5
      %p196 = pnand %p194, %p195
      %p197 = pneg %p196
      // Predicated region
      $region33: #{discriminator_forward.1} parent=5 // pred_check
        _
      $region34: #{discriminator_forward.1} parent=5 // pred_check_branch
        %199 = sbr.rel (%p196) target = $region36
      $region35: #{discriminator_forward.1} parent=5 // pred_region
        %s200 = ssub.s32 %s12, 1
        // Predicated region
        $region37: #{discriminator_forward.1} parent=35 // pred_check
          %p201 = pneg %p59
        $region38: #{discriminator_forward.1} parent=35 // pred_check_branch
          %203 = sbr.rel (%p201) target = $region40
        $region39: #{discriminator_forward.1} parent=35 // pred_region
          %205 = dma.done [#allocation5], 40960
        $region40: #{discriminator_forward.1} parent=35 // pred_fallthru
          _
        // Predicated region
        $region41: #{discriminator_forward.1} parent=35 // pred_check
          %p206 = pneg %p80
        $region42: #{discriminator_forward.1} parent=35 // pred_check_branch
          %208 = sbr.rel (%p206) target = $region44
        $region43: #{discriminator_forward.1} parent=35 // pred_region
          %210 = dma.done [#allocation7], 10240
        $region44: #{discriminator_forward.1} parent=35 // pred_fallthru
          _
        // Predicated region
        $region45: #{discriminator_forward.1} parent=35 // pred_check
          %p211 = pneg %p101
        $region46: #{discriminator_forward.1} parent=35 // pred_check_branch
          %213 = sbr.rel (%p211) target = $region48
        $region47: #{discriminator_forward.1} parent=35 // pred_region
          %215 = dma.done [#allocation7], 80
        $region48: #{discriminator_forward.1} parent=35 // pred_fallthru
          _
        %p216 = scmp.lt.s32.totalorder %s17, 3
        %s217 = scalar_select %p216, %s17, 3
        %s218 = smul.addr %s217, 5
        %s219 = smul.addr %s218, 8
        %s220 = scalar_lea.vmem %s0, %s219
        %p221 = pneg %p38
        %p222 = pneg %p35
        %p223 = pneg %p59
        %p224 = pneg %p56
        %p225 = pneg %p80
        %p226 = pneg %p77
        %p227 = pneg %p101
        %p228 = pneg %p98
        %p229 = pneg %p127
        %p230 = pneg %p124
        %p231 = scmp.lt.s32.totalorder %s17, 3
        %s232 = scalar_select %p231, %s17, 3
        %s233 = smul.addr %s232, 8
        %s234 = scalar_lea.vmem %s4, %s233
        %p235 = scmp.lt.s32.totalorder %s17, 3
        %s236 = scalar_select %p235, %s17, 3
        %s237 = smul.addr %s236, 5
        %s238 = smul.addr %s237, 8
        %s239 = scalar_lea.vmem %s0, %s238
        %p240 = scmp.lt.s32.totalorder %s17, 3
        %s241 = scalar_select %p240, %s17, 3
        %s242 = smul.addr %s241, 8
        %s243 = scalar_lea.vmem %s4, %s242
        %v244 = vld [vmem:[%s239] sm:$0xff]
        %v245 = vld [vmem:[%s239 + $0x8] sm:$0xff]
        %v246 = vld [vmem:[%s239 + $0x10] sm:$0xff]
        %v247 = vld [vmem:[%s239 + $0x18] sm:$0xff]
        %v248 = vld [vmem:[%s239 + $0x20] sm:$0xff]
        %v249 = vld [vmem:[#allocation4] sm:$0xff]
        %v250 = vld [vmem:[#allocation4 + $0x8] sm:$0xff]
        %v251 = vld [vmem:[#allocation4 + $0x10] sm:$0xff]
        %v252 = vld [vmem:[#allocation4 + $0x18] sm:$0xff]
        %v253 = vld [vmem:[#allocation4 + $0x20] sm:$0xff]
        %v254 = vld [vmem:[#allocation4 + $0x28] sm:$0xff]
        %v255 = vld [vmem:[#allocation4 + $0x30] sm:$0xff]
        %v256 = vld [vmem:[#allocation4 + $0x38] sm:$0xff]
        %v257 = vld [vmem:[#allocation4 + $0x40] sm:$0xff]
        %v258 = vld [vmem:[#allocation4 + $0x48] sm:$0xff]
        %v259 = vld [vmem:[#allocation4 + $0x50] sm:$0xff]
        %v260 = vld [vmem:[#allocation4 + $0x58] sm:$0xff]
        %v261 = vld [vmem:[#allocation4 + $0x60] sm:$0xff]
        %v262 = vld [vmem:[#allocation4 + $0x68] sm:$0xff]
        %v263 = vld [vmem:[#allocation4 + $0x70] sm:$0xff]
        %v264 = vld [vmem:[#allocation4 + $0x78] sm:$0xff]
        %v265 = vld [vmem:[#allocation4 + $0x80] sm:$0xff]
        %v266 = vld [vmem:[#allocation4 + $0x88] sm:$0xff]
        %v267 = vld [vmem:[#allocation4 + $0x90] sm:$0xff]
        %v268 = vld [vmem:[#allocation4 + $0x98] sm:$0xff]
        %v269 = vld [vmem:[#allocation4 + $0xa0] sm:$0xff]
        %v270 = vld [vmem:[#allocation4 + $0xa8] sm:$0xff]
        %v271 = vld [vmem:[#allocation4 + $0xb0] sm:$0xff]
        %v272 = vld [vmem:[#allocation4 + $0xb8] sm:$0xff]
        %v273 = vld [vmem:[#allocation4 + $0xc0] sm:$0xff]
        %v274 = vld [vmem:[#allocation4 + $0xc8] sm:$0xff]
        %v275 = vld [vmem:[#allocation4 + $0xd0] sm:$0xff]
        %v276 = vld [vmem:[#allocation4 + $0xd8] sm:$0xff]
        %v277 = vld [vmem:[#allocation4 + $0xe0] sm:$0xff]
        %v278 = vld [vmem:[#allocation4 + $0xe8] sm:$0xff]
        %v279 = vld [vmem:[#allocation4 + $0xf0] sm:$0xff]
        %v280 = vld [vmem:[#allocation4 + $0xf8] sm:$0xff]
        %v281 = vld [vmem:[#allocation4 + $0x100] sm:$0xff]
        %v282 = vld [vmem:[#allocation4 + $0x108] sm:$0xff]
        %v283 = vld [vmem:[#allocation4 + $0x110] sm:$0xff]
        %v284 = vld [vmem:[#allocation4 + $0x118] sm:$0xff]
        %v285 = vld [vmem:[#allocation4 + $0x120] sm:$0xff]
        %v286 = vld [vmem:[#allocation4 + $0x128] sm:$0xff]
        %v287 = vld [vmem:[#allocation4 + $0x130] sm:$0xff]
        %v288 = vld [vmem:[#allocation4 + $0x138] sm:$0xff]
        %v289 = vld [vmem:[#allocation4 + $0x140] sm:$0xff]
        %v290 = vld [vmem:[#allocation4 + $0x148] sm:$0xff]
        %v291 = vld [vmem:[#allocation4 + $0x150] sm:$0xff]
        %v292 = vld [vmem:[#allocation4 + $0x158] sm:$0xff]
        %v293 = vld [vmem:[#allocation4 + $0x160] sm:$0xff]
        %v294 = vld [vmem:[#allocation4 + $0x168] sm:$0xff]
        %v295 = vld [vmem:[#allocation4 + $0x170] sm:$0xff]
        %v296 = vld [vmem:[#allocation4 + $0x178] sm:$0xff]
        %v297 = vld [vmem:[#allocation4 + $0x180] sm:$0xff]
        %v298 = vld [vmem:[#allocation4 + $0x188] sm:$0xff]
        %v299 = vld [vmem:[#allocation4 + $0x190] sm:$0xff]
        %v300 = vld [vmem:[#allocation4 + $0x198] sm:$0xff]
        %v301 = vld [vmem:[#allocation4 + $0x1a0] sm:$0xff]
        %v302 = vld [vmem:[#allocation4 + $0x1a8] sm:$0xff]
        %v303 = vld [vmem:[#allocation4 + $0x1b0] sm:$0xff]
        %v304 = vld [vmem:[#allocation4 + $0x1b8] sm:$0xff]
        %v305 = vld [vmem:[#allocation4 + $0x1c0] sm:$0xff]
        %v306 = vld [vmem:[#allocation4 + $0x1c8] sm:$0xff]
        %v307 = vld [vmem:[#allocation4 + $0x1d0] sm:$0xff]
        %v308 = vld [vmem:[#allocation4 + $0x1d8] sm:$0xff]
        %v309 = vld [vmem:[#allocation4 + $0x1e0] sm:$0xff]
        %v310 = vld [vmem:[#allocation4 + $0x1e8] sm:$0xff]
        %v311 = vld [vmem:[#allocation4 + $0x1f0] sm:$0xff]
        %v312 = vld [vmem:[#allocation4 + $0x1f8] sm:$0xff]
        %v313 = vld [vmem:[#allocation4 + $0x200] sm:$0xff]
        %v314 = vld [vmem:[#allocation4 + $0x208] sm:$0xff]
        %v315 = vld [vmem:[#allocation4 + $0x210] sm:$0xff]
        %v316 = vld [vmem:[#allocation4 + $0x218] sm:$0xff]
        %v317 = vld [vmem:[#allocation4 + $0x220] sm:$0xff]
        %v318 = vld [vmem:[#allocation4 + $0x228] sm:$0xff]
        %v319 = vld [vmem:[#allocation4 + $0x230] sm:$0xff]
        %v320 = vld [vmem:[#allocation4 + $0x238] sm:$0xff]
        %v321 = vld [vmem:[#allocation4 + $0x240] sm:$0xff]
        %v322 = vld [vmem:[#allocation4 + $0x248] sm:$0xff]
        %v323 = vld [vmem:[#allocation4 + $0x250] sm:$0xff]
        %v324 = vld [vmem:[#allocation4 + $0x258] sm:$0xff]
        %v325 = vld [vmem:[#allocation4 + $0x260] sm:$0xff]
        %v326 = vld [vmem:[#allocation4 + $0x268] sm:$0xff]
        %v327 = vld [vmem:[#allocation4 + $0x270] sm:$0xff]
        %v328 = vld [vmem:[#allocation4 + $0x278] sm:$0xff]
        %v329 = vld [vmem:[#allocation4 + $0x280] sm:$0xff]
        %v330 = vld [vmem:[#allocation4 + $0x288] sm:$0xff]
        %v331 = vld [vmem:[#allocation4 + $0x290] sm:$0xff]
        %v332 = vld [vmem:[#allocation4 + $0x298] sm:$0xff]
        %v333 = vld [vmem:[#allocation4 + $0x2a0] sm:$0xff]
        %v334 = vld [vmem:[#allocation4 + $0x2a8] sm:$0xff]
        %v335 = vld [vmem:[#allocation4 + $0x2b0] sm:$0xff]
        %v336 = vld [vmem:[#allocation4 + $0x2b8] sm:$0xff]
        %v337 = vld [vmem:[#allocation4 + $0x2c0] sm:$0xff]
        %v338 = vld [vmem:[#allocation4 + $0x2c8] sm:$0xff]
        %v339 = vld [vmem:[#allocation4 + $0x2d0] sm:$0xff]
        %v340 = vld [vmem:[#allocation4 + $0x2d8] sm:$0xff]
        %v341 = vld [vmem:[#allocation4 + $0x2e0] sm:$0xff]
        %v342 = vld [vmem:[#allocation4 + $0x2e8] sm:$0xff]
        %v343 = vld [vmem:[#allocation4 + $0x2f0] sm:$0xff]
        %v344 = vld [vmem:[#allocation4 + $0x2f8] sm:$0xff]
        %v345 = vld [vmem:[#allocation4 + $0x300] sm:$0xff]
        %v346 = vld [vmem:[#allocation4 + $0x308] sm:$0xff]
        %v347 = vld [vmem:[#allocation4 + $0x310] sm:$0xff]
        %v348 = vld [vmem:[#allocation4 + $0x318] sm:$0xff]
        %v349 = vld [vmem:[#allocation4 + $0x320] sm:$0xff]
        %v350 = vld [vmem:[#allocation4 + $0x328] sm:$0xff]
        %v351 = vld [vmem:[#allocation4 + $0x330] sm:$0xff]
        %v352 = vld [vmem:[#allocation4 + $0x338] sm:$0xff]
        %v353 = vld [vmem:[#allocation4 + $0x340] sm:$0xff]
        %v354 = vld [vmem:[#allocation4 + $0x348] sm:$0xff]
        %v355 = vld [vmem:[#allocation4 + $0x350] sm:$0xff]
        %v356 = vld [vmem:[#allocation4 + $0x358] sm:$0xff]
        %v357 = vld [vmem:[#allocation4 + $0x360] sm:$0xff]
        %v358 = vld [vmem:[#allocation4 + $0x368] sm:$0xff]
        %v359 = vld [vmem:[#allocation4 + $0x370] sm:$0xff]
        %v360 = vld [vmem:[#allocation4 + $0x378] sm:$0xff]
        %v361 = vld [vmem:[#allocation4 + $0x380] sm:$0xff]
        %v362 = vld [vmem:[#allocation4 + $0x388] sm:$0xff]
        %v363 = vld [vmem:[#allocation4 + $0x390] sm:$0xff]
        %v364 = vld [vmem:[#allocation4 + $0x398] sm:$0xff]
        %v365 = vld [vmem:[#allocation4 + $0x3a0] sm:$0xff]
        %v366 = vld [vmem:[#allocation4 + $0x3a8] sm:$0xff]
        %v367 = vld [vmem:[#allocation4 + $0x3b0] sm:$0xff]
        %v368 = vld [vmem:[#allocation4 + $0x3b8] sm:$0xff]
        %v369 = vld [vmem:[#allocation4 + $0x3c0] sm:$0xff]
        %v370 = vld [vmem:[#allocation4 + $0x3c8] sm:$0xff]
        %v371 = vld [vmem:[#allocation4 + $0x3d0] sm:$0xff]
        %v372 = vld [vmem:[#allocation4 + $0x3d8] sm:$0xff]
        %v373 = vld [vmem:[#allocation4 + $0x3e0] sm:$0xff]
        %v374 = vld [vmem:[#allocation4 + $0x3e8] sm:$0xff]
        %v375 = vld [vmem:[#allocation4 + $0x3f0] sm:$0xff]
        %v376 = vld [vmem:[#allocation4 + $0x3f8] sm:$0xff]
        %v377 = vld [vmem:[#allocation4 + $0x400] sm:$0xff]
        %v378 = vld [vmem:[#allocation4 + $0x408] sm:$0xff]
        %v379 = vld [vmem:[#allocation4 + $0x410] sm:$0xff]
        %v380 = vld [vmem:[#allocation4 + $0x418] sm:$0xff]
        %v381 = vld [vmem:[#allocation4 + $0x420] sm:$0xff]
        %v382 = vld [vmem:[#allocation4 + $0x428] sm:$0xff]
        %v383 = vld [vmem:[#allocation4 + $0x430] sm:$0xff]
        %v384 = vld [vmem:[#allocation4 + $0x438] sm:$0xff]
        %v385 = vld [vmem:[#allocation4 + $0x440] sm:$0xff]
        %v386 = vld [vmem:[#allocation4 + $0x448] sm:$0xff]
        %v387 = vld [vmem:[#allocation4 + $0x450] sm:$0xff]
        %v388 = vld [vmem:[#allocation4 + $0x458] sm:$0xff]
        %v389 = vld [vmem:[#allocation4 + $0x460] sm:$0xff]
        %v390 = vld [vmem:[#allocation4 + $0x468] sm:$0xff]
        %v391 = vld [vmem:[#allocation4 + $0x470] sm:$0xff]
        %v392 = vld [vmem:[#allocation4 + $0x478] sm:$0xff]
        %v393 = vld [vmem:[#allocation4 + $0x480] sm:$0xff]
        %v394 = vld [vmem:[#allocation4 + $0x488] sm:$0xff]
        %v395 = vld [vmem:[#allocation4 + $0x490] sm:$0xff]
        %v396 = vld [vmem:[#allocation4 + $0x498] sm:$0xff]
        %v397 = vld [vmem:[#allocation4 + $0x4a0] sm:$0xff]
        %v398 = vld [vmem:[#allocation4 + $0x4a8] sm:$0xff]
        %v399 = vld [vmem:[#allocation4 + $0x4b0] sm:$0xff]
        %v400 = vld [vmem:[#allocation4 + $0x4b8] sm:$0xff]
        %v401 = vld [vmem:[#allocation4 + $0x4c0] sm:$0xff]
        %v402 = vld [vmem:[#allocation4 + $0x4c8] sm:$0xff]
        %v403 = vld [vmem:[#allocation4 + $0x4d0] sm:$0xff]
        %v404 = vld [vmem:[#allocation4 + $0x4d8] sm:$0xff]
        %v405 = vld [vmem:[#allocation4 + $0x4e0] sm:$0xff]
        %v406 = vld [vmem:[#allocation4 + $0x4e8] sm:$0xff]
        %v407 = vld [vmem:[#allocation4 + $0x4f0] sm:$0xff]
        %v408 = vld [vmem:[#allocation4 + $0x4f8] sm:$0xff]
        %v409 = vld [vmem:[#allocation4 + $0x500] sm:$0xff]
        %v410 = vld [vmem:[#allocation4 + $0x508] sm:$0xff]
        %v411 = vld [vmem:[#allocation4 + $0x510] sm:$0xff]
        %v412 = vld [vmem:[#allocation4 + $0x518] sm:$0xff]
        %v413 = vld [vmem:[#allocation4 + $0x520] sm:$0xff]
        %v414 = vld [vmem:[#allocation4 + $0x528] sm:$0xff]
        %v415 = vld [vmem:[#allocation4 + $0x530] sm:$0xff]
        %v416 = vld [vmem:[#allocation4 + $0x538] sm:$0xff]
        %v417 = vld [vmem:[#allocation4 + $0x540] sm:$0xff]
        %v418 = vld [vmem:[#allocation4 + $0x548] sm:$0xff]
        %v419 = vld [vmem:[#allocation4 + $0x550] sm:$0xff]
        %v420 = vld [vmem:[#allocation4 + $0x558] sm:$0xff]
        %v421 = vld [vmem:[#allocation4 + $0x560] sm:$0xff]
        %v422 = vld [vmem:[#allocation4 + $0x568] sm:$0xff]
        %v423 = vld [vmem:[#allocation4 + $0x570] sm:$0xff]
        %v424 = vld [vmem:[#allocation4 + $0x578] sm:$0xff]
        %v425 = vld [vmem:[#allocation4 + $0x580] sm:$0xff]
        %v426 = vld [vmem:[#allocation4 + $0x588] sm:$0xff]
        %v427 = vld [vmem:[#allocation4 + $0x590] sm:$0xff]
        %v428 = vld [vmem:[#allocation4 + $0x598] sm:$0xff]
        %v429 = vld [vmem:[#allocation4 + $0x5a0] sm:$0xff]
        %v430 = vld [vmem:[#allocation4 + $0x5a8] sm:$0xff]
        %v431 = vld [vmem:[#allocation4 + $0x5b0] sm:$0xff]
        %v432 = vld [vmem:[#allocation4 + $0x5b8] sm:$0xff]
        %v433 = vld [vmem:[#allocation4 + $0x5c0] sm:$0xff]
        %v434 = vld [vmem:[#allocation4 + $0x5c8] sm:$0xff]
        %v435 = vld [vmem:[#allocation4 + $0x5d0] sm:$0xff]
        %v436 = vld [vmem:[#allocation4 + $0x5d8] sm:$0xff]
        %v437 = vld [vmem:[#allocation4 + $0x5e0] sm:$0xff]
        %v438 = vld [vmem:[#allocation4 + $0x5e8] sm:$0xff]
        %v439 = vld [vmem:[#allocation4 + $0x5f0] sm:$0xff]
        %v440 = vld [vmem:[#allocation4 + $0x5f8] sm:$0xff]
        %v441 = vld [vmem:[#allocation4 + $0x600] sm:$0xff]
        %v442 = vld [vmem:[#allocation4 + $0x608] sm:$0xff]
        %v443 = vld [vmem:[#allocation4 + $0x610] sm:$0xff]
        %v444 = vld [vmem:[#allocation4 + $0x618] sm:$0xff]
        %v445 = vld [vmem:[#allocation4 + $0x620] sm:$0xff]
        %v446 = vld [vmem:[#allocation4 + $0x628] sm:$0xff]
        %v447 = vld [vmem:[#allocation4 + $0x630] sm:$0xff]
        %v448 = vld [vmem:[#allocation4 + $0x638] sm:$0xff]
        %v449 = vld [vmem:[#allocation4 + $0x640] sm:$0xff]
        %v450 = vld [vmem:[#allocation4 + $0x648] sm:$0xff]
        %v451 = vld [vmem:[#allocation4 + $0x650] sm:$0xff]
        %v452 = vld [vmem:[#allocation4 + $0x658] sm:$0xff]
        %v453 = vld [vmem:[#allocation4 + $0x660] sm:$0xff]
        %v454 = vld [vmem:[#allocation4 + $0x668] sm:$0xff]
        %v455 = vld [vmem:[#allocation4 + $0x670] sm:$0xff]
        %v456 = vld [vmem:[#allocation4 + $0x678] sm:$0xff]
        %v457 = vld [vmem:[#allocation4 + $0x680] sm:$0xff]
        %v458 = vld [vmem:[#allocation4 + $0x688] sm:$0xff]
        %v459 = vld [vmem:[#allocation4 + $0x690] sm:$0xff]
        %v460 = vld [vmem:[#allocation4 + $0x698] sm:$0xff]
        %v461 = vld [vmem:[#allocation4 + $0x6a0] sm:$0xff]
        %v462 = vld [vmem:[#allocation4 + $0x6a8] sm:$0xff]
        %v463 = vld [vmem:[#allocation4 + $0x6b0] sm:$0xff]
        %v464 = vld [vmem:[#allocation4 + $0x6b8] sm:$0xff]
        %v465 = vld [vmem:[#allocation4 + $0x6c0] sm:$0xff]
        %v466 = vld [vmem:[#allocation4 + $0x6c8] sm:$0xff]
        %v467 = vld [vmem:[#allocation4 + $0x6d0] sm:$0xff]
        %v468 = vld [vmem:[#allocation4 + $0x6d8] sm:$0xff]
        %v469 = vld [vmem:[#allocation4 + $0x6e0] sm:$0xff]
        %v470 = vld [vmem:[#allocation4 + $0x6e8] sm:$0xff]
        %v471 = vld [vmem:[#allocation4 + $0x6f0] sm:$0xff]
        %v472 = vld [vmem:[#allocation4 + $0x6f8] sm:$0xff]
        %v473 = vld [vmem:[#allocation4 + $0x700] sm:$0xff]
        %v474 = vld [vmem:[#allocation4 + $0x708] sm:$0xff]
        %v475 = vld [vmem:[#allocation4 + $0x710] sm:$0xff]
        %v476 = vld [vmem:[#allocation4 + $0x718] sm:$0xff]
        %v477 = vld [vmem:[#allocation4 + $0x720] sm:$0xff]
        %v478 = vld [vmem:[#allocation4 + $0x728] sm:$0xff]
        %v479 = vld [vmem:[#allocation4 + $0x730] sm:$0xff]
        %v480 = vld [vmem:[#allocation4 + $0x738] sm:$0xff]
        %v481 = vld [vmem:[#allocation4 + $0x740] sm:$0xff]
        %v482 = vld [vmem:[#allocation4 + $0x748] sm:$0xff]
        %v483 = vld [vmem:[#allocation4 + $0x750] sm:$0xff]
        %v484 = vld [vmem:[#allocation4 + $0x758] sm:$0xff]
        %v485 = vld [vmem:[#allocation4 + $0x760] sm:$0xff]
        %v486 = vld [vmem:[#allocation4 + $0x768] sm:$0xff]
        %v487 = vld [vmem:[#allocation4 + $0x770] sm:$0xff]
        %v488 = vld [vmem:[#allocation4 + $0x778] sm:$0xff]
        %v489 = vld [vmem:[#allocation4 + $0x780] sm:$0xff]
        %v490 = vld [vmem:[#allocation4 + $0x788] sm:$0xff]
        %v491 = vld [vmem:[#allocation4 + $0x790] sm:$0xff]
        %v492 = vld [vmem:[#allocation4 + $0x798] sm:$0xff]
        %v493 = vld [vmem:[#allocation4 + $0x7a0] sm:$0xff]
        %v494 = vld [vmem:[#allocation4 + $0x7a8] sm:$0xff]
        %v495 = vld [vmem:[#allocation4 + $0x7b0] sm:$0xff]
        %v496 = vld [vmem:[#allocation4 + $0x7b8] sm:$0xff]
        %v497 = vld [vmem:[#allocation4 + $0x7c0] sm:$0xff]
        %v498 = vld [vmem:[#allocation4 + $0x7c8] sm:$0xff]
        %v499 = vld [vmem:[#allocation4 + $0x7d0] sm:$0xff]
        %v500 = vld [vmem:[#allocation4 + $0x7d8] sm:$0xff]
        %v501 = vld [vmem:[#allocation4 + $0x7e0] sm:$0xff]
        %v502 = vld [vmem:[#allocation4 + $0x7e8] sm:$0xff]
        %v503 = vld [vmem:[#allocation4 + $0x7f0] sm:$0xff]
        %v504 = vld [vmem:[#allocation4 + $0x7f8] sm:$0xff]
        %v505 = vld [vmem:[#allocation4 + $0x800] sm:$0xff]
        %v506 = vld [vmem:[#allocation4 + $0x808] sm:$0xff]
        %v507 = vld [vmem:[#allocation4 + $0x810] sm:$0xff]
        %v508 = vld [vmem:[#allocation4 + $0x818] sm:$0xff]
        %v509 = vld [vmem:[#allocation4 + $0x820] sm:$0xff]
        %v510 = vld [vmem:[#allocation4 + $0x828] sm:$0xff]
        %v511 = vld [vmem:[#allocation4 + $0x830] sm:$0xff]
        %v512 = vld [vmem:[#allocation4 + $0x838] sm:$0xff]
        %v513 = vld [vmem:[#allocation4 + $0x840] sm:$0xff]
        %v514 = vld [vmem:[#allocation4 + $0x848] sm:$0xff]
        %v515 = vld [vmem:[#allocation4 + $0x850] sm:$0xff]
        %v516 = vld [vmem:[#allocation4 + $0x858] sm:$0xff]
        %v517 = vld [vmem:[#allocation4 + $0x860] sm:$0xff]
        %v518 = vld [vmem:[#allocation4 + $0x868] sm:$0xff]
        %v519 = vld [vmem:[#allocation4 + $0x870] sm:$0xff]
        %v520 = vld [vmem:[#allocation4 + $0x878] sm:$0xff]
        %v521 = vld [vmem:[#allocation4 + $0x880] sm:$0xff]
        %v522 = vld [vmem:[#allocation4 + $0x888] sm:$0xff]
        %v523 = vld [vmem:[#allocation4 + $0x890] sm:$0xff]
        %v524 = vld [vmem:[#allocation4 + $0x898] sm:$0xff]
        %v525 = vld [vmem:[#allocation4 + $0x8a0] sm:$0xff]
        %v526 = vld [vmem:[#allocation4 + $0x8a8] sm:$0xff]
        %v527 = vld [vmem:[#allocation4 + $0x8b0] sm:$0xff]
        %v528 = vld [vmem:[#allocation4 + $0x8b8] sm:$0xff]
        %v529 = vld [vmem:[#allocation4 + $0x8c0] sm:$0xff]
        %v530 = vld [vmem:[#allocation4 + $0x8c8] sm:$0xff]
        %v531 = vld [vmem:[#allocation4 + $0x8d0] sm:$0xff]
        %v532 = vld [vmem:[#allocation4 + $0x8d8] sm:$0xff]
        %v533 = vld [vmem:[#allocation4 + $0x8e0] sm:$0xff]
        %v534 = vld [vmem:[#allocation4 + $0x8e8] sm:$0xff]
        %v535 = vld [vmem:[#allocation4 + $0x8f0] sm:$0xff]
        %v536 = vld [vmem:[#allocation4 + $0x8f8] sm:$0xff]
        %v537 = vld [vmem:[#allocation4 + $0x900] sm:$0xff]
        %v538 = vld [vmem:[#allocation4 + $0x908] sm:$0xff]
        %v539 = vld [vmem:[#allocation4 + $0x910] sm:$0xff]
        %v540 = vld [vmem:[#allocation4 + $0x918] sm:$0xff]
        %v541 = vld [vmem:[#allocation4 + $0x920] sm:$0xff]
        %v542 = vld [vmem:[#allocation4 + $0x928] sm:$0xff]
        %v543 = vld [vmem:[#allocation4 + $0x930] sm:$0xff]
        %v544 = vld [vmem:[#allocation4 + $0x938] sm:$0xff]
        %v545 = vld [vmem:[#allocation4 + $0x940] sm:$0xff]
        %v546 = vld [vmem:[#allocation4 + $0x948] sm:$0xff]
        %v547 = vld [vmem:[#allocation4 + $0x950] sm:$0xff]
        %v548 = vld [vmem:[#allocation4 + $0x958] sm:$0xff]
        %v549 = vld [vmem:[#allocation4 + $0x960] sm:$0xff]
        %v550 = vld [vmem:[#allocation4 + $0x968] sm:$0xff]
        %v551 = vld [vmem:[#allocation4 + $0x970] sm:$0xff]
        %v552 = vld [vmem:[#allocation4 + $0x978] sm:$0xff]
        %v553 = vld [vmem:[#allocation4 + $0x980] sm:$0xff]
        %v554 = vld [vmem:[#allocation4 + $0x988] sm:$0xff]
        %v555 = vld [vmem:[#allocation4 + $0x990] sm:$0xff]
        %v556 = vld [vmem:[#allocation4 + $0x998] sm:$0xff]
        %v557 = vld [vmem:[#allocation4 + $0x9a0] sm:$0xff]
        %v558 = vld [vmem:[#allocation4 + $0x9a8] sm:$0xff]
        %v559 = vld [vmem:[#allocation4 + $0x9b0] sm:$0xff]
        %v560 = vld [vmem:[#allocation4 + $0x9b8] sm:$0xff]
        %v561 = vld [vmem:[#allocation4 + $0x9c0] sm:$0xff]
        %v562 = vld [vmem:[#allocation4 + $0x9c8] sm:$0xff]
        %v563 = vld [vmem:[#allocation4 + $0x9d0] sm:$0xff]
        %v564 = vld [vmem:[#allocation4 + $0x9d8] sm:$0xff]
        %v565 = vld [vmem:[#allocation4 + $0x9e0] sm:$0xff]
        %v566 = vld [vmem:[#allocation4 + $0x9e8] sm:$0xff]
        %v567 = vld [vmem:[#allocation4 + $0x9f0] sm:$0xff]
        %v568 = vld [vmem:[#allocation4 + $0x9f8] sm:$0xff]
        %v569 = vld [vmem:[#allocation8] sm:$0xf]
        %v571 = vperm.slane %v569, 0
        %v572 = vperm.slane %v569, 1
        %v573 = vperm.slane %v569, 2
        %v574 = vperm.slane %v569, 3
        %579 = vmatpush.msra.mxu0 %v309
        %580 = vmatpush.msra.mxu0 %v305
        %581 = vmatpush.msra.mxu0 %v301
        %582 = vmatpush.msra.mxu0 %v297
        %583 = vmatpush.msra.mxu0 %v293
        %584 = vmatpush.msra.mxu0 %v289
        %585 = vmatpush.msra.mxu0 %v285
        %586 = vmatpush.msra.mxu0 %v281
        %587 = vmatpush.msra.mxu0 %v277
        %588 = vmatpush.msra.mxu0 %v273
        %589 = vmatpush.msra.mxu0 %v269
        %590 = vmatpush.msra.mxu0 %v265
        %591 = vmatpush.msra.mxu0 %v261
        %592 = vmatpush.msra.mxu0 %v257
        %593 = vmatpush.msra.mxu0 %v253
        %594 = vmatpush.msra.mxu0 %v249
        %595 = vmatmul.f32.gmra.mxu0 %v244
        %v596 = vpop.f32.mrf.mxu0
        %v597 = vadd.f32 %v571, %v596
        %598 = vdwg.mxu0
        %599 = vmatpush.msra.mxu0 %v373
        %600 = vmatpush.msra.mxu0 %v369
        %601 = vmatpush.msra.mxu0 %v365
        %602 = vmatpush.msra.mxu0 %v361
        %603 = vmatpush.msra.mxu0 %v357
        %604 = vmatpush.msra.mxu0 %v353
        %605 = vmatpush.msra.mxu0 %v349
        %606 = vmatpush.msra.mxu0 %v345
        %607 = vmatpush.msra.mxu0 %v341
        %608 = vmatpush.msra.mxu0 %v337
        %609 = vmatpush.msra.mxu0 %v333
        %610 = vmatpush.msra.mxu0 %v329
        %611 = vmatpush.msra.mxu0 %v325
        %612 = vmatpush.msra.mxu0 %v321
        %613 = vmatpush.msra.mxu0 %v317
        %614 = vmatpush.msra.mxu0 %v313
        %615 = vmatmul.f32.gmra.mxu0 %v245
        %v616 = vpop.f32.mrf.mxu0
        %v617 = vadd.f32 %v597, %v616
        %618 = vdwg.mxu0
        %619 = vmatpush.msra.mxu0 %v437
        %620 = vmatpush.msra.mxu0 %v433
        %621 = vmatpush.msra.mxu0 %v429
        %622 = vmatpush.msra.mxu0 %v425
        %623 = vmatpush.msra.mxu0 %v421
        %624 = vmatpush.msra.mxu0 %v417
        %625 = vmatpush.msra.mxu0 %v413
        %626 = vmatpush.msra.mxu0 %v409
        %627 = vmatpush.msra.mxu0 %v405
        %628 = vmatpush.msra.mxu0 %v401
        %629 = vmatpush.msra.mxu0 %v397
        %630 = vmatpush.msra.mxu0 %v393
        %631 = vmatpush.msra.mxu0 %v389
        %632 = vmatpush.msra.mxu0 %v385
        %633 = vmatpush.msra.mxu0 %v381
        %634 = vmatpush.msra.mxu0 %v377
        %635 = vmatmul.f32.gmra.mxu0 %v246
        %v636 = vpop.f32.mrf.mxu0
        %v637 = vadd.f32 %v617, %v636
        %638 = vdwg.mxu0
        %639 = vmatpush.msra.mxu0 %v501
        %640 = vmatpush.msra.mxu0 %v497
        %641 = vmatpush.msra.mxu0 %v493
        %642 = vmatpush.msra.mxu0 %v489
        %643 = vmatpush.msra.mxu0 %v485
        %644 = vmatpush.msra.mxu0 %v481
        %645 = vmatpush.msra.mxu0 %v477
        %646 = vmatpush.msra.mxu0 %v473
        %647 = vmatpush.msra.mxu0 %v469
        %648 = vmatpush.msra.mxu0 %v465
        %649 = vmatpush.msra.mxu0 %v461
        %650 = vmatpush.msra.mxu0 %v457
        %651 = vmatpush.msra.mxu0 %v453
        %652 = vmatpush.msra.mxu0 %v449
        %653 = vmatpush.msra.mxu0 %v445
        %654 = vmatpush.msra.mxu0 %v441
        %655 = vmatmul.f32.gmra.mxu0 %v247
        %v656 = vpop.f32.mrf.mxu0
        %v657 = vadd.f32 %v637, %v656
        %658 = vdwg.mxu0
        %659 = vmatpush.msra.mxu0 %v565
        %660 = vmatpush.msra.mxu0 %v561
        %661 = vmatpush.msra.mxu0 %v557
        %662 = vmatpush.msra.mxu0 %v553
        %663 = vmatpush.msra.mxu0 %v549
        %664 = vmatpush.msra.mxu0 %v545
        %665 = vmatpush.msra.mxu0 %v541
        %666 = vmatpush.msra.mxu0 %v537
        %667 = vmatpush.msra.mxu0 %v533
        %668 = vmatpush.msra.mxu0 %v529
        %669 = vmatpush.msra.mxu0 %v525
        %670 = vmatpush.msra.mxu0 %v521
        %671 = vmatpush.msra.mxu0 %v517
        %672 = vmatpush.msra.mxu0 %v513
        %673 = vmatpush.msra.mxu0 %v509
        %674 = vmatpush.msra.mxu0 %v505
        %675 = vmatmul.f32.gmra.mxu0 %v248
        %v676 = vpop.f32.mrf.mxu0
        %v677 = vadd.f32 %v657, %v676
        %678 = vdwg.mxu0
        %679 = vmatpush.msra.mxu0 %v310
        %680 = vmatpush.msra.mxu0 %v306
        %681 = vmatpush.msra.mxu0 %v302
        %682 = vmatpush.msra.mxu0 %v298
        %683 = vmatpush.msra.mxu0 %v294
        %684 = vmatpush.msra.mxu0 %v290
        %685 = vmatpush.msra.mxu0 %v286
        %686 = vmatpush.msra.mxu0 %v282
        %687 = vmatpush.msra.mxu0 %v278
        %688 = vmatpush.msra.mxu0 %v274
        %689 = vmatpush.msra.mxu0 %v270
        %690 = vmatpush.msra.mxu0 %v266
        %691 = vmatpush.msra.mxu0 %v262
        %692 = vmatpush.msra.mxu0 %v258
        %693 = vmatpush.msra.mxu0 %v254
        %694 = vmatpush.msra.mxu0 %v250
        %695 = vmatmul.f32.gmra.mxu0 %v244
        %v696 = vpop.f32.mrf.mxu0
        %v697 = vadd.f32 %v572, %v696
        %698 = vdwg.mxu0
        %699 = vmatpush.msra.mxu0 %v374
        %700 = vmatpush.msra.mxu0 %v370
        %701 = vmatpush.msra.mxu0 %v366
        %702 = vmatpush.msra.mxu0 %v362
        %703 = vmatpush.msra.mxu0 %v358
        %704 = vmatpush.msra.mxu0 %v354
        %705 = vmatpush.msra.mxu0 %v350
        %706 = vmatpush.msra.mxu0 %v346
        %707 = vmatpush.msra.mxu0 %v342
        %708 = vmatpush.msra.mxu0 %v338
        %709 = vmatpush.msra.mxu0 %v334
        %710 = vmatpush.msra.mxu0 %v330
        %711 = vmatpush.msra.mxu0 %v326
        %712 = vmatpush.msra.mxu0 %v322
        %713 = vmatpush.msra.mxu0 %v318
        %714 = vmatpush.msra.mxu0 %v314
        %715 = vmatmul.f32.gmra.mxu0 %v245
        %v716 = vpop.f32.mrf.mxu0
        %v717 = vadd.f32 %v697, %v716
        %718 = vdwg.mxu0
        %719 = vmatpush.msra.mxu0 %v438
        %720 = vmatpush.msra.mxu0 %v434
        %721 = vmatpush.msra.mxu0 %v430
        %722 = vmatpush.msra.mxu0 %v426
        %723 = vmatpush.msra.mxu0 %v422
        %724 = vmatpush.msra.mxu0 %v418
        %725 = vmatpush.msra.mxu0 %v414
        %726 = vmatpush.msra.mxu0 %v410
        %727 = vmatpush.msra.mxu0 %v406
        %728 = vmatpush.msra.mxu0 %v402
        %729 = vmatpush.msra.mxu0 %v398
        %730 = vmatpush.msra.mxu0 %v394
        %731 = vmatpush.msra.mxu0 %v390
        %732 = vmatpush.msra.mxu0 %v386
        %733 = vmatpush.msra.mxu0 %v382
        %734 = vmatpush.msra.mxu0 %v378
        %735 = vmatmul.f32.gmra.mxu0 %v246
        %v736 = vpop.f32.mrf.mxu0
        %v737 = vadd.f32 %v717, %v736
        %738 = vdwg.mxu0
        %739 = vmatpush.msra.mxu0 %v502
        %740 = vmatpush.msra.mxu0 %v498
        %741 = vmatpush.msra.mxu0 %v494
        %742 = vmatpush.msra.mxu0 %v490
        %743 = vmatpush.msra.mxu0 %v486
        %744 = vmatpush.msra.mxu0 %v482
        %745 = vmatpush.msra.mxu0 %v478
        %746 = vmatpush.msra.mxu0 %v474
        %747 = vmatpush.msra.mxu0 %v470
        %748 = vmatpush.msra.mxu0 %v466
        %749 = vmatpush.msra.mxu0 %v462
        %750 = vmatpush.msra.mxu0 %v458
        %751 = vmatpush.msra.mxu0 %v454
        %752 = vmatpush.msra.mxu0 %v450
        %753 = vmatpush.msra.mxu0 %v446
        %754 = vmatpush.msra.mxu0 %v442
        %755 = vmatmul.f32.gmra.mxu0 %v247
        %v756 = vpop.f32.mrf.mxu0
        %v757 = vadd.f32 %v737, %v756
        %758 = vdwg.mxu0
        %759 = vmatpush.msra.mxu0 %v566
        %760 = vmatpush.msra.mxu0 %v562
        %761 = vmatpush.msra.mxu0 %v558
        %762 = vmatpush.msra.mxu0 %v554
        %763 = vmatpush.msra.mxu0 %v550
        %764 = vmatpush.msra.mxu0 %v546
        %765 = vmatpush.msra.mxu0 %v542
        %766 = vmatpush.msra.mxu0 %v538
        %767 = vmatpush.msra.mxu0 %v534
        %768 = vmatpush.msra.mxu0 %v530
        %769 = vmatpush.msra.mxu0 %v526
        %770 = vmatpush.msra.mxu0 %v522
        %771 = vmatpush.msra.mxu0 %v518
        %772 = vmatpush.msra.mxu0 %v514
        %773 = vmatpush.msra.mxu0 %v510
        %774 = vmatpush.msra.mxu0 %v506
        %775 = vmatmul.f32.gmra.mxu0 %v248
        %v776 = vpop.f32.mrf.mxu0
        %v777 = vadd.f32 %v757, %v776
        %778 = vdwg.mxu0
        %779 = vmatpush.msra.mxu0 %v311
        %780 = vmatpush.msra.mxu0 %v307
        %781 = vmatpush.msra.mxu0 %v303
        %782 = vmatpush.msra.mxu0 %v299
        %783 = vmatpush.msra.mxu0 %v295
        %784 = vmatpush.msra.mxu0 %v291
        %785 = vmatpush.msra.mxu0 %v287
        %786 = vmatpush.msra.mxu0 %v283
        %787 = vmatpush.msra.mxu0 %v279
        %788 = vmatpush.msra.mxu0 %v275
        %789 = vmatpush.msra.mxu0 %v271
        %790 = vmatpush.msra.mxu0 %v267
        %791 = vmatpush.msra.mxu0 %v263
        %792 = vmatpush.msra.mxu0 %v259
        %793 = vmatpush.msra.mxu0 %v255
        %794 = vmatpush.msra.mxu0 %v251
        %795 = vmatmul.f32.gmra.mxu0 %v244
        %v796 = vpop.f32.mrf.mxu0
        %v797 = vadd.f32 %v573, %v796
        %798 = vdwg.mxu0
        %799 = vmatpush.msra.mxu0 %v375
        %800 = vmatpush.msra.mxu0 %v371
        %801 = vmatpush.msra.mxu0 %v367
        %802 = vmatpush.msra.mxu0 %v363
        %803 = vmatpush.msra.mxu0 %v359
        %804 = vmatpush.msra.mxu0 %v355
        %805 = vmatpush.msra.mxu0 %v351
        %806 = vmatpush.msra.mxu0 %v347
        %807 = vmatpush.msra.mxu0 %v343
        %808 = vmatpush.msra.mxu0 %v339
        %809 = vmatpush.msra.mxu0 %v335
        %810 = vmatpush.msra.mxu0 %v331
        %811 = vmatpush.msra.mxu0 %v327
        %812 = vmatpush.msra.mxu0 %v323
        %813 = vmatpush.msra.mxu0 %v319
        %814 = vmatpush.msra.mxu0 %v315
        %815 = vmatmul.f32.gmra.mxu0 %v245
        %v816 = vpop.f32.mrf.mxu0
        %v817 = vadd.f32 %v797, %v816
        %818 = vdwg.mxu0
        %819 = vmatpush.msra.mxu0 %v439
        %820 = vmatpush.msra.mxu0 %v435
        %821 = vmatpush.msra.mxu0 %v431
        %822 = vmatpush.msra.mxu0 %v427
        %823 = vmatpush.msra.mxu0 %v423
        %824 = vmatpush.msra.mxu0 %v419
        %825 = vmatpush.msra.mxu0 %v415
        %826 = vmatpush.msra.mxu0 %v411
        %827 = vmatpush.msra.mxu0 %v407
        %828 = vmatpush.msra.mxu0 %v403
        %829 = vmatpush.msra.mxu0 %v399
        %830 = vmatpush.msra.mxu0 %v395
        %831 = vmatpush.msra.mxu0 %v391
        %832 = vmatpush.msra.mxu0 %v387
        %833 = vmatpush.msra.mxu0 %v383
        %834 = vmatpush.msra.mxu0 %v379
        %835 = vmatmul.f32.gmra.mxu0 %v246
        %v836 = vpop.f32.mrf.mxu0
        %v837 = vadd.f32 %v817, %v836
        %838 = vdwg.mxu0
        %839 = vmatpush.msra.mxu0 %v503
        %840 = vmatpush.msra.mxu0 %v499
        %841 = vmatpush.msra.mxu0 %v495
        %842 = vmatpush.msra.mxu0 %v491
        %843 = vmatpush.msra.mxu0 %v487
        %844 = vmatpush.msra.mxu0 %v483
        %845 = vmatpush.msra.mxu0 %v479
        %846 = vmatpush.msra.mxu0 %v475
        %847 = vmatpush.msra.mxu0 %v471
        %848 = vmatpush.msra.mxu0 %v467
        %849 = vmatpush.msra.mxu0 %v463
        %850 = vmatpush.msra.mxu0 %v459
        %851 = vmatpush.msra.mxu0 %v455
        %852 = vmatpush.msra.mxu0 %v451
        %853 = vmatpush.msra.mxu0 %v447
        %854 = vmatpush.msra.mxu0 %v443
        %855 = vmatmul.f32.gmra.mxu0 %v247
        %v856 = vpop.f32.mrf.mxu0
        %v857 = vadd.f32 %v837, %v856
        %858 = vdwg.mxu0
        %859 = vmatpush.msra.mxu0 %v567
        %860 = vmatpush.msra.mxu0 %v563
        %861 = vmatpush.msra.mxu0 %v559
        %862 = vmatpush.msra.mxu0 %v555
        %863 = vmatpush.msra.mxu0 %v551
        %864 = vmatpush.msra.mxu0 %v547
        %865 = vmatpush.msra.mxu0 %v543
        %866 = vmatpush.msra.mxu0 %v539
        %867 = vmatpush.msra.mxu0 %v535
        %868 = vmatpush.msra.mxu0 %v531
        %869 = vmatpush.msra.mxu0 %v527
        %870 = vmatpush.msra.mxu0 %v523
        %871 = vmatpush.msra.mxu0 %v519
        %872 = vmatpush.msra.mxu0 %v515
        %873 = vmatpush.msra.mxu0 %v511
        %874 = vmatpush.msra.mxu0 %v507
        %875 = vmatmul.f32.gmra.mxu0 %v248
        %v876 = vpop.f32.mrf.mxu0
        %v877 = vadd.f32 %v857, %v876
        %878 = vdwg.mxu0
        %879 = vmatpush.msra.mxu0 %v312
        %880 = vmatpush.msra.mxu0 %v308
        %881 = vmatpush.msra.mxu0 %v304
        %882 = vmatpush.msra.mxu0 %v300
        %883 = vmatpush.msra.mxu0 %v296
        %884 = vmatpush.msra.mxu0 %v292
        %885 = vmatpush.msra.mxu0 %v288
        %886 = vmatpush.msra.mxu0 %v284
        %887 = vmatpush.msra.mxu0 %v280
        %888 = vmatpush.msra.mxu0 %v276
        %889 = vmatpush.msra.mxu0 %v272
        %890 = vmatpush.msra.mxu0 %v268
        %891 = vmatpush.msra.mxu0 %v264
        %892 = vmatpush.msra.mxu0 %v260
        %893 = vmatpush.msra.mxu0 %v256
        %894 = vmatpush.msra.mxu0 %v252
        %895 = vmatmul.f32.gmra.mxu0 %v244
        %v896 = vpop.f32.mrf.mxu0
        %v897 = vadd.f32 %v574, %v896
        %898 = vdwg.mxu0
        %899 = vmatpush.msra.mxu0 %v376
        %900 = vmatpush.msra.mxu0 %v372
        %901 = vmatpush.msra.mxu0 %v368
        %902 = vmatpush.msra.mxu0 %v364
        %903 = vmatpush.msra.mxu0 %v360
        %904 = vmatpush.msra.mxu0 %v356
        %905 = vmatpush.msra.mxu0 %v352
        %906 = vmatpush.msra.mxu0 %v348
        %907 = vmatpush.msra.mxu0 %v344
        %908 = vmatpush.msra.mxu0 %v340
        %909 = vmatpush.msra.mxu0 %v336
        %910 = vmatpush.msra.mxu0 %v332
        %911 = vmatpush.msra.mxu0 %v328
        %912 = vmatpush.msra.mxu0 %v324
        %913 = vmatpush.msra.mxu0 %v320
        %914 = vmatpush.msra.mxu0 %v316
        %915 = vmatmul.f32.gmra.mxu0 %v245
        %v916 = vpop.f32.mrf.mxu0
        %v917 = vadd.f32 %v897, %v916
        %918 = vdwg.mxu0
        %919 = vmatpush.msra.mxu0 %v440
        %920 = vmatpush.msra.mxu0 %v436
        %921 = vmatpush.msra.mxu0 %v432
        %922 = vmatpush.msra.mxu0 %v428
        %923 = vmatpush.msra.mxu0 %v424
        %924 = vmatpush.msra.mxu0 %v420
        %925 = vmatpush.msra.mxu0 %v416
        %926 = vmatpush.msra.mxu0 %v412
        %927 = vmatpush.msra.mxu0 %v408
        %928 = vmatpush.msra.mxu0 %v404
        %929 = vmatpush.msra.mxu0 %v400
        %930 = vmatpush.msra.mxu0 %v396
        %931 = vmatpush.msra.mxu0 %v392
        %932 = vmatpush.msra.mxu0 %v388
        %933 = vmatpush.msra.mxu0 %v384
        %934 = vmatpush.msra.mxu0 %v380
        %935 = vmatmul.f32.gmra.mxu0 %v246
        %v936 = vpop.f32.mrf.mxu0
        %v937 = vadd.f32 %v917, %v936
        %938 = vdwg.mxu0
        %939 = vmatpush.msra.mxu0 %v504
        %940 = vmatpush.msra.mxu0 %v500
        %941 = vmatpush.msra.mxu0 %v496
        %942 = vmatpush.msra.mxu0 %v492
        %943 = vmatpush.msra.mxu0 %v488
        %944 = vmatpush.msra.mxu0 %v484
        %945 = vmatpush.msra.mxu0 %v480
        %946 = vmatpush.msra.mxu0 %v476
        %947 = vmatpush.msra.mxu0 %v472
        %948 = vmatpush.msra.mxu0 %v468
        %949 = vmatpush.msra.mxu0 %v464
        %950 = vmatpush.msra.mxu0 %v460
        %951 = vmatpush.msra.mxu0 %v456
        %952 = vmatpush.msra.mxu0 %v452
        %953 = vmatpush.msra.mxu0 %v448
        %954 = vmatpush.msra.mxu0 %v444
        %955 = vmatmul.f32.gmra.mxu0 %v247
        %v956 = vpop.f32.mrf.mxu0
        %v957 = vadd.f32 %v937, %v956
        %958 = vdwg.mxu0
        %959 = vmatpush.msra.mxu0 %v568
        %960 = vmatpush.msra.mxu0 %v564
        %961 = vmatpush.msra.mxu0 %v560
        %962 = vmatpush.msra.mxu0 %v556
        %963 = vmatpush.msra.mxu0 %v552
        %964 = vmatpush.msra.mxu0 %v548
        %965 = vmatpush.msra.mxu0 %v544
        %966 = vmatpush.msra.mxu0 %v540
        %967 = vmatpush.msra.mxu0 %v536
        %968 = vmatpush.msra.mxu0 %v532
        %969 = vmatpush.msra.mxu0 %v528
        %970 = vmatpush.msra.mxu0 %v524
        %971 = vmatpush.msra.mxu0 %v520
        %972 = vmatpush.msra.mxu0 %v516
        %973 = vmatpush.msra.mxu0 %v512
        %974 = vmatpush.msra.mxu0 %v508
        %975 = vmatmul.f32.gmra.mxu0 %v248
        %v976 = vpop.f32.mrf.mxu0
        %v977 = vadd.f32 %v957, %v976
        %978 = vdwg.mxu0
        %979 = vst [vmem:[#allocation2] sm:$0xff] %v677
        %980 = vst [vmem:[#allocation2 + $0x8] sm:$0xff] %v777
        %981 = vst [vmem:[#allocation2 + $0x10] sm:$0xff] %v877
        %982 = vst [vmem:[#allocation2 + $0x18] sm:$0xff] %v977
        %v983 = vld [vmem:[#allocation2] ss:$8 sm:$0xf]
        %v984 = vld [vmem:[#allocation6] sm:$0xff]
        %v985 = vld [vmem:[#allocation6 + $0x8] sm:$0xff]
        %v986 = vld [vmem:[#allocation6 + $0x10] sm:$0xff]
        %v987 = vld [vmem:[#allocation6 + $0x18] sm:$0xff]
        %v988 = vld [vmem:[#allocation6 + $0x28] sm:$0xff]
        %v989 = vld [vmem:[#allocation6 + $0x30] sm:$0xff]
        %v990 = vld [vmem:[#allocation6 + $0x38] sm:$0xff]
        %v991 = vld [vmem:[#allocation6 + $0x40] sm:$0xff]
        %v992 = vld [vmem:[#allocation6 + $0x50] sm:$0xff]
        %v993 = vld [vmem:[#allocation6 + $0x58] sm:$0xff]
        %v994 = vld [vmem:[#allocation6 + $0x60] sm:$0xff]
        %v995 = vld [vmem:[#allocation6 + $0x68] sm:$0xff]
        %v996 = vld [vmem:[#allocation6 + $0x78] sm:$0xff]
        %v997 = vld [vmem:[#allocation6 + $0x80] sm:$0xff]
        %v998 = vld [vmem:[#allocation6 + $0x88] sm:$0xff]
        %v999 = vld [vmem:[#allocation6 + $0x90] sm:$0xff]
        %v1000 = vld [vmem:[#allocation6 + $0xa0] sm:$0xff]
        %v1001 = vld [vmem:[#allocation6 + $0xa8] sm:$0xff]
        %v1002 = vld [vmem:[#allocation6 + $0xb0] sm:$0xff]
        %v1003 = vld [vmem:[#allocation6 + $0xb8] sm:$0xff]
        %v1004 = vld [vmem:[#allocation6 + $0xc8] sm:$0xff]
        %v1005 = vld [vmem:[#allocation6 + $0xd0] sm:$0xff]
        %v1006 = vld [vmem:[#allocation6 + $0xd8] sm:$0xff]
        %v1007 = vld [vmem:[#allocation6 + $0xe0] sm:$0xff]
        %v1008 = vld [vmem:[#allocation6 + $0xf0] sm:$0xff]
        %v1009 = vld [vmem:[#allocation6 + $0xf8] sm:$0xff]
        %v1010 = vld [vmem:[#allocation6 + $0x100] sm:$0xff]
        %v1011 = vld [vmem:[#allocation6 + $0x108] sm:$0xff]
        %v1012 = vld [vmem:[#allocation6 + $0x118] sm:$0xff]
        %v1013 = vld [vmem:[#allocation6 + $0x120] sm:$0xff]
        %v1014 = vld [vmem:[#allocation6 + $0x128] sm:$0xff]
        %v1015 = vld [vmem:[#allocation6 + $0x130] sm:$0xff]
        %v1016 = vld [vmem:[#allocation6 + $0x140] sm:$0xff]
        %v1017 = vld [vmem:[#allocation6 + $0x148] sm:$0xff]
        %v1018 = vld [vmem:[#allocation6 + $0x150] sm:$0xff]
        %v1019 = vld [vmem:[#allocation6 + $0x158] sm:$0xff]
        %v1020 = vld [vmem:[#allocation6 + $0x168] sm:$0xff]
        %v1021 = vld [vmem:[#allocation6 + $0x170] sm:$0xff]
        %v1022 = vld [vmem:[#allocation6 + $0x178] sm:$0xff]
        %v1023 = vld [vmem:[#allocation6 + $0x180] sm:$0xff]
        %v1024 = vld [vmem:[#allocation6 + $0x190] sm:$0xff]
        %v1025 = vld [vmem:[#allocation6 + $0x198] sm:$0xff]
        %v1026 = vld [vmem:[#allocation6 + $0x1a0] sm:$0xff]
        %v1027 = vld [vmem:[#allocation6 + $0x1a8] sm:$0xff]
        %v1028 = vld [vmem:[#allocation6 + $0x1b8] sm:$0xff]
        %v1029 = vld [vmem:[#allocation6 + $0x1c0] sm:$0xff]
        %v1030 = vld [vmem:[#allocation6 + $0x1c8] sm:$0xff]
        %v1031 = vld [vmem:[#allocation6 + $0x1d0] sm:$0xff]
        %v1032 = vld [vmem:[#allocation6 + $0x1e0] sm:$0xff]
        %v1033 = vld [vmem:[#allocation6 + $0x1e8] sm:$0xff]
        %v1034 = vld [vmem:[#allocation6 + $0x1f0] sm:$0xff]
        %v1035 = vld [vmem:[#allocation6 + $0x1f8] sm:$0xff]
        %v1036 = vld [vmem:[#allocation6 + $0x208] sm:$0xff]
        %v1037 = vld [vmem:[#allocation6 + $0x210] sm:$0xff]
        %v1038 = vld [vmem:[#allocation6 + $0x218] sm:$0xff]
        %v1039 = vld [vmem:[#allocation6 + $0x220] sm:$0xff]
        %v1040 = vld [vmem:[#allocation6 + $0x230] sm:$0xff]
        %v1041 = vld [vmem:[#allocation6 + $0x238] sm:$0xff]
        %v1042 = vld [vmem:[#allocation6 + $0x240] sm:$0xff]
        %v1043 = vld [vmem:[#allocation6 + $0x248] sm:$0xff]
        %v1044 = vld [vmem:[#allocation6 + $0x258] sm:$0xff]
        %v1045 = vld [vmem:[#allocation6 + $0x260] sm:$0xff]
        %v1046 = vld [vmem:[#allocation6 + $0x268] sm:$0xff]
        %v1047 = vld [vmem:[#allocation6 + $0x270] sm:$0xff]
        %1048 = vmatpush.msra.mxu0 %v1044
        %1049 = vmatpush.msra.mxu0 %v1040
        %1050 = vmatpush.msra.mxu0 %v1036
        %1051 = vmatpush.msra.mxu0 %v1032
        %1052 = vmatpush.msra.mxu0 %v1028
        %1053 = vmatpush.msra.mxu0 %v1024
        %1054 = vmatpush.msra.mxu0 %v1020
        %1055 = vmatpush.msra.mxu0 %v1016
        %1056 = vmatpush.msra.mxu0 %v1012
        %1057 = vmatpush.msra.mxu0 %v1008
        %1058 = vmatpush.msra.mxu0 %v1004
        %1059 = vmatpush.msra.mxu0 %v1000
        %1060 = vmatpush.msra.mxu0 %v996
        %1061 = vmatpush.msra.mxu0 %v992
        %1062 = vmatpush.msra.mxu0 %v988
        %1063 = vmatpush.msra.mxu0 %v984
        %1064 = vmatmul.f32.gmra.mxu0 0.0
        %v1065 = vpop.f32.mrf.mxu0
        %v1066 = vadd.f32 0.0, %v1065
        %1067 = vdwg.mxu0
        %1068 = vmatpush.msra.mxu0 %v1045
        %1069 = vmatpush.msra.mxu0 %v1041
        %1070 = vmatpush.msra.mxu0 %v1037
        %1071 = vmatpush.msra.mxu0 %v1033
        %1072 = vmatpush.msra.mxu0 %v1029
        %1073 = vmatpush.msra.mxu0 %v1025
        %1074 = vmatpush.msra.mxu0 %v1021
        %1075 = vmatpush.msra.mxu0 %v1017
        %1076 = vmatpush.msra.mxu0 %v1013
        %1077 = vmatpush.msra.mxu0 %v1009
        %1078 = vmatpush.msra.mxu0 %v1005
        %1079 = vmatpush.msra.mxu0 %v1001
        %1080 = vmatpush.msra.mxu0 %v997
        %1081 = vmatpush.msra.mxu0 %v993
        %1082 = vmatpush.msra.mxu0 %v989
        %1083 = vmatpush.msra.mxu0 %v985
        %1084 = vmatmul.f32.gmra.mxu0 0.0
        %v1085 = vpop.f32.mrf.mxu0
        %v1086 = vadd.f32 0.0, %v1085
        %1087 = vdwg.mxu0
        %1088 = vmatpush.msra.mxu0 %v1046
        %1089 = vmatpush.msra.mxu0 %v1042
        %1090 = vmatpush.msra.mxu0 %v1038
        %1091 = vmatpush.msra.mxu0 %v1034
        %1092 = vmatpush.msra.mxu0 %v1030
        %1093 = vmatpush.msra.mxu0 %v1026
        %1094 = vmatpush.msra.mxu0 %v1022
        %1095 = vmatpush.msra.mxu0 %v1018
        %1096 = vmatpush.msra.mxu0 %v1014
        %1097 = vmatpush.msra.mxu0 %v1010
        %1098 = vmatpush.msra.mxu0 %v1006
        %1099 = vmatpush.msra.mxu0 %v1002
        %1100 = vmatpush.msra.mxu0 %v998
        %1101 = vmatpush.msra.mxu0 %v994
        %1102 = vmatpush.msra.mxu0 %v990
        %1103 = vmatpush.msra.mxu0 %v986
        %1104 = vmatmul.f32.gmra.mxu0 0.0
        %v1105 = vpop.f32.mrf.mxu0
        %v1106 = vadd.f32 0.0, %v1105
        %1107 = vdwg.mxu0
        %1108 = vmatpush.msra.mxu0 %v1047
        %1109 = vmatpush.msra.mxu0 %v1043
        %1110 = vmatpush.msra.mxu0 %v1039
        %1111 = vmatpush.msra.mxu0 %v1035
        %1112 = vmatpush.msra.mxu0 %v1031
        %1113 = vmatpush.msra.mxu0 %v1027
        %1114 = vmatpush.msra.mxu0 %v1023
        %1115 = vmatpush.msra.mxu0 %v1019
        %1116 = vmatpush.msra.mxu0 %v1015
        %1117 = vmatpush.msra.mxu0 %v1011
        %1118 = vmatpush.msra.mxu0 %v1007
        %1119 = vmatpush.msra.mxu0 %v1003
        %1120 = vmatpush.msra.mxu0 %v999
        %1121 = vmatpush.msra.mxu0 %v995
        %1122 = vmatpush.msra.mxu0 %v991
        %1123 = vmatpush.msra.mxu0 %v987
        %1124 = vmatmul.f32.gmra.mxu0 0.0
        %v1125 = vpop.f32.mrf.mxu0
        %v1126 = vadd.f32 0.0, %v1125
        %1127 = vdwg.mxu0
        %v1132 = vrot.slane %v1086, 7
        %v1133 = vrot.slane %v1106, 6
        %v1134 = vrot.slane %v1126, 5
        %vm1135 = vcmask 1040384
        %v1136 = vsel %vm1135, %v1066, %v1132
        %vm1137 = vcmask 1042434
        %v1138 = vsel %vm1137, %v1133, %v1134
        %vm1139 = vcmask 1041408
        %v1140 = vsel %vm1139, %v1136, %v1138
        %v1142 = vadd.f32 %v983, %v1140
        %v1143 = vmul.f32 %v1142, 0.5
        %v1144 = vtanh.pop %v1143
        %v1145 = vmul.f32 %v1144, 0.5
        %v1146 = vadd.f32 %v1145, 0.5
        %v1148 = vrot.slane %v1142, 3
        %v1150 = vtanh.pop %v1148
        %v1152 = vrot.slane %v1146, 1
        %v1154 = vmul.f32 %v1152, 0.0
        %v1155 = vmul.f32 %v1146, %v1150
        %v1156 = vadd.f32 %v1154, %v1155
        %v1157 = vtanh.pop %v1156
        %v1158 = vrot.slane %v1146, 2
        %v1160 = vmul.f32 %v1158, %v1157
        %1161 = vst [vmem:[#allocation3] sm:$0x1] %v1160
        %s1162 = scalar_lea.vmem [#allocation2], 1
        %v1163 = vld [vmem:[%s1162] ss:$8 sm:$0xf]
        %v1164 = vld [vmem:[#allocation6] sm:$0xff]
        %v1165 = vld [vmem:[#allocation6 + $0x8] sm:$0xff]
        %v1166 = vld [vmem:[#allocation6 + $0x10] sm:$0xff]
        %v1167 = vld [vmem:[#allocation6 + $0x18] sm:$0xff]
        %v1168 = vld [vmem:[#allocation6 + $0x28] sm:$0xff]
        %v1169 = vld [vmem:[#allocation6 + $0x30] sm:$0xff]
        %v1170 = vld [vmem:[#allocation6 + $0x38] sm:$0xff]
        %v1171 = vld [vmem:[#allocation6 + $0x40] sm:$0xff]
        %v1172 = vld [vmem:[#allocation6 + $0x50] sm:$0xff]
        %v1173 = vld [vmem:[#allocation6 + $0x58] sm:$0xff]
        %v1174 = vld [vmem:[#allocation6 + $0x60] sm:$0xff]
        %v1175 = vld [vmem:[#allocation6 + $0x68] sm:$0xff]
        %v1176 = vld [vmem:[#allocation6 + $0x78] sm:$0xff]
        %v1177 = vld [vmem:[#allocation6 + $0x80] sm:$0xff]
        %v1178 = vld [vmem:[#allocation6 + $0x88] sm:$0xff]
        %v1179 = vld [vmem:[#allocation6 + $0x90] sm:$0xff]
        %v1180 = vld [vmem:[#allocation6 + $0xa0] sm:$0xff]
        %v1181 = vld [vmem:[#allocation6 + $0xa8] sm:$0xff]
        %v1182 = vld [vmem:[#allocation6 + $0xb0] sm:$0xff]
        %v1183 = vld [vmem:[#allocation6 + $0xb8] sm:$0xff]
        %v1184 = vld [vmem:[#allocation6 + $0xc8] sm:$0xff]
        %v1185 = vld [vmem:[#allocation6 + $0xd0] sm:$0xff]
        %v1186 = vld [vmem:[#allocation6 + $0xd8] sm:$0xff]
        %v1187 = vld [vmem:[#allocation6 + $0xe0] sm:$0xff]
        %v1188 = vld [vmem:[#allocation6 + $0xf0] sm:$0xff]
        %v1189 = vld [vmem:[#allocation6 + $0xf8] sm:$0xff]
        %v1190 = vld [vmem:[#allocation6 + $0x100] sm:$0xff]
        %v1191 = vld [vmem:[#allocation6 + $0x108] sm:$0xff]
        %v1192 = vld [vmem:[#allocation6 + $0x118] sm:$0xff]
        %v1193 = vld [vmem:[#allocation6 + $0x120] sm:$0xff]
        %v1194 = vld [vmem:[#allocation6 + $0x128] sm:$0xff]
        %v1195 = vld [vmem:[#allocation6 + $0x130] sm:$0xff]
        %v1196 = vld [vmem:[#allocation6 + $0x140] sm:$0xff]
        %v1197 = vld [vmem:[#allocation6 + $0x148] sm:$0xff]
        %v1198 = vld [vmem:[#allocation6 + $0x150] sm:$0xff]
        %v1199 = vld [vmem:[#allocation6 + $0x158] sm:$0xff]
        %v1200 = vld [vmem:[#allocation6 + $0x168] sm:$0xff]
        %v1201 = vld [vmem:[#allocation6 + $0x170] sm:$0xff]
        %v1202 = vld [vmem:[#allocation6 + $0x178] sm:$0xff]
        %v1203 = vld [vmem:[#allocation6 + $0x180] sm:$0xff]
        %v1204 = vld [vmem:[#allocation6 + $0x190] sm:$0xff]
        %v1205 = vld [vmem:[#allocation6 + $0x198] sm:$0xff]
        %v1206 = vld [vmem:[#allocation6 + $0x1a0] sm:$0xff]
        %v1207 = vld [vmem:[#allocation6 + $0x1a8] sm:$0xff]
        %v1208 = vld [vmem:[#allocation6 + $0x1b8] sm:$0xff]
        %v1209 = vld [vmem:[#allocation6 + $0x1c0] sm:$0xff]
        %v1210 = vld [vmem:[#allocation6 + $0x1c8] sm:$0xff]
        %v1211 = vld [vmem:[#allocation6 + $0x1d0] sm:$0xff]
        %v1212 = vld [vmem:[#allocation6 + $0x1e0] sm:$0xff]
        %v1213 = vld [vmem:[#allocation6 + $0x1e8] sm:$0xff]
        %v1214 = vld [vmem:[#allocation6 + $0x1f0] sm:$0xff]
        %v1215 = vld [vmem:[#allocation6 + $0x1f8] sm:$0xff]
        %v1216 = vld [vmem:[#allocation6 + $0x208] sm:$0xff]
        %v1217 = vld [vmem:[#allocation6 + $0x210] sm:$0xff]
        %v1218 = vld [vmem:[#allocation6 + $0x218] sm:$0xff]
        %v1219 = vld [vmem:[#allocation6 + $0x220] sm:$0xff]
        %v1220 = vld [vmem:[#allocation6 + $0x230] sm:$0xff]
        %v1221 = vld [vmem:[#allocation6 + $0x238] sm:$0xff]
        %v1222 = vld [vmem:[#allocation6 + $0x240] sm:$0xff]
        %v1223 = vld [vmem:[#allocation6 + $0x248] sm:$0xff]
        %v1224 = vld [vmem:[#allocation6 + $0x258] sm:$0xff]
        %v1225 = vld [vmem:[#allocation6 + $0x260] sm:$0xff]
        %v1226 = vld [vmem:[#allocation6 + $0x268] sm:$0xff]
        %v1227 = vld [vmem:[#allocation6 + $0x270] sm:$0xff]
        %1228 = vmatpush.msra.mxu0 %v1224
        %1229 = vmatpush.msra.mxu0 %v1220
        %1230 = vmatpush.msra.mxu0 %v1216
        %1231 = vmatpush.msra.mxu0 %v1212
        %1232 = vmatpush.msra.mxu0 %v1208
        %1233 = vmatpush.msra.mxu0 %v1204
        %1234 = vmatpush.msra.mxu0 %v1200
        %1235 = vmatpush.msra.mxu0 %v1196
        %1236 = vmatpush.msra.mxu0 %v1192
        %1237 = vmatpush.msra.mxu0 %v1188
        %1238 = vmatpush.msra.mxu0 %v1184
        %1239 = vmatpush.msra.mxu0 %v1180
        %1240 = vmatpush.msra.mxu0 %v1176
        %1241 = vmatpush.msra.mxu0 %v1172
        %1242 = vmatpush.msra.mxu0 %v1168
        %1243 = vmatpush.msra.mxu0 %v1164
        %1244 = vmatmul.f32.gmra.mxu0 %v1160
        %v1245 = vpop.f32.mrf.mxu0
        %v1246 = vadd.f32 0.0, %v1245
        %1247 = vdwg.mxu0
        %1248 = vmatpush.msra.mxu0 %v1225
        %1249 = vmatpush.msra.mxu0 %v1221
        %1250 = vmatpush.msra.mxu0 %v1217
        %1251 = vmatpush.msra.mxu0 %v1213
        %1252 = vmatpush.msra.mxu0 %v1209
        %1253 = vmatpush.msra.mxu0 %v1205
        %1254 = vmatpush.msra.mxu0 %v1201
        %1255 = vmatpush.msra.mxu0 %v1197
        %1256 = vmatpush.msra.mxu0 %v1193
        %1257 = vmatpush.msra.mxu0 %v1189
        %1258 = vmatpush.msra.mxu0 %v1185
        %1259 = vmatpush.msra.mxu0 %v1181
        %1260 = vmatpush.msra.mxu0 %v1177
        %1261 = vmatpush.msra.mxu0 %v1173
        %1262 = vmatpush.msra.mxu0 %v1169
        %1263 = vmatpush.msra.mxu0 %v1165
        %1264 = vmatmul.f32.gmra.mxu0 %v1160
        %v1265 = vpop.f32.mrf.mxu0
        %v1266 = vadd.f32 0.0, %v1265
        %1267 = vdwg.mxu0
        %1268 = vmatpush.msra.mxu0 %v1226
        %1269 = vmatpush.msra.mxu0 %v1222
        %1270 = vmatpush.msra.mxu0 %v1218
        %1271 = vmatpush.msra.mxu0 %v1214
        %1272 = vmatpush.msra.mxu0 %v1210
        %1273 = vmatpush.msra.mxu0 %v1206
        %1274 = vmatpush.msra.mxu0 %v1202
        %1275 = vmatpush.msra.mxu0 %v1198
        %1276 = vmatpush.msra.mxu0 %v1194
        %1277 = vmatpush.msra.mxu0 %v1190
        %1278 = vmatpush.msra.mxu0 %v1186
        %1279 = vmatpush.msra.mxu0 %v1182
        %1280 = vmatpush.msra.mxu0 %v1178
        %1281 = vmatpush.msra.mxu0 %v1174
        %1282 = vmatpush.msra.mxu0 %v1170
        %1283 = vmatpush.msra.mxu0 %v1166
        %1284 = vmatmul.f32.gmra.mxu0 %v1160
        %v1285 = vpop.f32.mrf.mxu0
        %v1286 = vadd.f32 0.0, %v1285
        %1287 = vdwg.mxu0
        %1288 = vmatpush.msra.mxu0 %v1227
        %1289 = vmatpush.msra.mxu0 %v1223
        %1290 = vmatpush.msra.mxu0 %v1219
        %1291 = vmatpush.msra.mxu0 %v1215
        %1292 = vmatpush.msra.mxu0 %v1211
        %1293 = vmatpush.msra.mxu0 %v1207
        %1294 = vmatpush.msra.mxu0 %v1203
        %1295 = vmatpush.msra.mxu0 %v1199
        %1296 = vmatpush.msra.mxu0 %v1195
        %1297 = vmatpush.msra.mxu0 %v1191
        %1298 = vmatpush.msra.mxu0 %v1187
        %1299 = vmatpush.msra.mxu0 %v1183
        %1300 = vmatpush.msra.mxu0 %v1179
        %1301 = vmatpush.msra.mxu0 %v1175
        %1302 = vmatpush.msra.mxu0 %v1171
        %1303 = vmatpush.msra.mxu0 %v1167
        %1304 = vmatmul.f32.gmra.mxu0 %v1160
        %v1305 = vpop.f32.mrf.mxu0
        %v1306 = vadd.f32 0.0, %v1305
        %1307 = vdwg.mxu0
        %v1312 = vrot.slane %v1266, 7
        %v1313 = vrot.slane %v1286, 6
        %v1314 = vrot.slane %v1306, 5
        %v1315 = vsel %vm1135, %v1246, %v1312
        %v1316 = vsel %vm1137, %v1313, %v1314
        %v1317 = vsel %vm1139, %v1315, %v1316
        %v1319 = vadd.f32 %v1163, %v1317
        %v1320 = vmul.f32 %v1319, 0.5
        %v1321 = vtanh.pop %v1320
        %v1322 = vmul.f32 %v1321, 0.5
        %v1323 = vadd.f32 %v1322, 0.5
        %v1325 = vrot.slane %v1319, 3
        %v1327 = vtanh.pop %v1325
        %v1329 = vrot.slane %v1323, 1
        %v1331 = vmul.f32 %v1329, %v1156
        %v1332 = vmul.f32 %v1323, %v1327
        %v1333 = vadd.f32 %v1331, %v1332
        %v1334 = vtanh.pop %v1333
        %v1335 = vrot.slane %v1323, 2
        %v1337 = vmul.f32 %v1335, %v1334
        %1338 = vst [vmem:[#allocation3 + $0x1] sm:$0x1] %v1337
        %s1339 = scalar_lea.vmem [#allocation2], 2
        %v1340 = vld [vmem:[%s1339] ss:$8 sm:$0xf]
        %v1341 = vld [vmem:[#allocation6] sm:$0xff]
        %v1342 = vld [vmem:[#allocation6 + $0x8] sm:$0xff]
        %v1343 = vld [vmem:[#allocation6 + $0x10] sm:$0xff]
        %v1344 = vld [vmem:[#allocation6 + $0x18] sm:$0xff]
        %v1345 = vld [vmem:[#allocation6 + $0x28] sm:$0xff]
        %v1346 = vld [vmem:[#allocation6 + $0x30] sm:$0xff]
        %v1347 = vld [vmem:[#allocation6 + $0x38] sm:$0xff]
        %v1348 = vld [vmem:[#allocation6 + $0x40] sm:$0xff]
        %v1349 = vld [vmem:[#allocation6 + $0x50] sm:$0xff]
        %v1350 = vld [vmem:[#allocation6 + $0x58] sm:$0xff]
        %v1351 = vld [vmem:[#allocation6 + $0x60] sm:$0xff]
        %v1352 = vld [vmem:[#allocation6 + $0x68] sm:$0xff]
        %v1353 = vld [vmem:[#allocation6 + $0x78] sm:$0xff]
        %v1354 = vld [vmem:[#allocation6 + $0x80] sm:$0xff]
        %v1355 = vld [vmem:[#allocation6 + $0x88] sm:$0xff]
        %v1356 = vld [vmem:[#allocation6 + $0x90] sm:$0xff]
        %v1357 = vld [vmem:[#allocation6 + $0xa0] sm:$0xff]
        %v1358 = vld [vmem:[#allocation6 + $0xa8] sm:$0xff]
        %v1359 = vld [vmem:[#allocation6 + $0xb0] sm:$0xff]
        %v1360 = vld [vmem:[#allocation6 + $0xb8] sm:$0xff]
        %v1361 = vld [vmem:[#allocation6 + $0xc8] sm:$0xff]
        %v1362 = vld [vmem:[#allocation6 + $0xd0] sm:$0xff]
        %v1363 = vld [vmem:[#allocation6 + $0xd8] sm:$0xff]
        %v1364 = vld [vmem:[#allocation6 + $0xe0] sm:$0xff]
        %v1365 = vld [vmem:[#allocation6 + $0xf0] sm:$0xff]
        %v1366 = vld [vmem:[#allocation6 + $0xf8] sm:$0xff]
        %v1367 = vld [vmem:[#allocation6 + $0x100] sm:$0xff]
        %v1368 = vld [vmem:[#allocation6 + $0x108] sm:$0xff]
        %v1369 = vld [vmem:[#allocation6 + $0x118] sm:$0xff]
        %v1370 = vld [vmem:[#allocation6 + $0x120] sm:$0xff]
        %v1371 = vld [vmem:[#allocation6 + $0x128] sm:$0xff]
        %v1372 = vld [vmem:[#allocation6 + $0x130] sm:$0xff]
        %v1373 = vld [vmem:[#allocation6 + $0x140] sm:$0xff]
        %v1374 = vld [vmem:[#allocation6 + $0x148] sm:$0xff]
        %v1375 = vld [vmem:[#allocation6 + $0x150] sm:$0xff]
        %v1376 = vld [vmem:[#allocation6 + $0x158] sm:$0xff]
        %v1377 = vld [vmem:[#allocation6 + $0x168] sm:$0xff]
        %v1378 = vld [vmem:[#allocation6 + $0x170] sm:$0xff]
        %v1379 = vld [vmem:[#allocation6 + $0x178] sm:$0xff]
        %v1380 = vld [vmem:[#allocation6 + $0x180] sm:$0xff]
        %v1381 = vld [vmem:[#allocation6 + $0x190] sm:$0xff]
        %v1382 = vld [vmem:[#allocation6 + $0x198] sm:$0xff]
        %v1383 = vld [vmem:[#allocation6 + $0x1a0] sm:$0xff]
        %v1384 = vld [vmem:[#allocation6 + $0x1a8] sm:$0xff]
        %v1385 = vld [vmem:[#allocation6 + $0x1b8] sm:$0xff]
        %v1386 = vld [vmem:[#allocation6 + $0x1c0] sm:$0xff]
        %v1387 = vld [vmem:[#allocation6 + $0x1c8] sm:$0xff]
        %v1388 = vld [vmem:[#allocation6 + $0x1d0] sm:$0xff]
        %v1389 = vld [vmem:[#allocation6 + $0x1e0] sm:$0xff]
        %v1390 = vld [vmem:[#allocation6 + $0x1e8] sm:$0xff]
        %v1391 = vld [vmem:[#allocation6 + $0x1f0] sm:$0xff]
        %v1392 = vld [vmem:[#allocation6 + $0x1f8] sm:$0xff]
        %v1393 = vld [vmem:[#allocation6 + $0x208] sm:$0xff]
        %v1394 = vld [vmem:[#allocation6 + $0x210] sm:$0xff]
        %v1395 = vld [vmem:[#allocation6 + $0x218] sm:$0xff]
        %v1396 = vld [vmem:[#allocation6 + $0x220] sm:$0xff]
        %v1397 = vld [vmem:[#allocation6 + $0x230] sm:$0xff]
        %v1398 = vld [vmem:[#allocation6 + $0x238] sm:$0xff]
        %v1399 = vld [vmem:[#allocation6 + $0x240] sm:$0xff]
        %v1400 = vld [vmem:[#allocation6 + $0x248] sm:$0xff]
        %v1401 = vld [vmem:[#allocation6 + $0x258] sm:$0xff]
        %v1402 = vld [vmem:[#allocation6 + $0x260] sm:$0xff]
        %v1403 = vld [vmem:[#allocation6 + $0x268] sm:$0xff]
        %v1404 = vld [vmem:[#allocation6 + $0x270] sm:$0xff]
        %1405 = vmatpush.msra.mxu0 %v1401
        %1406 = vmatpush.msra.mxu0 %v1397
        %1407 = vmatpush.msra.mxu0 %v1393
        %1408 = vmatpush.msra.mxu0 %v1389
        %1409 = vmatpush.msra.mxu0 %v1385
        %1410 = vmatpush.msra.mxu0 %v1381
        %1411 = vmatpush.msra.mxu0 %v1377
        %1412 = vmatpush.msra.mxu0 %v1373
        %1413 = vmatpush.msra.mxu0 %v1369
        %1414 = vmatpush.msra.mxu0 %v1365
        %1415 = vmatpush.msra.mxu0 %v1361
        %1416 = vmatpush.msra.mxu0 %v1357
        %1417 = vmatpush.msra.mxu0 %v1353
        %1418 = vmatpush.msra.mxu0 %v1349
        %1419 = vmatpush.msra.mxu0 %v1345
        %1420 = vmatpush.msra.mxu0 %v1341
        %1421 = vmatmul.f32.gmra.mxu0 %v1337
        %v1422 = vpop.f32.mrf.mxu0
        %v1423 = vadd.f32 0.0, %v1422
        %1424 = vdwg.mxu0
        %1425 = vmatpush.msra.mxu0 %v1402
        %1426 = vmatpush.msra.mxu0 %v1398
        %1427 = vmatpush.msra.mxu0 %v1394
        %1428 = vmatpush.msra.mxu0 %v1390
        %1429 = vmatpush.msra.mxu0 %v1386
        %1430 = vmatpush.msra.mxu0 %v1382
        %1431 = vmatpush.msra.mxu0 %v1378
        %1432 = vmatpush.msra.mxu0 %v1374
        %1433 = vmatpush.msra.mxu0 %v1370
        %1434 = vmatpush.msra.mxu0 %v1366
        %1435 = vmatpush.msra.mxu0 %v1362
        %1436 = vmatpush.msra.mxu0 %v1358
        %1437 = vmatpush.msra.mxu0 %v1354
        %1438 = vmatpush.msra.mxu0 %v1350
        %1439 = vmatpush.msra.mxu0 %v1346
        %1440 = vmatpush.msra.mxu0 %v1342
        %1441 = vmatmul.f32.gmra.mxu0 %v1337
        %v1442 = vpop.f32.mrf.mxu0
        %v1443 = vadd.f32 0.0, %v1442
        %1444 = vdwg.mxu0
        %1445 = vmatpush.msra.mxu0 %v1403
        %1446 = vmatpush.msra.mxu0 %v1399
        %1447 = vmatpush.msra.mxu0 %v1395
        %1448 = vmatpush.msra.mxu0 %v1391
        %1449 = vmatpush.msra.mxu0 %v1387
        %1450 = vmatpush.msra.mxu0 %v1383
        %1451 = vmatpush.msra.mxu0 %v1379
        %1452 = vmatpush.msra.mxu0 %v1375
        %1453 = vmatpush.msra.mxu0 %v1371
        %1454 = vmatpush.msra.mxu0 %v1367
        %1455 = vmatpush.msra.mxu0 %v1363
        %1456 = vmatpush.msra.mxu0 %v1359
        %1457 = vmatpush.msra.mxu0 %v1355
        %1458 = vmatpush.msra.mxu0 %v1351
        %1459 = vmatpush.msra.mxu0 %v1347
        %1460 = vmatpush.msra.mxu0 %v1343
        %1461 = vmatmul.f32.gmra.mxu0 %v1337
        %v1462 = vpop.f32.mrf.mxu0
        %v1463 = vadd.f32 0.0, %v1462
        %1464 = vdwg.mxu0
        %1465 = vmatpush.msra.mxu0 %v1404
        %1466 = vmatpush.msra.mxu0 %v1400
        %1467 = vmatpush.msra.mxu0 %v1396
        %1468 = vmatpush.msra.mxu0 %v1392
        %1469 = vmatpush.msra.mxu0 %v1388
        %1470 = vmatpush.msra.mxu0 %v1384
        %1471 = vmatpush.msra.mxu0 %v1380
        %1472 = vmatpush.msra.mxu0 %v1376
        %1473 = vmatpush.msra.mxu0 %v1372
        %1474 = vmatpush.msra.mxu0 %v1368
        %1475 = vmatpush.msra.mxu0 %v1364
        %1476 = vmatpush.msra.mxu0 %v1360
        %1477 = vmatpush.msra.mxu0 %v1356
        %1478 = vmatpush.msra.mxu0 %v1352
        %1479 = vmatpush.msra.mxu0 %v1348
        %1480 = vmatpush.msra.mxu0 %v1344
        %1481 = vmatmul.f32.gmra.mxu0 %v1337
        %v1482 = vpop.f32.mrf.mxu0
        %v1483 = vadd.f32 0.0, %v1482
        %1484 = vdwg.mxu0
        %v1489 = vrot.slane %v1443, 7
        %v1490 = vrot.slane %v1463, 6
        %v1491 = vrot.slane %v1483, 5
        %v1492 = vsel %vm1135, %v1423, %v1489
        %v1493 = vsel %vm1137, %v1490, %v1491
        %v1494 = vsel %vm1139, %v1492, %v1493
        %v1496 = vadd.f32 %v1340, %v1494
        %v1497 = vmul.f32 %v1496, 0.5
        %v1498 = vtanh.pop %v1497
        %v1499 = vmul.f32 %v1498, 0.5
        %v1500 = vadd.f32 %v1499, 0.5
        %v1502 = vrot.slane %v1496, 3
        %v1504 = vtanh.pop %v1502
        %v1506 = vrot.slane %v1500, 1
        %v1508 = vmul.f32 %v1506, %v1333
        %v1509 = vmul.f32 %v1500, %v1504
        %v1510 = vadd.f32 %v1508, %v1509
        %v1511 = vtanh.pop %v1510
        %v1512 = vrot.slane %v1500, 2
        %v1514 = vmul.f32 %v1512, %v1511
        %1515 = vst [vmem:[#allocation3 + $0x2] sm:$0x1] %v1514
        %s1516 = scalar_lea.vmem [#allocation2], 3
        %v1517 = vld [vmem:[%s1516] ss:$8 sm:$0xf]
        %v1518 = vld [vmem:[#allocation6] sm:$0xff]
        %v1519 = vld [vmem:[#allocation6 + $0x8] sm:$0xff]
        %v1520 = vld [vmem:[#allocation6 + $0x10] sm:$0xff]
        %v1521 = vld [vmem:[#allocation6 + $0x18] sm:$0xff]
        %v1522 = vld [vmem:[#allocation6 + $0x28] sm:$0xff]
        %v1523 = vld [vmem:[#allocation6 + $0x30] sm:$0xff]
        %v1524 = vld [vmem:[#allocation6 + $0x38] sm:$0xff]
        %v1525 = vld [vmem:[#allocation6 + $0x40] sm:$0xff]
        %v1526 = vld [vmem:[#allocation6 + $0x50] sm:$0xff]
        %v1527 = vld [vmem:[#allocation6 + $0x58] sm:$0xff]
        %v1528 = vld [vmem:[#allocation6 + $0x60] sm:$0xff]
        %v1529 = vld [vmem:[#allocation6 + $0x68] sm:$0xff]
        %v1530 = vld [vmem:[#allocation6 + $0x78] sm:$0xff]
        %v1531 = vld [vmem:[#allocation6 + $0x80] sm:$0xff]
        %v1532 = vld [vmem:[#allocation6 + $0x88] sm:$0xff]
        %v1533 = vld [vmem:[#allocation6 + $0x90] sm:$0xff]
        %v1534 = vld [vmem:[#allocation6 + $0xa0] sm:$0xff]
        %v1535 = vld [vmem:[#allocation6 + $0xa8] sm:$0xff]
        %v1536 = vld [vmem:[#allocation6 + $0xb0] sm:$0xff]
        %v1537 = vld [vmem:[#allocation6 + $0xb8] sm:$0xff]
        %v1538 = vld [vmem:[#allocation6 + $0xc8] sm:$0xff]
        %v1539 = vld [vmem:[#allocation6 + $0xd0] sm:$0xff]
        %v1540 = vld [vmem:[#allocation6 + $0xd8] sm:$0xff]
        %v1541 = vld [vmem:[#allocation6 + $0xe0] sm:$0xff]
        %v1542 = vld [vmem:[#allocation6 + $0xf0] sm:$0xff]
        %v1543 = vld [vmem:[#allocation6 + $0xf8] sm:$0xff]
        %v1544 = vld [vmem:[#allocation6 + $0x100] sm:$0xff]
        %v1545 = vld [vmem:[#allocation6 + $0x108] sm:$0xff]
        %v1546 = vld [vmem:[#allocation6 + $0x118] sm:$0xff]
        %v1547 = vld [vmem:[#allocation6 + $0x120] sm:$0xff]
        %v1548 = vld [vmem:[#allocation6 + $0x128] sm:$0xff]
        %v1549 = vld [vmem:[#allocation6 + $0x130] sm:$0xff]
        %v1550 = vld [vmem:[#allocation6 + $0x140] sm:$0xff]
        %v1551 = vld [vmem:[#allocation6 + $0x148] sm:$0xff]
        %v1552 = vld [vmem:[#allocation6 + $0x150] sm:$0xff]
        %v1553 = vld [vmem:[#allocation6 + $0x158] sm:$0xff]
        %v1554 = vld [vmem:[#allocation6 + $0x168] sm:$0xff]
        %v1555 = vld [vmem:[#allocation6 + $0x170] sm:$0xff]
        %v1556 = vld [vmem:[#allocation6 + $0x178] sm:$0xff]
        %v1557 = vld [vmem:[#allocation6 + $0x180] sm:$0xff]
        %v1558 = vld [vmem:[#allocation6 + $0x190] sm:$0xff]
        %v1559 = vld [vmem:[#allocation6 + $0x198] sm:$0xff]
        %v1560 = vld [vmem:[#allocation6 + $0x1a0] sm:$0xff]
        %v1561 = vld [vmem:[#allocation6 + $0x1a8] sm:$0xff]
        %v1562 = vld [vmem:[#allocation6 + $0x1b8] sm:$0xff]
        %v1563 = vld [vmem:[#allocation6 + $0x1c0] sm:$0xff]
        %v1564 = vld [vmem:[#allocation6 + $0x1c8] sm:$0xff]
        %v1565 = vld [vmem:[#allocation6 + $0x1d0] sm:$0xff]
        %v1566 = vld [vmem:[#allocation6 + $0x1e0] sm:$0xff]
        %v1567 = vld [vmem:[#allocation6 + $0x1e8] sm:$0xff]
        %v1568 = vld [vmem:[#allocation6 + $0x1f0] sm:$0xff]
        %v1569 = vld [vmem:[#allocation6 + $0x1f8] sm:$0xff]
        %v1570 = vld [vmem:[#allocation6 + $0x208] sm:$0xff]
        %v1571 = vld [vmem:[#allocation6 + $0x210] sm:$0xff]
        %v1572 = vld [vmem:[#allocation6 + $0x218] sm:$0xff]
        %v1573 = vld [vmem:[#allocation6 + $0x220] sm:$0xff]
        %v1574 = vld [vmem:[#allocation6 + $0x230] sm:$0xff]
        %v1575 = vld [vmem:[#allocation6 + $0x238] sm:$0xff]
        %v1576 = vld [vmem:[#allocation6 + $0x240] sm:$0xff]
        %v1577 = vld [vmem:[#allocation6 + $0x248] sm:$0xff]
        %v1578 = vld [vmem:[#allocation6 + $0x258] sm:$0xff]
        %v1579 = vld [vmem:[#allocation6 + $0x260] sm:$0xff]
        %v1580 = vld [vmem:[#allocation6 + $0x268] sm:$0xff]
        %v1581 = vld [vmem:[#allocation6 + $0x270] sm:$0xff]
        %1582 = vmatpush.msra.mxu0 %v1578
        %1583 = vmatpush.msra.mxu0 %v1574
        %1584 = vmatpush.msra.mxu0 %v1570
        %1585 = vmatpush.msra.mxu0 %v1566
        %1586 = vmatpush.msra.mxu0 %v1562
        %1587 = vmatpush.msra.mxu0 %v1558
        %1588 = vmatpush.msra.mxu0 %v1554
        %1589 = vmatpush.msra.mxu0 %v1550
        %1590 = vmatpush.msra.mxu0 %v1546
        %1591 = vmatpush.msra.mxu0 %v1542
        %1592 = vmatpush.msra.mxu0 %v1538
        %1593 = vmatpush.msra.mxu0 %v1534
        %1594 = vmatpush.msra.mxu0 %v1530
        %1595 = vmatpush.msra.mxu0 %v1526
        %1596 = vmatpush.msra.mxu0 %v1522
        %1597 = vmatpush.msra.mxu0 %v1518
        %1598 = vmatmul.f32.gmra.mxu0 %v1514
        %v1599 = vpop.f32.mrf.mxu0
        %v1600 = vadd.f32 0.0, %v1599
        %1601 = vdwg.mxu0
        %1602 = vmatpush.msra.mxu0 %v1579
        %1603 = vmatpush.msra.mxu0 %v1575
        %1604 = vmatpush.msra.mxu0 %v1571
        %1605 = vmatpush.msra.mxu0 %v1567
        %1606 = vmatpush.msra.mxu0 %v1563
        %1607 = vmatpush.msra.mxu0 %v1559
        %1608 = vmatpush.msra.mxu0 %v1555
        %1609 = vmatpush.msra.mxu0 %v1551
        %1610 = vmatpush.msra.mxu0 %v1547
        %1611 = vmatpush.msra.mxu0 %v1543
        %1612 = vmatpush.msra.mxu0 %v1539
        %1613 = vmatpush.msra.mxu0 %v1535
        %1614 = vmatpush.msra.mxu0 %v1531
        %1615 = vmatpush.msra.mxu0 %v1527
        %1616 = vmatpush.msra.mxu0 %v1523
        %1617 = vmatpush.msra.mxu0 %v1519
        %1618 = vmatmul.f32.gmra.mxu0 %v1514
        %v1619 = vpop.f32.mrf.mxu0
        %v1620 = vadd.f32 0.0, %v1619
        %1621 = vdwg.mxu0
        %1622 = vmatpush.msra.mxu0 %v1580
        %1623 = vmatpush.msra.mxu0 %v1576
        %1624 = vmatpush.msra.mxu0 %v1572
        %1625 = vmatpush.msra.mxu0 %v1568
        %1626 = vmatpush.msra.mxu0 %v1564
        %1627 = vmatpush.msra.mxu0 %v1560
        %1628 = vmatpush.msra.mxu0 %v1556
        %1629 = vmatpush.msra.mxu0 %v1552
        %1630 = vmatpush.msra.mxu0 %v1548
        %1631 = vmatpush.msra.mxu0 %v1544
        %1632 = vmatpush.msra.mxu0 %v1540
        %1633 = vmatpush.msra.mxu0 %v1536
        %1634 = vmatpush.msra.mxu0 %v1532
        %1635 = vmatpush.msra.mxu0 %v1528
        %1636 = vmatpush.msra.mxu0 %v1524
        %1637 = vmatpush.msra.mxu0 %v1520
        %1638 = vmatmul.f32.gmra.mxu0 %v1514
        %v1639 = vpop.f32.mrf.mxu0
        %v1640 = vadd.f32 0.0, %v1639
        %1641 = vdwg.mxu0
        %1642 = vmatpush.msra.mxu0 %v1581
        %1643 = vmatpush.msra.mxu0 %v1577
        %1644 = vmatpush.msra.mxu0 %v1573
        %1645 = vmatpush.msra.mxu0 %v1569
        %1646 = vmatpush.msra.mxu0 %v1565
        %1647 = vmatpush.msra.mxu0 %v1561
        %1648 = vmatpush.msra.mxu0 %v1557
        %1649 = vmatpush.msra.mxu0 %v1553
        %1650 = vmatpush.msra.mxu0 %v1549
        %1651 = vmatpush.msra.mxu0 %v1545
        %1652 = vmatpush.msra.mxu0 %v1541
        %1653 = vmatpush.msra.mxu0 %v1537
        %1654 = vmatpush.msra.mxu0 %v1533
        %1655 = vmatpush.msra.mxu0 %v1529
        %1656 = vmatpush.msra.mxu0 %v1525
        %1657 = vmatpush.msra.mxu0 %v1521
        %1658 = vmatmul.f32.gmra.mxu0 %v1514
        %v1659 = vpop.f32.mrf.mxu0
        %v1660 = vadd.f32 0.0, %v1659
        %1661 = vdwg.mxu0
        %v1666 = vrot.slane %v1620, 7
        %v1667 = vrot.slane %v1640, 6
        %v1668 = vrot.slane %v1660, 5
        %v1669 = vsel %vm1135, %v1600, %v1666
        %v1670 = vsel %vm1137, %v1667, %v1668
        %v1671 = vsel %vm1139, %v1669, %v1670
        %v1673 = vadd.f32 %v1517, %v1671
        %v1674 = vmul.f32 %v1673, 0.5
        %v1675 = vtanh.pop %v1674
        %v1676 = vmul.f32 %v1675, 0.5
        %v1677 = vadd.f32 %v1676, 0.5
        %v1679 = vrot.slane %v1673, 3
        %v1681 = vtanh.pop %v1679
        %v1683 = vrot.slane %v1677, 1
        %v1685 = vmul.f32 %v1683, %v1510
        %v1686 = vmul.f32 %v1677, %v1681
        %v1687 = vadd.f32 %v1685, %v1686
        %v1688 = vtanh.pop %v1687
        %v1689 = vrot.slane %v1677, 2
        %v1691 = vmul.f32 %v1689, %v1688
        %1692 = vst [vmem:[#allocation3 + $0x3] sm:$0x1] %v1691
        %s1693 = scalar_lea.vmem [#allocation2], 4
        %v1694 = vld [vmem:[%s1693] ss:$8 sm:$0xf]
        %v1695 = vld [vmem:[#allocation6] sm:$0xff]
        %v1696 = vld [vmem:[#allocation6 + $0x8] sm:$0xff]
        %v1697 = vld [vmem:[#allocation6 + $0x10] sm:$0xff]
        %v1698 = vld [vmem:[#allocation6 + $0x18] sm:$0xff]
        %v1699 = vld [vmem:[#allocation6 + $0x28] sm:$0xff]
        %v1700 = vld [vmem:[#allocation6 + $0x30] sm:$0xff]
        %v1701 = vld [vmem:[#allocation6 + $0x38] sm:$0xff]
        %v1702 = vld [vmem:[#allocation6 + $0x40] sm:$0xff]
        %v1703 = vld [vmem:[#allocation6 + $0x50] sm:$0xff]
        %v1704 = vld [vmem:[#allocation6 + $0x58] sm:$0xff]
        %v1705 = vld [vmem:[#allocation6 + $0x60] sm:$0xff]
        %v1706 = vld [vmem:[#allocation6 + $0x68] sm:$0xff]
        %v1707 = vld [vmem:[#allocation6 + $0x78] sm:$0xff]
        %v1708 = vld [vmem:[#allocation6 + $0x80] sm:$0xff]
        %v1709 = vld [vmem:[#allocation6 + $0x88] sm:$0xff]
        %v1710 = vld [vmem:[#allocation6 + $0x90] sm:$0xff]
        %v1711 = vld [vmem:[#allocation6 + $0xa0] sm:$0xff]
        %v1712 = vld [vmem:[#allocation6 + $0xa8] sm:$0xff]
        %v1713 = vld [vmem:[#allocation6 + $0xb0] sm:$0xff]
        %v1714 = vld [vmem:[#allocation6 + $0xb8] sm:$0xff]
        %v1715 = vld [vmem:[#allocation6 + $0xc8] sm:$0xff]
        %v1716 = vld [vmem:[#allocation6 + $0xd0] sm:$0xff]
        %v1717 = vld [vmem:[#allocation6 + $0xd8] sm:$0xff]
        %v1718 = vld [vmem:[#allocation6 + $0xe0] sm:$0xff]
        %v1719 = vld [vmem:[#allocation6 + $0xf0] sm:$0xff]
        %v1720 = vld [vmem:[#allocation6 + $0xf8] sm:$0xff]
        %v1721 = vld [vmem:[#allocation6 + $0x100] sm:$0xff]
        %v1722 = vld [vmem:[#allocation6 + $0x108] sm:$0xff]
        %v1723 = vld [vmem:[#allocation6 + $0x118] sm:$0xff]
        %v1724 = vld [vmem:[#allocation6 + $0x120] sm:$0xff]
        %v1725 = vld [vmem:[#allocation6 + $0x128] sm:$0xff]
        %v1726 = vld [vmem:[#allocation6 + $0x130] sm:$0xff]
        %v1727 = vld [vmem:[#allocation6 + $0x140] sm:$0xff]
        %v1728 = vld [vmem:[#allocation6 + $0x148] sm:$0xff]
        %v1729 = vld [vmem:[#allocation6 + $0x150] sm:$0xff]
        %v1730 = vld [vmem:[#allocation6 + $0x158] sm:$0xff]
        %v1731 = vld [vmem:[#allocation6 + $0x168] sm:$0xff]
        %v1732 = vld [vmem:[#allocation6 + $0x170] sm:$0xff]
        %v1733 = vld [vmem:[#allocation6 + $0x178] sm:$0xff]
        %v1734 = vld [vmem:[#allocation6 + $0x180] sm:$0xff]
        %v1735 = vld [vmem:[#allocation6 + $0x190] sm:$0xff]
        %v1736 = vld [vmem:[#allocation6 + $0x198] sm:$0xff]
        %v1737 = vld [vmem:[#allocation6 + $0x1a0] sm:$0xff]
        %v1738 = vld [vmem:[#allocation6 + $0x1a8] sm:$0xff]
        %v1739 = vld [vmem:[#allocation6 + $0x1b8] sm:$0xff]
        %v1740 = vld [vmem:[#allocation6 + $0x1c0] sm:$0xff]
        %v1741 = vld [vmem:[#allocation6 + $0x1c8] sm:$0xff]
        %v1742 = vld [vmem:[#allocation6 + $0x1d0] sm:$0xff]
        %v1743 = vld [vmem:[#allocation6 + $0x1e0] sm:$0xff]
        %v1744 = vld [vmem:[#allocation6 + $0x1e8] sm:$0xff]
        %v1745 = vld [vmem:[#allocation6 + $0x1f0] sm:$0xff]
        %v1746 = vld [vmem:[#allocation6 + $0x1f8] sm:$0xff]
        %v1747 = vld [vmem:[#allocation6 + $0x208] sm:$0xff]
        %v1748 = vld [vmem:[#allocation6 + $0x210] sm:$0xff]
        %v1749 = vld [vmem:[#allocation6 + $0x218] sm:$0xff]
        %v1750 = vld [vmem:[#allocation6 + $0x220] sm:$0xff]
        %v1751 = vld [vmem:[#allocation6 + $0x230] sm:$0xff]
        %v1752 = vld [vmem:[#allocation6 + $0x238] sm:$0xff]
        %v1753 = vld [vmem:[#allocation6 + $0x240] sm:$0xff]
        %v1754 = vld [vmem:[#allocation6 + $0x248] sm:$0xff]
        %v1755 = vld [vmem:[#allocation6 + $0x258] sm:$0xff]
        %v1756 = vld [vmem:[#allocation6 + $0x260] sm:$0xff]
        %v1757 = vld [vmem:[#allocation6 + $0x268] sm:$0xff]
        %v1758 = vld [vmem:[#allocation6 + $0x270] sm:$0xff]
        %1759 = vmatpush.msra.mxu0 %v1755
        %1760 = vmatpush.msra.mxu0 %v1751
        %1761 = vmatpush.msra.mxu0 %v1747
        %1762 = vmatpush.msra.mxu0 %v1743
        %1763 = vmatpush.msra.mxu0 %v1739
        %1764 = vmatpush.msra.mxu0 %v1735
        %1765 = vmatpush.msra.mxu0 %v1731
        %1766 = vmatpush.msra.mxu0 %v1727
        %1767 = vmatpush.msra.mxu0 %v1723
        %1768 = vmatpush.msra.mxu0 %v1719
        %1769 = vmatpush.msra.mxu0 %v1715
        %1770 = vmatpush.msra.mxu0 %v1711
        %1771 = vmatpush.msra.mxu0 %v1707
        %1772 = vmatpush.msra.mxu0 %v1703
        %1773 = vmatpush.msra.mxu0 %v1699
        %1774 = vmatpush.msra.mxu0 %v1695
        %1775 = vmatmul.f32.gmra.mxu0 %v1691
        %v1776 = vpop.f32.mrf.mxu0
        %v1777 = vadd.f32 0.0, %v1776
        %1778 = vdwg.mxu0
        %1779 = vmatpush.msra.mxu0 %v1756
        %1780 = vmatpush.msra.mxu0 %v1752
        %1781 = vmatpush.msra.mxu0 %v1748
        %1782 = vmatpush.msra.mxu0 %v1744
        %1783 = vmatpush.msra.mxu0 %v1740
        %1784 = vmatpush.msra.mxu0 %v1736
        %1785 = vmatpush.msra.mxu0 %v1732
        %1786 = vmatpush.msra.mxu0 %v1728
        %1787 = vmatpush.msra.mxu0 %v1724
        %1788 = vmatpush.msra.mxu0 %v1720
        %1789 = vmatpush.msra.mxu0 %v1716
        %1790 = vmatpush.msra.mxu0 %v1712
        %1791 = vmatpush.msra.mxu0 %v1708
        %1792 = vmatpush.msra.mxu0 %v1704
        %1793 = vmatpush.msra.mxu0 %v1700
        %1794 = vmatpush.msra.mxu0 %v1696
        %1795 = vmatmul.f32.gmra.mxu0 %v1691
        %v1796 = vpop.f32.mrf.mxu0
        %v1797 = vadd.f32 0.0, %v1796
        %1798 = vdwg.mxu0
        %1799 = vmatpush.msra.mxu0 %v1757
        %1800 = vmatpush.msra.mxu0 %v1753
        %1801 = vmatpush.msra.mxu0 %v1749
        %1802 = vmatpush.msra.mxu0 %v1745
        %1803 = vmatpush.msra.mxu0 %v1741
        %1804 = vmatpush.msra.mxu0 %v1737
        %1805 = vmatpush.msra.mxu0 %v1733
        %1806 = vmatpush.msra.mxu0 %v1729
        %1807 = vmatpush.msra.mxu0 %v1725
        %1808 = vmatpush.msra.mxu0 %v1721
        %1809 = vmatpush.msra.mxu0 %v1717
        %1810 = vmatpush.msra.mxu0 %v1713
        %1811 = vmatpush.msra.mxu0 %v1709
        %1812 = vmatpush.msra.mxu0 %v1705
        %1813 = vmatpush.msra.mxu0 %v1701
        %1814 = vmatpush.msra.mxu0 %v1697
        %1815 = vmatmul.f32.gmra.mxu0 %v1691
        %v1816 = vpop.f32.mrf.mxu0
        %v1817 = vadd.f32 0.0, %v1816
        %1818 = vdwg.mxu0
        %1819 = vmatpush.msra.mxu0 %v1758
        %1820 = vmatpush.msra.mxu0 %v1754
        %1821 = vmatpush.msra.mxu0 %v1750
        %1822 = vmatpush.msra.mxu0 %v1746
        %1823 = vmatpush.msra.mxu0 %v1742
        %1824 = vmatpush.msra.mxu0 %v1738
        %1825 = vmatpush.msra.mxu0 %v1734
        %1826 = vmatpush.msra.mxu0 %v1730
        %1827 = vmatpush.msra.mxu0 %v1726
        %1828 = vmatpush.msra.mxu0 %v1722
        %1829 = vmatpush.msra.mxu0 %v1718
        %1830 = vmatpush.msra.mxu0 %v1714
        %1831 = vmatpush.msra.mxu0 %v1710
        %1832 = vmatpush.msra.mxu0 %v1706
        %1833 = vmatpush.msra.mxu0 %v1702
        %1834 = vmatpush.msra.mxu0 %v1698
        %1835 = vmatmul.f32.gmra.mxu0 %v1691
        %v1836 = vpop.f32.mrf.mxu0
        %v1837 = vadd.f32 0.0, %v1836
        %1838 = vdwg.mxu0
        %v1843 = vrot.slane %v1797, 7
        %v1844 = vrot.slane %v1817, 6
        %v1845 = vrot.slane %v1837, 5
        %v1846 = vsel %vm1135, %v1777, %v1843
        %v1847 = vsel %vm1137, %v1844, %v1845
        %v1848 = vsel %vm1139, %v1846, %v1847
        %v1850 = vadd.f32 %v1694, %v1848
        %v1851 = vmul.f32 %v1850, 0.5
        %v1852 = vtanh.pop %v1851
        %v1853 = vmul.f32 %v1852, 0.5
        %v1854 = vadd.f32 %v1853, 0.5
        %v1856 = vrot.slane %v1850, 3
        %v1858 = vtanh.pop %v1856
        %v1860 = vrot.slane %v1854, 1
        %v1862 = vmul.f32 %v1860, %v1687
        %v1863 = vmul.f32 %v1854, %v1858
        %v1864 = vadd.f32 %v1862, %v1863
        %v1865 = vtanh.pop %v1864
        %v1866 = vrot.slane %v1854, 2
        %v1868 = vmul.f32 %v1866, %v1865
        %1869 = vst [vmem:[#allocation3 + $0x4] sm:$0x1] %v1868
        %s1870 = scalar_lea.vmem [#allocation2], 5
        %v1871 = vld [vmem:[%s1870] ss:$8 sm:$0xf]
        %v1872 = vld [vmem:[#allocation6] sm:$0xff]
        %v1873 = vld [vmem:[#allocation6 + $0x8] sm:$0xff]
        %v1874 = vld [vmem:[#allocation6 + $0x10] sm:$0xff]
        %v1875 = vld [vmem:[#allocation6 + $0x18] sm:$0xff]
        %v1876 = vld [vmem:[#allocation6 + $0x28] sm:$0xff]
        %v1877 = vld [vmem:[#allocation6 + $0x30] sm:$0xff]
        %v1878 = vld [vmem:[#allocation6 + $0x38] sm:$0xff]
        %v1879 = vld [vmem:[#allocation6 + $0x40] sm:$0xff]
        %v1880 = vld [vmem:[#allocation6 + $0x50] sm:$0xff]
        %v1881 = vld [vmem:[#allocation6 + $0x58] sm:$0xff]
        %v1882 = vld [vmem:[#allocation6 + $0x60] sm:$0xff]
        %v1883 = vld [vmem:[#allocation6 + $0x68] sm:$0xff]
        %v1884 = vld [vmem:[#allocation6 + $0x78] sm:$0xff]
        %v1885 = vld [vmem:[#allocation6 + $0x80] sm:$0xff]
        %v1886 = vld [vmem:[#allocation6 + $0x88] sm:$0xff]
        %v1887 = vld [vmem:[#allocation6 + $0x90] sm:$0xff]
        %v1888 = vld [vmem:[#allocation6 + $0xa0] sm:$0xff]
        %v1889 = vld [vmem:[#allocation6 + $0xa8] sm:$0xff]
        %v1890 = vld [vmem:[#allocation6 + $0xb0] sm:$0xff]
        %v1891 = vld [vmem:[#allocation6 + $0xb8] sm:$0xff]
        %v1892 = vld [vmem:[#allocation6 + $0xc8] sm:$0xff]
        %v1893 = vld [vmem:[#allocation6 + $0xd0] sm:$0xff]
        %v1894 = vld [vmem:[#allocation6 + $0xd8] sm:$0xff]
        %v1895 = vld [vmem:[#allocation6 + $0xe0] sm:$0xff]
        %v1896 = vld [vmem:[#allocation6 + $0xf0] sm:$0xff]
        %v1897 = vld [vmem:[#allocation6 + $0xf8] sm:$0xff]
        %v1898 = vld [vmem:[#allocation6 + $0x100] sm:$0xff]
        %v1899 = vld [vmem:[#allocation6 + $0x108] sm:$0xff]
        %v1900 = vld [vmem:[#allocation6 + $0x118] sm:$0xff]
        %v1901 = vld [vmem:[#allocation6 + $0x120] sm:$0xff]
        %v1902 = vld [vmem:[#allocation6 + $0x128] sm:$0xff]
        %v1903 = vld [vmem:[#allocation6 + $0x130] sm:$0xff]
        %v1904 = vld [vmem:[#allocation6 + $0x140] sm:$0xff]
        %v1905 = vld [vmem:[#allocation6 + $0x148] sm:$0xff]
        %v1906 = vld [vmem:[#allocation6 + $0x150] sm:$0xff]
        %v1907 = vld [vmem:[#allocation6 + $0x158] sm:$0xff]
        %v1908 = vld [vmem:[#allocation6 + $0x168] sm:$0xff]
        %v1909 = vld [vmem:[#allocation6 + $0x170] sm:$0xff]
        %v1910 = vld [vmem:[#allocation6 + $0x178] sm:$0xff]
        %v1911 = vld [vmem:[#allocation6 + $0x180] sm:$0xff]
        %v1912 = vld [vmem:[#allocation6 + $0x190] sm:$0xff]
        %v1913 = vld [vmem:[#allocation6 + $0x198] sm:$0xff]
        %v1914 = vld [vmem:[#allocation6 + $0x1a0] sm:$0xff]
        %v1915 = vld [vmem:[#allocation6 + $0x1a8] sm:$0xff]
        %v1916 = vld [vmem:[#allocation6 + $0x1b8] sm:$0xff]
        %v1917 = vld [vmem:[#allocation6 + $0x1c0] sm:$0xff]
        %v1918 = vld [vmem:[#allocation6 + $0x1c8] sm:$0xff]
        %v1919 = vld [vmem:[#allocation6 + $0x1d0] sm:$0xff]
        %v1920 = vld [vmem:[#allocation6 + $0x1e0] sm:$0xff]
        %v1921 = vld [vmem:[#allocation6 + $0x1e8] sm:$0xff]
        %v1922 = vld [vmem:[#allocation6 + $0x1f0] sm:$0xff]
        %v1923 = vld [vmem:[#allocation6 + $0x1f8] sm:$0xff]
        %v1924 = vld [vmem:[#allocation6 + $0x208] sm:$0xff]
        %v1925 = vld [vmem:[#allocation6 + $0x210] sm:$0xff]
        %v1926 = vld [vmem:[#allocation6 + $0x218] sm:$0xff]
        %v1927 = vld [vmem:[#allocation6 + $0x220] sm:$0xff]
        %v1928 = vld [vmem:[#allocation6 + $0x230] sm:$0xff]
        %v1929 = vld [vmem:[#allocation6 + $0x238] sm:$0xff]
        %v1930 = vld [vmem:[#allocation6 + $0x240] sm:$0xff]
        %v1931 = vld [vmem:[#allocation6 + $0x248] sm:$0xff]
        %v1932 = vld [vmem:[#allocation6 + $0x258] sm:$0xff]
        %v1933 = vld [vmem:[#allocation6 + $0x260] sm:$0xff]
        %v1934 = vld [vmem:[#allocation6 + $0x268] sm:$0xff]
        %v1935 = vld [vmem:[#allocation6 + $0x270] sm:$0xff]
        %1936 = vmatpush.msra.mxu0 %v1932
        %1937 = vmatpush.msra.mxu0 %v1928
        %1938 = vmatpush.msra.mxu0 %v1924
        %1939 = vmatpush.msra.mxu0 %v1920
        %1940 = vmatpush.msra.mxu0 %v1916
        %1941 = vmatpush.msra.mxu0 %v1912
        %1942 = vmatpush.msra.mxu0 %v1908
        %1943 = vmatpush.msra.mxu0 %v1904
        %1944 = vmatpush.msra.mxu0 %v1900
        %1945 = vmatpush.msra.mxu0 %v1896
        %1946 = vmatpush.msra.mxu0 %v1892
        %1947 = vmatpush.msra.mxu0 %v1888
        %1948 = vmatpush.msra.mxu0 %v1884
        %1949 = vmatpush.msra.mxu0 %v1880
        %1950 = vmatpush.msra.mxu0 %v1876
        %1951 = vmatpush.msra.mxu0 %v1872
        %1952 = vmatmul.f32.gmra.mxu0 %v1868
        %v1953 = vpop.f32.mrf.mxu0
        %v1954 = vadd.f32 0.0, %v1953
        %1955 = vdwg.mxu0
        %1956 = vmatpush.msra.mxu0 %v1933
        %1957 = vmatpush.msra.mxu0 %v1929
        %1958 = vmatpush.msra.mxu0 %v1925
        %1959 = vmatpush.msra.mxu0 %v1921
        %1960 = vmatpush.msra.mxu0 %v1917
        %1961 = vmatpush.msra.mxu0 %v1913
        %1962 = vmatpush.msra.mxu0 %v1909
        %1963 = vmatpush.msra.mxu0 %v1905
        %1964 = vmatpush.msra.mxu0 %v1901
        %1965 = vmatpush.msra.mxu0 %v1897
        %1966 = vmatpush.msra.mxu0 %v1893
        %1967 = vmatpush.msra.mxu0 %v1889
        %1968 = vmatpush.msra.mxu0 %v1885
        %1969 = vmatpush.msra.mxu0 %v1881
        %1970 = vmatpush.msra.mxu0 %v1877
        %1971 = vmatpush.msra.mxu0 %v1873
        %1972 = vmatmul.f32.gmra.mxu0 %v1868
        %v1973 = vpop.f32.mrf.mxu0
        %v1974 = vadd.f32 0.0, %v1973
        %1975 = vdwg.mxu0
        %1976 = vmatpush.msra.mxu0 %v1934
        %1977 = vmatpush.msra.mxu0 %v1930
        %1978 = vmatpush.msra.mxu0 %v1926
        %1979 = vmatpush.msra.mxu0 %v1922
        %1980 = vmatpush.msra.mxu0 %v1918
        %1981 = vmatpush.msra.mxu0 %v1914
        %1982 = vmatpush.msra.mxu0 %v1910
        %1983 = vmatpush.msra.mxu0 %v1906
        %1984 = vmatpush.msra.mxu0 %v1902
        %1985 = vmatpush.msra.mxu0 %v1898
        %1986 = vmatpush.msra.mxu0 %v1894
        %1987 = vmatpush.msra.mxu0 %v1890
        %1988 = vmatpush.msra.mxu0 %v1886
        %1989 = vmatpush.msra.mxu0 %v1882
        %1990 = vmatpush.msra.mxu0 %v1878
        %1991 = vmatpush.msra.mxu0 %v1874
        %1992 = vmatmul.f32.gmra.mxu0 %v1868
        %v1993 = vpop.f32.mrf.mxu0
        %v1994 = vadd.f32 0.0, %v1993
        %1995 = vdwg.mxu0
        %1996 = vmatpush.msra.mxu0 %v1935
        %1997 = vmatpush.msra.mxu0 %v1931
        %1998 = vmatpush.msra.mxu0 %v1927
        %1999 = vmatpush.msra.mxu0 %v1923
        %2000 = vmatpush.msra.mxu0 %v1919
        %2001 = vmatpush.msra.mxu0 %v1915
        %2002 = vmatpush.msra.mxu0 %v1911
        %2003 = vmatpush.msra.mxu0 %v1907
        %2004 = vmatpush.msra.mxu0 %v1903
        %2005 = vmatpush.msra.mxu0 %v1899
        %2006 = vmatpush.msra.mxu0 %v1895
        %2007 = vmatpush.msra.mxu0 %v1891
        %2008 = vmatpush.msra.mxu0 %v1887
        %2009 = vmatpush.msra.mxu0 %v1883
        %2010 = vmatpush.msra.mxu0 %v1879
        %2011 = vmatpush.msra.mxu0 %v1875
        %2012 = vmatmul.f32.gmra.mxu0 %v1868
        %v2013 = vpop.f32.mrf.mxu0
        %v2014 = vadd.f32 0.0, %v2013
        %2015 = vdwg.mxu0
        %v2020 = vrot.slane %v1974, 7
        %v2021 = vrot.slane %v1994, 6
        %v2022 = vrot.slane %v2014, 5
        %v2023 = vsel %vm1135, %v1954, %v2020
        %v2024 = vsel %vm1137, %v2021, %v2022
        %v2025 = vsel %vm1139, %v2023, %v2024
        %v2027 = vadd.f32 %v1871, %v2025
        %v2028 = vmul.f32 %v2027, 0.5
        %v2029 = vtanh.pop %v2028
        %v2030 = vmul.f32 %v2029, 0.5
        %v2031 = vadd.f32 %v2030, 0.5
        %v2033 = vrot.slane %v2027, 3
        %v2035 = vtanh.pop %v2033
        %v2037 = vrot.slane %v2031, 1
        %v2039 = vmul.f32 %v2037, %v1864
        %v2040 = vmul.f32 %v2031, %v2035
        %v2041 = vadd.f32 %v2039, %v2040
        %v2042 = vtanh.pop %v2041
        %v2043 = vrot.slane %v2031, 2
        %v2045 = vmul.f32 %v2043, %v2042
        %2046 = vst [vmem:[#allocation3 + $0x5] sm:$0x1] %v2045
        %s2047 = scalar_lea.vmem [#allocation2], 6
        %v2048 = vld [vmem:[%s2047] ss:$8 sm:$0xf]
        %v2049 = vld [vmem:[#allocation6] sm:$0xff]
        %v2050 = vld [vmem:[#allocation6 + $0x8] sm:$0xff]
        %v2051 = vld [vmem:[#allocation6 + $0x10] sm:$0xff]
        %v2052 = vld [vmem:[#allocation6 + $0x18] sm:$0xff]
        %v2053 = vld [vmem:[#allocation6 + $0x28] sm:$0xff]
        %v2054 = vld [vmem:[#allocation6 + $0x30] sm:$0xff]
        %v2055 = vld [vmem:[#allocation6 + $0x38] sm:$0xff]
        %v2056 = vld [vmem:[#allocation6 + $0x40] sm:$0xff]
        %v2057 = vld [vmem:[#allocation6 + $0x50] sm:$0xff]
        %v2058 = vld [vmem:[#allocation6 + $0x58] sm:$0xff]
        %v2059 = vld [vmem:[#allocation6 + $0x60] sm:$0xff]
        %v2060 = vld [vmem:[#allocation6 + $0x68] sm:$0xff]
        %v2061 = vld [vmem:[#allocation6 + $0x78] sm:$0xff]
        %v2062 = vld [vmem:[#allocation6 + $0x80] sm:$0xff]
        %v2063 = vld [vmem:[#allocation6 + $0x88] sm:$0xff]
        %v2064 = vld [vmem:[#allocation6 + $0x90] sm:$0xff]
        %v2065 = vld [vmem:[#allocation6 + $0xa0] sm:$0xff]
        %v2066 = vld [vmem:[#allocation6 + $0xa8] sm:$0xff]
        %v2067 = vld [vmem:[#allocation6 + $0xb0] sm:$0xff]
        %v2068 = vld [vmem:[#allocation6 + $0xb8] sm:$0xff]
        %v2069 = vld [vmem:[#allocation6 + $0xc8] sm:$0xff]
        %v2070 = vld [vmem:[#allocation6 + $0xd0] sm:$0xff]
        %v2071 = vld [vmem:[#allocation6 + $0xd8] sm:$0xff]
        %v2072 = vld [vmem:[#allocation6 + $0xe0] sm:$0xff]
        %v2073 = vld [vmem:[#allocation6 + $0xf0] sm:$0xff]
        %v2074 = vld [vmem:[#allocation6 + $0xf8] sm:$0xff]
        %v2075 = vld [vmem:[#allocation6 + $0x100] sm:$0xff]
        %v2076 = vld [vmem:[#allocation6 + $0x108] sm:$0xff]
        %v2077 = vld [vmem:[#allocation6 + $0x118] sm:$0xff]
        %v2078 = vld [vmem:[#allocation6 + $0x120] sm:$0xff]
        %v2079 = vld [vmem:[#allocation6 + $0x128] sm:$0xff]
        %v2080 = vld [vmem:[#allocation6 + $0x130] sm:$0xff]
        %v2081 = vld [vmem:[#allocation6 + $0x140] sm:$0xff]
        %v2082 = vld [vmem:[#allocation6 + $0x148] sm:$0xff]
        %v2083 = vld [vmem:[#allocation6 + $0x150] sm:$0xff]
        %v2084 = vld [vmem:[#allocation6 + $0x158] sm:$0xff]
        %v2085 = vld [vmem:[#allocation6 + $0x168] sm:$0xff]
        %v2086 = vld [vmem:[#allocation6 + $0x170] sm:$0xff]
        %v2087 = vld [vmem:[#allocation6 + $0x178] sm:$0xff]
        %v2088 = vld [vmem:[#allocation6 + $0x180] sm:$0xff]
        %v2089 = vld [vmem:[#allocation6 + $0x190] sm:$0xff]
        %v2090 = vld [vmem:[#allocation6 + $0x198] sm:$0xff]
        %v2091 = vld [vmem:[#allocation6 + $0x1a0] sm:$0xff]
        %v2092 = vld [vmem:[#allocation6 + $0x1a8] sm:$0xff]
        %v2093 = vld [vmem:[#allocation6 + $0x1b8] sm:$0xff]
        %v2094 = vld [vmem:[#allocation6 + $0x1c0] sm:$0xff]
        %v2095 = vld [vmem:[#allocation6 + $0x1c8] sm:$0xff]
        %v2096 = vld [vmem:[#allocation6 + $0x1d0] sm:$0xff]
        %v2097 = vld [vmem:[#allocation6 + $0x1e0] sm:$0xff]
        %v2098 = vld [vmem:[#allocation6 + $0x1e8] sm:$0xff]
        %v2099 = vld [vmem:[#allocation6 + $0x1f0] sm:$0xff]
        %v2100 = vld [vmem:[#allocation6 + $0x1f8] sm:$0xff]
        %v2101 = vld [vmem:[#allocation6 + $0x208] sm:$0xff]
        %v2102 = vld [vmem:[#allocation6 + $0x210] sm:$0xff]
        %v2103 = vld [vmem:[#allocation6 + $0x218] sm:$0xff]
        %v2104 = vld [vmem:[#allocation6 + $0x220] sm:$0xff]
        %v2105 = vld [vmem:[#allocation6 + $0x230] sm:$0xff]
        %v2106 = vld [vmem:[#allocation6 + $0x238] sm:$0xff]
        %v2107 = vld [vmem:[#allocation6 + $0x240] sm:$0xff]
        %v2108 = vld [vmem:[#allocation6 + $0x248] sm:$0xff]
        %v2109 = vld [vmem:[#allocation6 + $0x258] sm:$0xff]
        %v2110 = vld [vmem:[#allocation6 + $0x260] sm:$0xff]
        %v2111 = vld [vmem:[#allocation6 + $0x268] sm:$0xff]
        %v2112 = vld [vmem:[#allocation6 + $0x270] sm:$0xff]
        %2113 = vmatpush.msra.mxu0 %v2109
        %2114 = vmatpush.msra.mxu0 %v2105
        %2115 = vmatpush.msra.mxu0 %v2101
        %2116 = vmatpush.msra.mxu0 %v2097
        %2117 = vmatpush.msra.mxu0 %v2093
        %2118 = vmatpush.msra.mxu0 %v2089
        %2119 = vmatpush.msra.mxu0 %v2085
        %2120 = vmatpush.msra.mxu0 %v2081
        %2121 = vmatpush.msra.mxu0 %v2077
        %2122 = vmatpush.msra.mxu0 %v2073
        %2123 = vmatpush.msra.mxu0 %v2069
        %2124 = vmatpush.msra.mxu0 %v2065
        %2125 = vmatpush.msra.mxu0 %v2061
        %2126 = vmatpush.msra.mxu0 %v2057
        %2127 = vmatpush.msra.mxu0 %v2053
        %2128 = vmatpush.msra.mxu0 %v2049
        %2129 = vmatmul.f32.gmra.mxu0 %v2045
        %v2130 = vpop.f32.mrf.mxu0
        %v2131 = vadd.f32 0.0, %v2130
        %2132 = vdwg.mxu0
        %2133 = vmatpush.msra.mxu0 %v2110
        %2134 = vmatpush.msra.mxu0 %v2106
        %2135 = vmatpush.msra.mxu0 %v2102
        %2136 = vmatpush.msra.mxu0 %v2098
        %2137 = vmatpush.msra.mxu0 %v2094
        %2138 = vmatpush.msra.mxu0 %v2090
        %2139 = vmatpush.msra.mxu0 %v2086
        %2140 = vmatpush.msra.mxu0 %v2082
        %2141 = vmatpush.msra.mxu0 %v2078
        %2142 = vmatpush.msra.mxu0 %v2074
        %2143 = vmatpush.msra.mxu0 %v2070
        %2144 = vmatpush.msra.mxu0 %v2066
        %2145 = vmatpush.msra.mxu0 %v2062
        %2146 = vmatpush.msra.mxu0 %v2058
        %2147 = vmatpush.msra.mxu0 %v2054
        %2148 = vmatpush.msra.mxu0 %v2050
        %2149 = vmatmul.f32.gmra.mxu0 %v2045
        %v2150 = vpop.f32.mrf.mxu0
        %v2151 = vadd.f32 0.0, %v2150
        %2152 = vdwg.mxu0
        %2153 = vmatpush.msra.mxu0 %v2111
        %2154 = vmatpush.msra.mxu0 %v2107
        %2155 = vmatpush.msra.mxu0 %v2103
        %2156 = vmatpush.msra.mxu0 %v2099
        %2157 = vmatpush.msra.mxu0 %v2095
        %2158 = vmatpush.msra.mxu0 %v2091
        %2159 = vmatpush.msra.mxu0 %v2087
        %2160 = vmatpush.msra.mxu0 %v2083
        %2161 = vmatpush.msra.mxu0 %v2079
        %2162 = vmatpush.msra.mxu0 %v2075
        %2163 = vmatpush.msra.mxu0 %v2071
        %2164 = vmatpush.msra.mxu0 %v2067
        %2165 = vmatpush.msra.mxu0 %v2063
        %2166 = vmatpush.msra.mxu0 %v2059
        %2167 = vmatpush.msra.mxu0 %v2055
        %2168 = vmatpush.msra.mxu0 %v2051
        %2169 = vmatmul.f32.gmra.mxu0 %v2045
        %v2170 = vpop.f32.mrf.mxu0
        %v2171 = vadd.f32 0.0, %v2170
        %2172 = vdwg.mxu0
        %2173 = vmatpush.msra.mxu0 %v2112
        %2174 = vmatpush.msra.mxu0 %v2108
        %2175 = vmatpush.msra.mxu0 %v2104
        %2176 = vmatpush.msra.mxu0 %v2100
        %2177 = vmatpush.msra.mxu0 %v2096
        %2178 = vmatpush.msra.mxu0 %v2092
        %2179 = vmatpush.msra.mxu0 %v2088
        %2180 = vmatpush.msra.mxu0 %v2084
        %2181 = vmatpush.msra.mxu0 %v2080
        %2182 = vmatpush.msra.mxu0 %v2076
        %2183 = vmatpush.msra.mxu0 %v2072
        %2184 = vmatpush.msra.mxu0 %v2068
        %2185 = vmatpush.msra.mxu0 %v2064
        %2186 = vmatpush.msra.mxu0 %v2060
        %2187 = vmatpush.msra.mxu0 %v2056
        %2188 = vmatpush.msra.mxu0 %v2052
        %2189 = vmatmul.f32.gmra.mxu0 %v2045
        %v2190 = vpop.f32.mrf.mxu0
        %v2191 = vadd.f32 0.0, %v2190
        %2192 = vdwg.mxu0
        %v2197 = vrot.slane %v2151, 7
        %v2198 = vrot.slane %v2171, 6
        %v2199 = vrot.slane %v2191, 5
        %v2200 = vsel %vm1135, %v2131, %v2197
        %v2201 = vsel %vm1137, %v2198, %v2199
        %v2202 = vsel %vm1139, %v2200, %v2201
        %v2204 = vadd.f32 %v2048, %v2202
        %v2205 = vmul.f32 %v2204, 0.5
        %v2206 = vtanh.pop %v2205
        %v2207 = vmul.f32 %v2206, 0.5
        %v2208 = vadd.f32 %v2207, 0.5
        %v2210 = vrot.slane %v2204, 3
        %v2212 = vtanh.pop %v2210
        %v2214 = vrot.slane %v2208, 1
        %v2216 = vmul.f32 %v2214, %v2041
        %v2217 = vmul.f32 %v2208, %v2212
        %v2218 = vadd.f32 %v2216, %v2217
        %v2219 = vtanh.pop %v2218
        %v2220 = vrot.slane %v2208, 2
        %v2222 = vmul.f32 %v2220, %v2219
        %2223 = vst [vmem:[#allocation3 + $0x6] sm:$0x1] %v2222
        %s2224 = scalar_lea.vmem [#allocation2], 7
        %v2225 = vld [vmem:[%s2224] ss:$8 sm:$0xf]
        %v2226 = vld [vmem:[#allocation6] sm:$0xff]
        %v2227 = vld [vmem:[#allocation6 + $0x8] sm:$0xff]
        %v2228 = vld [vmem:[#allocation6 + $0x10] sm:$0xff]
        %v2229 = vld [vmem:[#allocation6 + $0x18] sm:$0xff]
        %v2230 = vld [vmem:[#allocation6 + $0x28] sm:$0xff]
        %v2231 = vld [vmem:[#allocation6 + $0x30] sm:$0xff]
        %v2232 = vld [vmem:[#allocation6 + $0x38] sm:$0xff]
        %v2233 = vld [vmem:[#allocation6 + $0x40] sm:$0xff]
        %v2234 = vld [vmem:[#allocation6 + $0x50] sm:$0xff]
        %v2235 = vld [vmem:[#allocation6 + $0x58] sm:$0xff]
        %v2236 = vld [vmem:[#allocation6 + $0x60] sm:$0xff]
        %v2237 = vld [vmem:[#allocation6 + $0x68] sm:$0xff]
        %v2238 = vld [vmem:[#allocation6 + $0x78] sm:$0xff]
        %v2239 = vld [vmem:[#allocation6 + $0x80] sm:$0xff]
        %v2240 = vld [vmem:[#allocation6 + $0x88] sm:$0xff]
        %v2241 = vld [vmem:[#allocation6 + $0x90] sm:$0xff]
        %v2242 = vld [vmem:[#allocation6 + $0xa0] sm:$0xff]
        %v2243 = vld [vmem:[#allocation6 + $0xa8] sm:$0xff]
        %v2244 = vld [vmem:[#allocation6 + $0xb0] sm:$0xff]
        %v2245 = vld [vmem:[#allocation6 + $0xb8] sm:$0xff]
        %v2246 = vld [vmem:[#allocation6 + $0xc8] sm:$0xff]
        %v2247 = vld [vmem:[#allocation6 + $0xd0] sm:$0xff]
        %v2248 = vld [vmem:[#allocation6 + $0xd8] sm:$0xff]
        %v2249 = vld [vmem:[#allocation6 + $0xe0] sm:$0xff]
        %v2250 = vld [vmem:[#allocation6 + $0xf0] sm:$0xff]
        %v2251 = vld [vmem:[#allocation6 + $0xf8] sm:$0xff]
        %v2252 = vld [vmem:[#allocation6 + $0x100] sm:$0xff]
        %v2253 = vld [vmem:[#allocation6 + $0x108] sm:$0xff]
        %v2254 = vld [vmem:[#allocation6 + $0x118] sm:$0xff]
        %v2255 = vld [vmem:[#allocation6 + $0x120] sm:$0xff]
        %v2256 = vld [vmem:[#allocation6 + $0x128] sm:$0xff]
        %v2257 = vld [vmem:[#allocation6 + $0x130] sm:$0xff]
        %v2258 = vld [vmem:[#allocation6 + $0x140] sm:$0xff]
        %v2259 = vld [vmem:[#allocation6 + $0x148] sm:$0xff]
        %v2260 = vld [vmem:[#allocation6 + $0x150] sm:$0xff]
        %v2261 = vld [vmem:[#allocation6 + $0x158] sm:$0xff]
        %v2262 = vld [vmem:[#allocation6 + $0x168] sm:$0xff]
        %v2263 = vld [vmem:[#allocation6 + $0x170] sm:$0xff]
        %v2264 = vld [vmem:[#allocation6 + $0x178] sm:$0xff]
        %v2265 = vld [vmem:[#allocation6 + $0x180] sm:$0xff]
        %v2266 = vld [vmem:[#allocation6 + $0x190] sm:$0xff]
        %v2267 = vld [vmem:[#allocation6 + $0x198] sm:$0xff]
        %v2268 = vld [vmem:[#allocation6 + $0x1a0] sm:$0xff]
        %v2269 = vld [vmem:[#allocation6 + $0x1a8] sm:$0xff]
        %v2270 = vld [vmem:[#allocation6 + $0x1b8] sm:$0xff]
        %v2271 = vld [vmem:[#allocation6 + $0x1c0] sm:$0xff]
        %v2272 = vld [vmem:[#allocation6 + $0x1c8] sm:$0xff]
        %v2273 = vld [vmem:[#allocation6 + $0x1d0] sm:$0xff]
        %v2274 = vld [vmem:[#allocation6 + $0x1e0] sm:$0xff]
        %v2275 = vld [vmem:[#allocation6 + $0x1e8] sm:$0xff]
        %v2276 = vld [vmem:[#allocation6 + $0x1f0] sm:$0xff]
        %v2277 = vld [vmem:[#allocation6 + $0x1f8] sm:$0xff]
        %v2278 = vld [vmem:[#allocation6 + $0x208] sm:$0xff]
        %v2279 = vld [vmem:[#allocation6 + $0x210] sm:$0xff]
        %v2280 = vld [vmem:[#allocation6 + $0x218] sm:$0xff]
        %v2281 = vld [vmem:[#allocation6 + $0x220] sm:$0xff]
        %v2282 = vld [vmem:[#allocation6 + $0x230] sm:$0xff]
        %v2283 = vld [vmem:[#allocation6 + $0x238] sm:$0xff]
        %v2284 = vld [vmem:[#allocation6 + $0x240] sm:$0xff]
        %v2285 = vld [vmem:[#allocation6 + $0x248] sm:$0xff]
        %v2286 = vld [vmem:[#allocation6 + $0x258] sm:$0xff]
        %v2287 = vld [vmem:[#allocation6 + $0x260] sm:$0xff]
        %v2288 = vld [vmem:[#allocation6 + $0x268] sm:$0xff]
        %v2289 = vld [vmem:[#allocation6 + $0x270] sm:$0xff]
        %2290 = vmatpush.msra.mxu0 %v2286
        %2291 = vmatpush.msra.mxu0 %v2282
        %2292 = vmatpush.msra.mxu0 %v2278
        %2293 = vmatpush.msra.mxu0 %v2274
        %2294 = vmatpush.msra.mxu0 %v2270
        %2295 = vmatpush.msra.mxu0 %v2266
        %2296 = vmatpush.msra.mxu0 %v2262
        %2297 = vmatpush.msra.mxu0 %v2258
        %2298 = vmatpush.msra.mxu0 %v2254
        %2299 = vmatpush.msra.mxu0 %v2250
        %2300 = vmatpush.msra.mxu0 %v2246
        %2301 = vmatpush.msra.mxu0 %v2242
        %2302 = vmatpush.msra.mxu0 %v2238
        %2303 = vmatpush.msra.mxu0 %v2234
        %2304 = vmatpush.msra.mxu0 %v2230
        %2305 = vmatpush.msra.mxu0 %v2226
        %2306 = vmatmul.f32.gmra.mxu0 %v2222
        %v2307 = vpop.f32.mrf.mxu0
        %v2308 = vadd.f32 0.0, %v2307
        %2309 = vdwg.mxu0
        %2310 = vmatpush.msra.mxu0 %v2287
        %2311 = vmatpush.msra.mxu0 %v2283
        %2312 = vmatpush.msra.mxu0 %v2279
        %2313 = vmatpush.msra.mxu0 %v2275
        %2314 = vmatpush.msra.mxu0 %v2271
        %2315 = vmatpush.msra.mxu0 %v2267
        %2316 = vmatpush.msra.mxu0 %v2263
        %2317 = vmatpush.msra.mxu0 %v2259
        %2318 = vmatpush.msra.mxu0 %v2255
        %2319 = vmatpush.msra.mxu0 %v2251
        %2320 = vmatpush.msra.mxu0 %v2247
        %2321 = vmatpush.msra.mxu0 %v2243
        %2322 = vmatpush.msra.mxu0 %v2239
        %2323 = vmatpush.msra.mxu0 %v2235
        %2324 = vmatpush.msra.mxu0 %v2231
        %2325 = vmatpush.msra.mxu0 %v2227
        %2326 = vmatmul.f32.gmra.mxu0 %v2222
        %v2327 = vpop.f32.mrf.mxu0
        %v2328 = vadd.f32 0.0, %v2327
        %2329 = vdwg.mxu0
        %2330 = vmatpush.msra.mxu0 %v2288
        %2331 = vmatpush.msra.mxu0 %v2284
        %2332 = vmatpush.msra.mxu0 %v2280
        %2333 = vmatpush.msra.mxu0 %v2276
        %2334 = vmatpush.msra.mxu0 %v2272
        %2335 = vmatpush.msra.mxu0 %v2268
        %2336 = vmatpush.msra.mxu0 %v2264
        %2337 = vmatpush.msra.mxu0 %v2260
        %2338 = vmatpush.msra.mxu0 %v2256
        %2339 = vmatpush.msra.mxu0 %v2252
        %2340 = vmatpush.msra.mxu0 %v2248
        %2341 = vmatpush.msra.mxu0 %v2244
        %2342 = vmatpush.msra.mxu0 %v2240
        %2343 = vmatpush.msra.mxu0 %v2236
        %2344 = vmatpush.msra.mxu0 %v2232
        %2345 = vmatpush.msra.mxu0 %v2228
        %2346 = vmatmul.f32.gmra.mxu0 %v2222
        %v2347 = vpop.f32.mrf.mxu0
        %v2348 = vadd.f32 0.0, %v2347
        %2349 = vdwg.mxu0
        %2350 = vmatpush.msra.mxu0 %v2289
        %2351 = vmatpush.msra.mxu0 %v2285
        %2352 = vmatpush.msra.mxu0 %v2281
        %2353 = vmatpush.msra.mxu0 %v2277
        %2354 = vmatpush.msra.mxu0 %v2273
        %2355 = vmatpush.msra.mxu0 %v2269
        %2356 = vmatpush.msra.mxu0 %v2265
        %2357 = vmatpush.msra.mxu0 %v2261
        %2358 = vmatpush.msra.mxu0 %v2257
        %2359 = vmatpush.msra.mxu0 %v2253
        %2360 = vmatpush.msra.mxu0 %v2249
        %2361 = vmatpush.msra.mxu0 %v2245
        %2362 = vmatpush.msra.mxu0 %v2241
        %2363 = vmatpush.msra.mxu0 %v2237
        %2364 = vmatpush.msra.mxu0 %v2233
        %2365 = vmatpush.msra.mxu0 %v2229
        %2366 = vmatmul.f32.gmra.mxu0 %v2222
        %v2367 = vpop.f32.mrf.mxu0
        %v2368 = vadd.f32 0.0, %v2367
        %2369 = vdwg.mxu0
        %v2374 = vrot.slane %v2328, 7
        %v2375 = vrot.slane %v2348, 6
        %v2376 = vrot.slane %v2368, 5
        %v2377 = vsel %vm1135, %v2308, %v2374
        %v2378 = vsel %vm1137, %v2375, %v2376
        %v2379 = vsel %vm1139, %v2377, %v2378
        %v2381 = vadd.f32 %v2225, %v2379
        %v2382 = vmul.f32 %v2381, 0.5
        %v2383 = vtanh.pop %v2382
        %v2384 = vmul.f32 %v2383, 0.5
        %v2385 = vadd.f32 %v2384, 0.5
        %v2387 = vrot.slane %v2381, 3
        %v2389 = vtanh.pop %v2387
        %v2391 = vrot.slane %v2385, 1
        %v2393 = vmul.f32 %v2391, %v2218
        %v2394 = vmul.f32 %v2385, %v2389
        %v2395 = vadd.f32 %v2393, %v2394
        %v2396 = vtanh.pop %v2395
        %v2397 = vrot.slane %v2385, 2
        %v2399 = vmul.f32 %v2397, %v2396
        %2400 = vst [vmem:[#allocation3 + $0x7] sm:$0x1] %v2399
        %v2401 = vld [vmem:[#allocation3] sm:$0xff]
        %v2402 = vld [vmem:[#allocation6 + $0x20] sm:$0xff]
        %v2403 = vld [vmem:[#allocation6 + $0x48] sm:$0xff]
        %v2404 = vld [vmem:[#allocation6 + $0x70] sm:$0xff]
        %v2405 = vld [vmem:[#allocation6 + $0x98] sm:$0xff]
        %v2406 = vld [vmem:[#allocation6 + $0xc0] sm:$0xff]
        %v2407 = vld [vmem:[#allocation6 + $0xe8] sm:$0xff]
        %v2408 = vld [vmem:[#allocation6 + $0x110] sm:$0xff]
        %v2409 = vld [vmem:[#allocation6 + $0x138] sm:$0xff]
        %v2410 = vld [vmem:[#allocation6 + $0x160] sm:$0xff]
        %v2411 = vld [vmem:[#allocation6 + $0x188] sm:$0xff]
        %v2412 = vld [vmem:[#allocation6 + $0x1b0] sm:$0xff]
        %v2413 = vld [vmem:[#allocation6 + $0x1d8] sm:$0xff]
        %v2414 = vld [vmem:[#allocation6 + $0x200] sm:$0xff]
        %v2415 = vld [vmem:[#allocation6 + $0x228] sm:$0xff]
        %v2416 = vld [vmem:[#allocation6 + $0x250] sm:$0xff]
        %v2417 = vld [vmem:[#allocation6 + $0x278] sm:$0xff]
        %v2418 = vld [vmem:[#allocation8 + $0x4] sm:$0x1]
        %v2420 = vperm.slane %v2418, 0
        %2422 = vmatpush.msra.mxu0 %v2417
        %2423 = vmatpush.msra.mxu0 %v2416
        %2424 = vmatpush.msra.mxu0 %v2415
        %2425 = vmatpush.msra.mxu0 %v2414
        %2426 = vmatpush.msra.mxu0 %v2413
        %2427 = vmatpush.msra.mxu0 %v2412
        %2428 = vmatpush.msra.mxu0 %v2411
        %2429 = vmatpush.msra.mxu0 %v2410
        %2430 = vmatpush.msra.mxu0 %v2409
        %2431 = vmatpush.msra.mxu0 %v2408
        %2432 = vmatpush.msra.mxu0 %v2407
        %2433 = vmatpush.msra.mxu0 %v2406
        %2434 = vmatpush.msra.mxu0 %v2405
        %2435 = vmatpush.msra.mxu0 %v2404
        %2436 = vmatpush.msra.mxu0 %v2403
        %2437 = vmatpush.msra.mxu0 %v2402
        %2438 = vmatmul.f32.gmra.mxu0 %v2401
        %v2439 = vpop.f32.mrf.mxu0
        %v2440 = vadd.f32 %v2420, %v2439
        %2441 = vdwg.mxu0
        %2442 = vst [vmem:[%s243] sm:$0xff] %v2440
        %p2443 = scmp.lt.s32.totalorder %s17, 3
        %s2444 = scalar_select %p2443, %s17, 3
        %s2445 = smul.addr %s2444, 8
        %s2446 = scalar_lea.vmem %s4, %s2445
        // Predicated region
        $region49: #{discriminator_forward.1} parent=35 // pred_check
          %p2447 = pneg %p124
        $region50: #{discriminator_forward.1} parent=35 // pred_check_branch
          %2449 = sbr.rel (%p2447) target = $region52
        $region51: #{discriminator_forward.1} parent=35 // pred_region
          _
        $region52: #{discriminator_forward.1} parent=35 // pred_fallthru
          _
      $region36: #{discriminator_forward.1} parent=5 // pred_fallthru
        _
      %p2450 = scmp.le.s32.totalorder 2, %s12
      // Predicated region
      $region53: #{discriminator_forward.1} parent=5 // pred_check
        %p2451 = pneg %p2450
      $region54: #{discriminator_forward.1} parent=5 // pred_check_branch
        %2453 = sbr.rel (%p2451) target = $region56
      $region55: #{discriminator_forward.1} parent=5 // pred_region
        %s2454 = ssub.s32 %s12, 2
        // Predicated region
        $region57: #{discriminator_forward.1} parent=55 // pred_check
          %p2455 = pneg %p130
        $region58: #{discriminator_forward.1} parent=55 // pred_check_branch
          %2457 = sbr.rel (%p2455) target = $region60
        $region59: #{discriminator_forward.1} parent=55 // pred_region
          %p2458 = scmp.lt.s32.totalorder %s18, 3
          %s2459 = scalar_select %p2458, %s18, 3
          %s2460 = smul.addr %s2459, 8
          %s2461 = scalar_lea.vmem %s4, %s2460
        $region60: #{discriminator_forward.1} parent=55 // pred_fallthru
          _
      $region56: #{discriminator_forward.1} parent=5 // pred_fallthru
        _
    $region6: #{discriminator_forward.1} parent=1 // loop_footer
      %s16 = sadd.s32 1, %s12
    $region7: #{discriminator_forward.1} parent=1 // loop_footer_branch
      %11 = sbr.rel target = $region3
    $region8: #{discriminator_forward.1} parent=1 // loop_exit
      _
    %2462 = vsyncpa [#allocation5], 1
    %s2463 = scalar_lea.sflag [#allocation5], 1
    %2464 = vsyncpa %s2463, 1
    %2465 = vsyncpa [#allocation7], 1

</llo_original>
